<compile_context>
chip_gen: v5e
topology: v5e:2x2
jax: 0.10.0
libtpu: 0.0.40
codegen_flags: <defaults>
</compile_context>

<pallas_src>
import functools

import jax
import jax.numpy as jnp
from jax import lax
from jax.experimental import pallas as pl
from jax.experimental.pallas import tpu as pltpu


def _pick_block(n: int, target: int) -> int:
    """Largest divisor of n that is <= target and a multiple of 8 (else n)."""
    if n <= target:
        return n
    for b in range(target, 0, -1):
        if n % b == 0 and b % 8 == 0:
            return b
    return n


def _mha_flash_kernel(xq_ref, xkv_ref, wq_ref, wkv_ref, wp_ref, bp_ref, o_ref,
                      q_sc, acc_sc, m_sc, l_sc,
                      *, heads: int, head_size: int, matmul_dtype):
    """One grid step == (batch b, query block i, kv block j).

    xq_ref  : (1, tq, C)  VMEM   query-side rows of x
    xkv_ref : (1, tk, C)  VMEM   key/value-side rows of x
    wq_ref  : (C, C)      VMEM   packed per-head Q weights, scale pre-folded
    wkv_ref : (C, 2C)     VMEM   packed per-head [K | V] weights
    wp_ref  : (C, C)      VMEM   output projection weight, (in, out) layout
    bp_ref  : (1, C)      VMEM   output projection bias (f32)
    o_ref   : (1, tq, C)  VMEM   output block (resident across the kv axis)

    q_sc    : (tq, C)        VMEM scratch, projected+scaled q slab (matmul dtype)
    acc_sc  : (tq, C)        VMEM scratch, f32 un-normalized context slab
    m_sc    : (heads, tq, 1) VMEM scratch, f32 online-softmax running max
    l_sc    : (heads, tq, 1) VMEM scratch, f32 online-softmax running denom
    """
    j = pl.program_id(2)
    n_kv = pl.num_programs(2)
    C = heads * head_size

    @pl.when(j == 0)
    def _init():
        # One fused, lane-dense Q projection for the whole q block (all heads).
        xq = xq_ref[0].astype(matmul_dtype)                              # (tq, C)
        q_sc[...] = jnp.dot(xq, wq_ref[...],
                            preferred_element_type=jnp.float32).astype(q_sc.dtype)
        m_sc[...] = jnp.full_like(m_sc, -jnp.inf)
        l_sc[...] = jnp.zeros_like(l_sc)
        acc_sc[...] = jnp.zeros_like(acc_sc)

    # Fused K|V projection for this kv block (all heads), one MXU matmul.
    xkv = xkv_ref[0].astype(matmul_dtype)                                # (tk, C)
    kv = jnp.dot(xkv, wkv_ref[...], preferred_element_type=jnp.float32)  # (tk, 2C)
    k_all = kv[:, 0:C].astype(matmul_dtype)
    v_all = kv[:, C:2 * C].astype(matmul_dtype)
    q_all = q_sc[...]                                                    # (tq, C)

    # TODO(synk): switch to lax.fori_loop (+128-lane head pairing) for heads >= 8;
    # the static unroll is fine for small head counts.
    for h in range(heads):
        lo = h * head_size
        q = q_all[:, lo:lo + head_size]                                  # (tq, hs)
        k = k_all[:, lo:lo + head_size]                                  # (tk, hs)
        v = v_all[:, lo:lo + head_size]                                  # (tk, hs)

        # scores[n, m] = sum_d q[n, d] * k[m, d]  (contract last axes, no k.T)
        s = lax.dot_general(q, k, (((1,), (1,)), ((), ())),
                            preferred_element_type=jnp.float32)          # (tq, tk)

        # Online softmax update; all statistics stay in f32.
        m_prev = m_sc[h]                                                 # (tq, 1)
        m_new = jnp.maximum(m_prev, jnp.max(s, axis=-1, keepdims=True))
        alpha = jnp.exp(m_prev - m_new)                                  # (tq, 1)
        p = jnp.exp(s - m_new)                                           # (tq, tk)
        l_sc[h] = alpha * l_sc[h] + jnp.sum(p, axis=-1, keepdims=True)
        m_sc[h] = m_new

        pv = jnp.dot(p.astype(matmul_dtype), v,
                     preferred_element_type=jnp.float32)                 # (tq, hs)
        acc_sc[:, lo:lo + head_size] = alpha * acc_sc[:, lo:lo + head_size] + pv

    @pl.when(j == n_kv - 1)
    def _finalize():
        # Normalize each head's slice of the context slab (softmax denominator
        # deferred past the PV matmuls), then ONE fused (tq,C)@(C,C) output
        # projection instead of H narrow K=head_size matmuls.
        for h in range(heads):
            lo = h * head_size
            denom = l_sc[h]                                              # (tq, 1)
            inv = pl.reciprocal(denom, approx=True)                      # EUP slot
            inv = inv * (2.0 - denom * inv)                              # Newton step
            acc_sc[:, lo:lo + head_size] = acc_sc[:, lo:lo + head_size] * inv
        slab = acc_sc[...].astype(matmul_dtype)                          # (tq, C)
        proj = jnp.dot(slab, wp_ref[...],
                       preferred_element_type=jnp.float32)               # (tq, C)
        proj = proj + bp_ref[...]                                        # f32 bias
        o_ref[0] = proj.astype(o_ref.dtype)                              # lane-dense store


def multi_head_attention(x, wq, wk, wv, w_proj, b_proj, *, heads: int,
                         matmul_dtype=None, q_block: int = 128,
                         kv_block: int = 256):
    """x: [B, N, C]; wq/wk/wv: [H, C, hs] (input-major); w_proj: [C, C] (out, in);
    b_proj: [C].  Eval mode (dropout = identity)."""
    B, N, C = x.shape
    assert C % heads == 0, "dim must be a multiple of heads"
    head_size = C // heads
    scale = float(C) ** (-0.5)          # PyTorch Head uses dim**-0.5

    if matmul_dtype is None:
        # bf16 inputs take the fast MXU path; f32 inputs keep f32 matmul semantics.
        matmul_dtype = jnp.bfloat16 if x.dtype == jnp.bfloat16 else jnp.float32
    matmul_dtype = jnp.dtype(matmul_dtype)

    # Pack per-head weights into lane-dense matrices:
    #   w_q[:, h*hs:(h+1)*hs]  = wq[h] * scale   (scale folded into the weight)
    #   w_kv = [ K | V ], head h of K at cols h*hs:(h+1)*hs, likewise for V.
    def pack(w):                        # (H, C, hs) -> (C, C)
        return jnp.transpose(w, (1, 0, 2)).reshape(C, C)

    w_q = (pack(wq).astype(jnp.float32) * scale).astype(matmul_dtype)
    w_kv = jnp.concatenate([pack(wk), pack(wv)], axis=1).astype(matmul_dtype)
    w_p = jnp.transpose(w_proj).astype(matmul_dtype)                    # (in, out)
    b_p = b_proj.reshape(1, C).astype(jnp.float32)

    tq = _pick_block(N, q_block)
    tk = _pick_block(N, kv_block)
    n_q, n_kv = N // tq, N // tk

    kernel = functools.partial(_mha_flash_kernel, heads=heads,
                               head_size=head_size, matmul_dtype=matmul_dtype)

    # Explicit VMEM budget: blocks (double-buffered), single-buffered weights,
    # scratch slabs, plus slack for live f32 intermediates.  Defaults are only
    # 16 MiB (v5e) / 32 MiB (v6e, v7x) scoped VMEM — far below physical.
    xsz = jnp.dtype(x.dtype).itemsize
    msz = matmul_dtype.itemsize
    vmem_bytes = (
        2 * tq * C * xsz + 2 * tk * C * xsz + 2 * tq * C * xsz          # x / out blocks
        + (4 * C * C) * msz + 4 * C                                     # weights + bias
        + tq * C * msz + tq * C * 4 + 2 * heads * tq * 128 * 4          # scratch
        + (tk * 2 * C + tq * tk + tq * C) * 4                           # f32 temps
    )
    vmem_limit = int(min(max(int(1.5 * vmem_bytes) + (8 << 20), 32 << 20), 56 << 20))

    cost = pl.CostEstimate(
        flops=2 * B * N * (4 * C * C + 2 * N * C),
        transcendentals=B * heads * N * (N + 1),
        bytes_accessed=2 * B * N * C * xsz + (4 * C * C + C) * msz,
    )

    out_shape = jax.ShapeDtypeStruct((B, N, C), x.dtype)
    compiler_params = pltpu.CompilerParams(
        dimension_semantics=("parallel", "parallel", "arbitrary"),
        vmem_limit_bytes=vmem_limit)

    def build(single_buffer_weights: bool):
        wkw = ({"pipeline_mode": pl.Buffered(1)} if single_buffer_weights else {})
        in_specs = [
            pl.BlockSpec((1, tq, C), lambda b, i, j: (b, i, 0)),          # x (q rows)
            pl.BlockSpec((1, tk, C), lambda b, i, j: (b, j, 0)),          # x (kv rows)
            pl.BlockSpec((C, C), lambda b, i, j: (0, 0), **wkw),          # packed Q
            pl.BlockSpec((C, 2 * C), lambda b, i, j: (0, 0), **wkw),      # packed K|V
            pl.BlockSpec((C, C), lambda b, i, j: (0, 0), **wkw),          # proj weight
            pl.BlockSpec((1, C), lambda b, i, j: (0, 0), **wkw),          # proj bias
        ]
        return pl.pallas_call(
            kernel,
            out_shape=out_shape,
            grid_spec=pltpu.PrefetchScalarGridSpec(
                num_scalar_prefetch=0,
                grid=(B, n_q, n_kv),
                in_specs=in_specs,
                out_specs=pl.BlockSpec((1, tq, C), lambda b, i, j: (b, i, 0)),
                scratch_shapes=[
                    pltpu.VMEM((tq, C), matmul_dtype),        # q slab
                    pltpu.VMEM((tq, C), jnp.float32),         # context accumulator
                    pltpu.VMEM((heads, tq, 1), jnp.float32),  # running max
                    pltpu.VMEM((heads, tq, 1), jnp.float32),  # running denom
                ]),
            compiler_params=compiler_params,
            cost_estimate=cost,
        )

    args = (x, x, w_q, w_kv, w_p, b_p)
    try:
        return build(True)(*args)
    except Exception:
        # Fallback if this jax build rejects pipeline_mode / Buffered(1) on a
        # pallas_call BlockSpec: accept double-buffered weights instead.
        return build(False)(*args)


def _reference(x, wq, wk, wv, w_proj, b_proj, *, heads: int):
    """Pure-JAX reference replicating the PyTorch module (eval mode)."""
    B, N, C = x.shape
    scale = float(C) ** (-0.5)
    ctxs = []
    for h in range(heads):
        q = x @ wq[h]
        k = x @ wk[h]
        v = x @ wv[h]
        scores = jnp.einsum("bnc,bmc->bnm", q, k) * scale
        w = jax.nn.softmax(scores, axis=-1)
        ctxs.append(jnp.einsum("bnm,bmc->bnc", w, v))
    concat = jnp.concatenate(ctxs, axis=-1)
    return concat @ w_proj.T + b_proj


if __name__ == "__main__":
    key = jax.random.PRNGKey(0)

    # --- small demo shapes, f32 path ----------------------------------------
    B, N, dim, heads = 2, 8, 32, 4
    head_size = dim // heads
    kx, kq, kk, kv, kp, kb = jax.random.split(key, 6)
    x = jax.random.normal(kx, (B, N, dim), dtype=jnp.float32)
    init = 1.0 / jnp.sqrt(jnp.float32(dim))
    wq = jax.random.uniform(kq, (heads, dim, head_size), jnp.float32, -init, init)
    wk = jax.random.uniform(kk, (heads, dim, head_size), jnp.float32, -init, init)
    wv = jax.random.uniform(kv, (heads, dim, head_size), jnp.float32, -init, init)
    w_proj = jax.random.uniform(kp, (dim, dim), jnp.float32, -init, init)
    b_proj = jax.random.uniform(kb, (dim,), jnp.float32, -init, init)

    ref = _reference(x, wq, wk, wv, w_proj, b_proj, heads=heads)

    out = multi_head_attention(x, wq, wk, wv, w_proj, b_proj, heads=heads)
    out = jax.block_until_ready(out)
    assert out.shape == (B, N, dim)
    assert jnp.allclose(out, ref, atol=1e-3, rtol=1e-3), "f32 mismatch vs reference"

    # --- bf16 MXU path (recommended production config), looser tolerance -----
    out_bf16 = multi_head_attention(x.astype(jnp.bfloat16), wq, wk, wv,
                                    w_proj, b_proj, heads=heads)
    out_bf16 = jax.block_until_ready(out_bf16)
    assert out_bf16.dtype == jnp.bfloat16
    assert jnp.allclose(out_bf16.astype(jnp.float32), ref, atol=5e-2, rtol=5e-2), \
        "bf16 mismatch vs reference"

    # --- multi-block flash path (online softmax across 4 q x 4 kv blocks) ----
    B2, N2, dim2, heads2 = 2, 256, 128, 4
    hs2 = dim2 // heads2
    k2 = jax.random.split(jax.random.PRNGKey(1), 6)
    x2 = jax.random.normal(k2[0], (B2, N2, dim2), dtype=jnp.float32)
    init2 = 1.0 / jnp.sqrt(jnp.float32(dim2))
    wq2 = jax.random.uniform(k2[1], (heads2, dim2, hs2), jnp.float32, -init2, init2)
    wk2 = jax.random.uniform(k2[2], (heads2, dim2, hs2), jnp.float32, -init2, init2)
    wv2 = jax.random.uniform(k2[3], (heads2, dim2, hs2), jnp.float32, -init2, init2)
    w_proj2 = jax.random.uniform(k2[4], (dim2, dim2), jnp.float32, -init2, init2)
    b_proj2 = jax.random.uniform(k2[5], (dim2,), jnp.float32, -init2, init2)

    out2 = multi_head_attention(x2, wq2, wk2, wv2, w_proj2, b_proj2,
                                heads=heads2, q_block=64, kv_block=64)
    out2 = jax.block_until_ready(out2)
    ref2 = _reference(x2, wq2, wk2, wv2, w_proj2, b_proj2, heads=heads2)
    assert out2.shape == (B2, N2, dim2)
    assert jnp.allclose(out2, ref2, atol=1e-3, rtol=1e-3), "flash mismatch vs reference"

    print("KERNEL_OK")
</pallas_src>

<mosaic_0001>
module attributes {stable_mosaic.version = 11 : i64} {
  func.func @_mha_flash_kernel(%arg0: i32, %arg1: i32, %arg2: i32, %arg3: memref<1x8x32xf32, #tpu.memory_space<vmem>>, %arg4: memref<1x8x32xf32, #tpu.memory_space<vmem>>, %arg5: memref<32x32xf32, #tpu.memory_space<vmem>>, %arg6: memref<32x64xf32, #tpu.memory_space<vmem>>, %arg7: memref<32x32xf32, #tpu.memory_space<vmem>>, %arg8: memref<1x32xf32, #tpu.memory_space<vmem>>, %arg9: memref<1x8x32xf32, #tpu.memory_space<vmem>>, %arg10: memref<8x32xf32, #tpu.memory_space<vmem>>, %arg11: memref<8x32xf32, #tpu.memory_space<vmem>>, %arg12: memref<4x8x1xf32, #tpu.memory_space<vmem>>, %arg13: memref<4x8x1xf32, #tpu.memory_space<vmem>>) attributes {dimension_semantics = [#tpu.dimension_semantics<parallel>, #tpu.dimension_semantics<parallel>, #tpu.dimension_semantics<arbitrary>], iteration_bounds = array<i64: 2, 1, 1>, scalar_prefetch = 0 : i64, scratch_operands = 4 : i64, tpu.core_type = #tpu.core_type<tc>, window_params = [{transform_indices = @transform_0, window_bounds = array<i64: 1, 8, 32>}, {transform_indices = @transform_1, window_bounds = array<i64: 1, 8, 32>}, {pipeline_mode = #tpu.pipeline_mode<synchronous>, transform_indices = @transform_2, window_bounds = array<i64: 32, 32>}, {pipeline_mode = #tpu.pipeline_mode<synchronous>, transform_indices = @transform_3, window_bounds = array<i64: 32, 64>}, {pipeline_mode = #tpu.pipeline_mode<synchronous>, transform_indices = @transform_4, window_bounds = array<i64: 32, 32>}, {pipeline_mode = #tpu.pipeline_mode<synchronous>, transform_indices = @transform_5, window_bounds = array<i64: 1, 32>}, {transform_indices = @transform_6, window_bounds = array<i64: 1, 8, 32>}]} {
    %c0_i32 = arith.constant 0 : i32
    %0 = arith.cmpi eq, %arg2, %c0_i32 : i32
    %1 = arith.extui %0 : i1 to i32
    %c0_i32_0 = arith.constant 0 : i32
    %2 = arith.cmpi ne, %1, %c0_i32_0 : i32
    scf.if %2 {
      %c0_83 = arith.constant 0 : index
      %c0_84 = arith.constant 0 : index
      %c0_85 = arith.constant 0 : index
      %141 = vector.load %arg3[%c0_83, %c0_84, %c0_85] : memref<1x8x32xf32, #tpu.memory_space<vmem>>, vector<1x8x32xf32>
      %142 = vector.shape_cast %141 : vector<1x8x32xf32> to vector<8x32xf32>
      %c0_86 = arith.constant 0 : index
      %c0_87 = arith.constant 0 : index
      %143 = vector.load %arg5[%c0_86, %c0_87] : memref<32x32xf32, #tpu.memory_space<vmem>>, vector<32x32xf32>
      %cst_88 = arith.constant dense<0.000000e+00> : vector<8x32xf32>
      %144 = tpu.matmul %142, %143, %cst_88 {dimension_numbers = #tpu.dot_dimension_numbers<[1], [0], [0], [1], [0, 0, 1, 1], [], []>} : vector<8x32xf32>, vector<32x32xf32>, vector<8x32xf32> -> vector<8x32xf32>
      %c0_89 = arith.constant 0 : index
      %c0_90 = arith.constant 0 : index
      %145 = vector.load %arg10[%c0_89, %c0_90] : memref<8x32xf32, #tpu.memory_space<vmem>>, vector<8x32xf32>
      tpu.vector_store %arg10[%c0_89, %c0_90], %144 {strides = array<i32>} : memref<8x32xf32, #tpu.memory_space<vmem>>, vector<8x32xf32>,
      %cst_91 = arith.constant 0xFF800000 : f32
      %146 = vector.broadcast %cst_91 : f32 to vector<4x8x1xf32>
      %c0_92 = arith.constant 0 : index
      %c0_93 = arith.constant 0 : index
      %c0_94 = arith.constant 0 : index
      %147 = vector.load %arg12[%c0_92, %c0_93, %c0_94] : memref<4x8x1xf32, #tpu.memory_space<vmem>>, vector<4x8x1xf32>
      tpu.vector_store %arg12[%c0_92, %c0_93, %c0_94], %146 {strides = array<i32>} : memref<4x8x1xf32, #tpu.memory_space<vmem>>, vector<4x8x1xf32>,
      %cst_95 = arith.constant 0.000000e+00 : f32
      %148 = vector.broadcast %cst_95 : f32 to vector<4x8x1xf32>
      %c0_96 = arith.constant 0 : index
      %c0_97 = arith.constant 0 : index
      %c0_98 = arith.constant 0 : index
      %149 = vector.load %arg13[%c0_96, %c0_97, %c0_98] : memref<4x8x1xf32, #tpu.memory_space<vmem>>, vector<4x8x1xf32>
      tpu.vector_store %arg13[%c0_96, %c0_97, %c0_98], %148 {strides = array<i32>} : memref<4x8x1xf32, #tpu.memory_space<vmem>>, vector<4x8x1xf32>,
      %cst_99 = arith.constant 0.000000e+00 : f32
      %150 = vector.broadcast %cst_99 : f32 to vector<8x32xf32>
      %c0_100 = arith.constant 0 : index
      %c0_101 = arith.constant 0 : index
      %151 = vector.load %arg11[%c0_100, %c0_101] : memref<8x32xf32, #tpu.memory_space<vmem>>, vector<8x32xf32>
      tpu.vector_store %arg11[%c0_100, %c0_101], %150 {strides = array<i32>} : memref<8x32xf32, #tpu.memory_space<vmem>>, vector<8x32xf32>,
    } else {
    }
    %c0 = arith.constant 0 : index
    %c0_1 = arith.constant 0 : index
    %c0_2 = arith.constant 0 : index
    %3 = vector.load %arg4[%c0, %c0_1, %c0_2] : memref<1x8x32xf32, #tpu.memory_space<vmem>>, vector<1x8x32xf32>
    %4 = vector.shape_cast %3 : vector<1x8x32xf32> to vector<8x32xf32>
    %c0_3 = arith.constant 0 : index
    %c0_4 = arith.constant 0 : index
    %5 = vector.load %arg6[%c0_3, %c0_4] : memref<32x64xf32, #tpu.memory_space<vmem>>, vector<32x64xf32>
    %cst = arith.constant dense<0.000000e+00> : vector<8x64xf32>
    %6 = tpu.matmul %4, %5, %cst {dimension_numbers = #tpu.dot_dimension_numbers<[1], [0], [0], [1], [0, 0, 1, 1], [], []>} : vector<8x32xf32>, vector<32x64xf32>, vector<8x64xf32> -> vector<8x64xf32>
    %7 = vector.extract_strided_slice %6 {offsets = [0, 0], sizes = [8, 32], strides = [1, 1]} : vector<8x64xf32> to vector<8x32xf32>
    %8 = vector.extract_strided_slice %6 {offsets = [0, 32], sizes = [8, 32], strides = [1, 1]} : vector<8x64xf32> to vector<8x32xf32>
    %c0_5 = arith.constant 0 : index
    %c0_6 = arith.constant 0 : index
    %9 = vector.load %arg10[%c0_5, %c0_6] : memref<8x32xf32, #tpu.memory_space<vmem>>, vector<8x32xf32>
    %10 = vector.extract_strided_slice %9 {offsets = [0, 0], sizes = [8, 8], strides = [1, 1]} : vector<8x32xf32> to vector<8x8xf32>
    %11 = vector.extract_strided_slice %7 {offsets = [0, 0], sizes = [8, 8], strides = [1, 1]} : vector<8x32xf32> to vector<8x8xf32>
    %12 = vector.extract_strided_slice %8 {offsets = [0, 0], sizes = [8, 8], strides = [1, 1]} : vector<8x32xf32> to vector<8x8xf32>
    %cst_7 = arith.constant dense<0.000000e+00> : vector<8x8xf32>
    %13 = tpu.matmul %10, %11, %cst_7 {dimension_numbers = #tpu.dot_dimension_numbers<[1], [1], [0], [0], [0, 0, 1, 0], [], []>} : vector<8x8xf32>, vector<8x8xf32>, vector<8x8xf32> -> vector<8x8xf32>
    %c0_8 = arith.constant 0 : index
    %c0_9 = arith.constant 0 : index
    %c0_10 = arith.constant 0 : index
    %14 = vector.load %arg12[%c0_8, %c0_9, %c0_10] : memref<4x8x1xf32, #tpu.memory_space<vmem>>, vector<1x8x1xf32>
    %15 = vector.shape_cast %14 : vector<1x8x1xf32> to vector<8x1xf32>
    %cst_11 = arith.constant dense<0xFF800000> : vector<8xf32>
    %16 = vector.multi_reduction <maximumf>, %13, %cst_11 [1] : vector<8x8xf32> to vector<8xf32>
    %17 = vector.shape_cast %16 : vector<8xf32> to vector<8x1xf32>
    %18 = arith.maximumf %15, %17 : vector<8x1xf32>
    %19 = arith.subf %15, %18 : vector<8x1xf32>
    %20 = math.exp %19 : vector<8x1xf32>
    %21 = vector.broadcast %18 : vector<8x1xf32> to vector<8x8xf32>
    %22 = arith.subf %13, %21 : vector<8x8xf32>
    %23 = math.exp %22 : vector<8x8xf32>
    %c0_12 = arith.constant 0 : index
    %c0_13 = arith.constant 0 : index
    %c0_14 = arith.constant 0 : index
    %24 = vector.load %arg13[%c0_12, %c0_13, %c0_14] : memref<4x8x1xf32, #tpu.memory_space<vmem>>, vector<1x8x1xf32>
    %25 = vector.shape_cast %24 : vector<1x8x1xf32> to vector<8x1xf32>
    %26 = arith.mulf %20, %25 : vector<8x1xf32>
    %cst_15 = arith.constant dense<0.000000e+00> : vector<8xf32>
    %27 = vector.multi_reduction <add>, %23, %cst_15 [1] : vector<8x8xf32> to vector<8xf32>
    %28 = vector.shape_cast %27 : vector<8xf32> to vector<8x1xf32>
    %29 = arith.addf %26, %28 : vector<8x1xf32>
    %c0_16 = arith.constant 0 : index
    %c0_17 = arith.constant 0 : index
    %c0_18 = arith.constant 0 : index
    %30 = vector.load %arg13[%c0_16, %c0_17, %c0_18] : memref<4x8x1xf32, #tpu.memory_space<vmem>>, vector<1x8x1xf32>
    %31 = vector.shape_cast %30 : vector<1x8x1xf32> to vector<8x1xf32>
    %32 = vector.shape_cast %29 : vector<8x1xf32> to vector<1x8x1xf32>
    tpu.vector_store %arg13[%c0_16, %c0_17, %c0_18], %32 {strides = array<i32>} : memref<4x8x1xf32, #tpu.memory_space<vmem>>, vector<1x8x1xf32>,
    %c0_19 = arith.constant 0 : index
    %c0_20 = arith.constant 0 : index
    %c0_21 = arith.constant 0 : index
    %33 = vector.load %arg12[%c0_19, %c0_20, %c0_21] : memref<4x8x1xf32, #tpu.memory_space<vmem>>, vector<1x8x1xf32>
    %34 = vector.shape_cast %33 : vector<1x8x1xf32> to vector<8x1xf32>
    %35 = vector.shape_cast %18 : vector<8x1xf32> to vector<1x8x1xf32>
    tpu.vector_store %arg12[%c0_19, %c0_20, %c0_21], %35 {strides = array<i32>} : memref<4x8x1xf32, #tpu.memory_space<vmem>>, vector<1x8x1xf32>,
    %cst_22 = arith.constant dense<0.000000e+00> : vector<8x8xf32>
    %36 = tpu.matmul %23, %12, %cst_22 {dimension_numbers = #tpu.dot_dimension_numbers<[1], [0], [0], [1], [0, 0, 1, 1], [], []>} : vector<8x8xf32>, vector<8x8xf32>, vector<8x8xf32> -> vector<8x8xf32>
    %c0_23 = arith.constant 0 : index
    %c0_24 = arith.constant 0 : index
    %37 = vector.load %arg11[%c0_23, %c0_24] : memref<8x32xf32, #tpu.memory_space<vmem>>, vector<8x8xf32>
    %38 = vector.broadcast %20 : vector<8x1xf32> to vector<8x8xf32>
    %39 = arith.mulf %38, %37 : vector<8x8xf32>
    %40 = arith.addf %39, %36 : vector<8x8xf32>
    %c0_25 = arith.constant 0 : index
    %c0_26 = arith.constant 0 : index
    %41 = vector.load %arg11[%c0_25, %c0_26] : memref<8x32xf32, #tpu.memory_space<vmem>>, vector<8x8xf32>
    tpu.vector_store %arg11[%c0_25, %c0_26], %40 {strides = array<i32>} : memref<8x32xf32, #tpu.memory_space<vmem>>, vector<8x8xf32>,
    %42 = vector.extract_strided_slice %9 {offsets = [0, 8], sizes = [8, 8], strides = [1, 1]} : vector<8x32xf32> to vector<8x8xf32>
    %43 = vector.extract_strided_slice %7 {offsets = [0, 8], sizes = [8, 8], strides = [1, 1]} : vector<8x32xf32> to vector<8x8xf32>
    %44 = vector.extract_strided_slice %8 {offsets = [0, 8], sizes = [8, 8], strides = [1, 1]} : vector<8x32xf32> to vector<8x8xf32>
    %cst_27 = arith.constant dense<0.000000e+00> : vector<8x8xf32>
    %45 = tpu.matmul %42, %43, %cst_27 {dimension_numbers = #tpu.dot_dimension_numbers<[1], [1], [0], [0], [0, 0, 1, 0], [], []>} : vector<8x8xf32>, vector<8x8xf32>, vector<8x8xf32> -> vector<8x8xf32>
    %c1 = arith.constant 1 : index
    %c0_28 = arith.constant 0 : index
    %c0_29 = arith.constant 0 : index
    %46 = vector.load %arg12[%c1, %c0_28, %c0_29] : memref<4x8x1xf32, #tpu.memory_space<vmem>>, vector<1x8x1xf32>
    %47 = vector.shape_cast %46 : vector<1x8x1xf32> to vector<8x1xf32>
    %cst_30 = arith.constant dense<0xFF800000> : vector<8xf32>
    %48 = vector.multi_reduction <maximumf>, %45, %cst_30 [1] : vector<8x8xf32> to vector<8xf32>
    %49 = vector.shape_cast %48 : vector<8xf32> to vector<8x1xf32>
    %50 = arith.maximumf %47, %49 : vector<8x1xf32>
    %51 = arith.subf %47, %50 : vector<8x1xf32>
    %52 = math.exp %51 : vector<8x1xf32>
    %53 = vector.broadcast %50 : vector<8x1xf32> to vector<8x8xf32>
    %54 = arith.subf %45, %53 : vector<8x8xf32>
    %55 = math.exp %54 : vector<8x8xf32>
    %c1_31 = arith.constant 1 : index
    %c0_32 = arith.constant 0 : index
    %c0_33 = arith.constant 0 : index
    %56 = vector.load %arg13[%c1_31, %c0_32, %c0_33] : memref<4x8x1xf32, #tpu.memory_space<vmem>>, vector<1x8x1xf32>
    %57 = vector.shape_cast %56 : vector<1x8x1xf32> to vector<8x1xf32>
    %58 = arith.mulf %52, %57 : vector<8x1xf32>
    %cst_34 = arith.constant dense<0.000000e+00> : vector<8xf32>
    %59 = vector.multi_reduction <add>, %55, %cst_34 [1] : vector<8x8xf32> to vector<8xf32>
    %60 = vector.shape_cast %59 : vector<8xf32> to vector<8x1xf32>
    %61 = arith.addf %58, %60 : vector<8x1xf32>
    %c1_35 = arith.constant 1 : index
    %c0_36 = arith.constant 0 : index
    %c0_37 = arith.constant 0 : index
    %62 = vector.load %arg13[%c1_35, %c0_36, %c0_37] : memref<4x8x1xf32, #tpu.memory_space<vmem>>, vector<1x8x1xf32>
    %63 = vector.shape_cast %62 : vector<1x8x1xf32> to vector<8x1xf32>
    %64 = vector.shape_cast %61 : vector<8x1xf32> to vector<1x8x1xf32>
    tpu.vector_store %arg13[%c1_35, %c0_36, %c0_37], %64 {strides = array<i32>} : memref<4x8x1xf32, #tpu.memory_space<vmem>>, vector<1x8x1xf32>,
    %c1_38 = arith.constant 1 : index
    %c0_39 = arith.constant 0 : index
    %c0_40 = arith.constant 0 : index
    %65 = vector.load %arg12[%c1_38, %c0_39, %c0_40] : memref<4x8x1xf32, #tpu.memory_space<vmem>>, vector<1x8x1xf32>
    %66 = vector.shape_cast %65 : vector<1x8x1xf32> to vector<8x1xf32>
    %67 = vector.shape_cast %50 : vector<8x1xf32> to vector<1x8x1xf32>
    tpu.vector_store %arg12[%c1_38, %c0_39, %c0_40], %67 {strides = array<i32>} : memref<4x8x1xf32, #tpu.memory_space<vmem>>, vector<1x8x1xf32>,
    %cst_41 = arith.constant dense<0.000000e+00> : vector<8x8xf32>
    %68 = tpu.matmul %55, %44, %cst_41 {dimension_numbers = #tpu.dot_dimension_numbers<[1], [0], [0], [1], [0, 0, 1, 1], [], []>} : vector<8x8xf32>, vector<8x8xf32>, vector<8x8xf32> -> vector<8x8xf32>
    %c0_42 = arith.constant 0 : index
    %c8 = arith.constant 8 : index
    %69 = vector.load %arg11[%c0_42, %c8] : memref<8x32xf32, #tpu.memory_space<vmem>>, vector<8x8xf32>
    %70 = vector.broadcast %52 : vector<8x1xf32> to vector<8x8xf32>
    %71 = arith.mulf %70, %69 : vector<8x8xf32>
    %72 = arith.addf %71, %68 : vector<8x8xf32>
    %c0_43 = arith.constant 0 : index
    %c8_44 = arith.constant 8 : index
    %73 = vector.load %arg11[%c0_43, %c8_44] : memref<8x32xf32, #tpu.memory_space<vmem>>, vector<8x8xf32>
    tpu.vector_store %arg11[%c0_43, %c8_44], %72 {strides = array<i32>} : memref<8x32xf32, #tpu.memory_space<vmem>>, vector<8x8xf32>,
    %74 = vector.extract_strided_slice %9 {offsets = [0, 16], sizes = [8, 8], strides = [1, 1]} : vector<8x32xf32> to vector<8x8xf32>
    %75 = vector.extract_strided_slice %7 {offsets = [0, 16], sizes = [8, 8], strides = [1, 1]} : vector<8x32xf32> to vector<8x8xf32>
    %76 = vector.extract_strided_slice %8 {offsets = [0, 16], sizes = [8, 8], strides = [1, 1]} : vector<8x32xf32> to vector<8x8xf32>
    %cst_45 = arith.constant dense<0.000000e+00> : vector<8x8xf32>
    %77 = tpu.matmul %74, %75, %cst_45 {dimension_numbers = #tpu.dot_dimension_numbers<[1], [1], [0], [0], [0, 0, 1, 0], [], []>} : vector<8x8xf32>, vector<8x8xf32>, vector<8x8xf32> -> vector<8x8xf32>
    %c2 = arith.constant 2 : index
    %c0_46 = arith.constant 0 : index
    %c0_47 = arith.constant 0 : index
    %78 = vector.load %arg12[%c2, %c0_46, %c0_47] : memref<4x8x1xf32, #tpu.memory_space<vmem>>, vector<1x8x1xf32>
    %79 = vector.shape_cast %78 : vector<1x8x1xf32> to vector<8x1xf32>
    %cst_48 = arith.constant dense<0xFF800000> : vector<8xf32>
    %80 = vector.multi_reduction <maximumf>, %77, %cst_48 [1] : vector<8x8xf32> to vector<8xf32>
    %81 = vector.shape_cast %80 : vector<8xf32> to vector<8x1xf32>
    %82 = arith.maximumf %79, %81 : vector<8x1xf32>
    %83 = arith.subf %79, %82 : vector<8x1xf32>
    %84 = math.exp %83 : vector<8x1xf32>
    %85 = vector.broadcast %82 : vector<8x1xf32> to vector<8x8xf32>
    %86 = arith.subf %77, %85 : vector<8x8xf32>
    %87 = math.exp %86 : vector<8x8xf32>
    %c2_49 = arith.constant 2 : index
    %c0_50 = arith.constant 0 : index
    %c0_51 = arith.constant 0 : index
    %88 = vector.load %arg13[%c2_49, %c0_50, %c0_51] : memref<4x8x1xf32, #tpu.memory_space<vmem>>, vector<1x8x1xf32>
    %89 = vector.shape_cast %88 : vector<1x8x1xf32> to vector<8x1xf32>
    %90 = arith.mulf %84, %89 : vector<8x1xf32>
    %cst_52 = arith.constant dense<0.000000e+00> : vector<8xf32>
    %91 = vector.multi_reduction <add>, %87, %cst_52 [1] : vector<8x8xf32> to vector<8xf32>
    %92 = vector.shape_cast %91 : vector<8xf32> to vector<8x1xf32>
    %93 = arith.addf %90, %92 : vector<8x1xf32>
    %c2_53 = arith.constant 2 : index
    %c0_54 = arith.constant 0 : index
    %c0_55 = arith.constant 0 : index
    %94 = vector.load %arg13[%c2_53, %c0_54, %c0_55] : memref<4x8x1xf32, #tpu.memory_space<vmem>>, vector<1x8x1xf32>
    %95 = vector.shape_cast %94 : vector<1x8x1xf32> to vector<8x1xf32>
    %96 = vector.shape_cast %93 : vector<8x1xf32> to vector<1x8x1xf32>
    tpu.vector_store %arg13[%c2_53, %c0_54, %c0_55], %96 {strides = array<i32>} : memref<4x8x1xf32, #tpu.memory_space<vmem>>, vector<1x8x1xf32>,
    %c2_56 = arith.constant 2 : index
    %c0_57 = arith.constant 0 : index
    %c0_58 = arith.constant 0 : index
    %97 = vector.load %arg12[%c2_56, %c0_57, %c0_58] : memref<4x8x1xf32, #tpu.memory_space<vmem>>, vector<1x8x1xf32>
    %98 = vector.shape_cast %97 : vector<1x8x1xf32> to vector<8x1xf32>
    %99 = vector.shape_cast %82 : vector<8x1xf32> to vector<1x8x1xf32>
    tpu.vector_store %arg12[%c2_56, %c0_57, %c0_58], %99 {strides = array<i32>} : memref<4x8x1xf32, #tpu.memory_space<vmem>>, vector<1x8x1xf32>,
    %cst_59 = arith.constant dense<0.000000e+00> : vector<8x8xf32>
    %100 = tpu.matmul %87, %76, %cst_59 {dimension_numbers = #tpu.dot_dimension_numbers<[1], [0], [0], [1], [0, 0, 1, 1], [], []>} : vector<8x8xf32>, vector<8x8xf32>, vector<8x8xf32> -> vector<8x8xf32>
    %c0_60 = arith.constant 0 : index
    %c16 = arith.constant 16 : index
    %101 = vector.load %arg11[%c0_60, %c16] : memref<8x32xf32, #tpu.memory_space<vmem>>, vector<8x8xf32>
    %102 = vector.broadcast %84 : vector<8x1xf32> to vector<8x8xf32>
    %103 = arith.mulf %102, %101 : vector<8x8xf32>
    %104 = arith.addf %103, %100 : vector<8x8xf32>
    %c0_61 = arith.constant 0 : index
    %c16_62 = arith.constant 16 : index
    %105 = vector.load %arg11[%c0_61, %c16_62] : memref<8x32xf32, #tpu.memory_space<vmem>>, vector<8x8xf32>
    tpu.vector_store %arg11[%c0_61, %c16_62], %104 {strides = array<i32>} : memref<8x32xf32, #tpu.memory_space<vmem>>, vector<8x8xf32>,
    %106 = vector.extract_strided_slice %9 {offsets = [0, 24], sizes = [8, 8], strides = [1, 1]} : vector<8x32xf32> to vector<8x8xf32>
    %107 = vector.extract_strided_slice %7 {offsets = [0, 24], sizes = [8, 8], strides = [1, 1]} : vector<8x32xf32> to vector<8x8xf32>
    %108 = vector.extract_strided_slice %8 {offsets = [0, 24], sizes = [8, 8], strides = [1, 1]} : vector<8x32xf32> to vector<8x8xf32>
    %cst_63 = arith.constant dense<0.000000e+00> : vector<8x8xf32>
    %109 = tpu.matmul %106, %107, %cst_63 {dimension_numbers = #tpu.dot_dimension_numbers<[1], [1], [0], [0], [0, 0, 1, 0], [], []>} : vector<8x8xf32>, vector<8x8xf32>, vector<8x8xf32> -> vector<8x8xf32>
    %c3 = arith.constant 3 : index
    %c0_64 = arith.constant 0 : index
    %c0_65 = arith.constant 0 : index
    %110 = vector.load %arg12[%c3, %c0_64, %c0_65] : memref<4x8x1xf32, #tpu.memory_space<vmem>>, vector<1x8x1xf32>
    %111 = vector.shape_cast %110 : vector<1x8x1xf32> to vector<8x1xf32>
    %cst_66 = arith.constant dense<0xFF800000> : vector<8xf32>
    %112 = vector.multi_reduction <maximumf>, %109, %cst_66 [1] : vector<8x8xf32> to vector<8xf32>
    %113 = vector.shape_cast %112 : vector<8xf32> to vector<8x1xf32>
    %114 = arith.maximumf %111, %113 : vector<8x1xf32>
    %115 = arith.subf %111, %114 : vector<8x1xf32>
    %116 = math.exp %115 : vector<8x1xf32>
    %117 = vector.broadcast %114 : vector<8x1xf32> to vector<8x8xf32>
    %118 = arith.subf %109, %117 : vector<8x8xf32>
    %119 = math.exp %118 : vector<8x8xf32>
    %c3_67 = arith.constant 3 : index
    %c0_68 = arith.constant 0 : index
    %c0_69 = arith.constant 0 : index
    %120 = vector.load %arg13[%c3_67, %c0_68, %c0_69] : memref<4x8x1xf32, #tpu.memory_space<vmem>>, vector<1x8x1xf32>
    %121 = vector.shape_cast %120 : vector<1x8x1xf32> to vector<8x1xf32>
    %122 = arith.mulf %116, %121 : vector<8x1xf32>
    %cst_70 = arith.constant dense<0.000000e+00> : vector<8xf32>
    %123 = vector.multi_reduction <add>, %119, %cst_70 [1] : vector<8x8xf32> to vector<8xf32>
    %124 = vector.shape_cast %123 : vector<8xf32> to vector<8x1xf32>
    %125 = arith.addf %122, %124 : vector<8x1xf32>
    %c3_71 = arith.constant 3 : index
    %c0_72 = arith.constant 0 : index
    %c0_73 = arith.constant 0 : index
    %126 = vector.load %arg13[%c3_71, %c0_72, %c0_73] : memref<4x8x1xf32, #tpu.memory_space<vmem>>, vector<1x8x1xf32>
    %127 = vector.shape_cast %126 : vector<1x8x1xf32> to vector<8x1xf32>
    %128 = vector.shape_cast %125 : vector<8x1xf32> to vector<1x8x1xf32>
    tpu.vector_store %arg13[%c3_71, %c0_72, %c0_73], %128 {strides = array<i32>} : memref<4x8x1xf32, #tpu.memory_space<vmem>>, vector<1x8x1xf32>,
    %c3_74 = arith.constant 3 : index
    %c0_75 = arith.constant 0 : index
    %c0_76 = arith.constant 0 : index
    %129 = vector.load %arg12[%c3_74, %c0_75, %c0_76] : memref<4x8x1xf32, #tpu.memory_space<vmem>>, vector<1x8x1xf32>
    %130 = vector.shape_cast %129 : vector<1x8x1xf32> to vector<8x1xf32>
    %131 = vector.shape_cast %114 : vector<8x1xf32> to vector<1x8x1xf32>
    tpu.vector_store %arg12[%c3_74, %c0_75, %c0_76], %131 {strides = array<i32>} : memref<4x8x1xf32, #tpu.memory_space<vmem>>, vector<1x8x1xf32>,
    %cst_77 = arith.constant dense<0.000000e+00> : vector<8x8xf32>
    %132 = tpu.matmul %119, %108, %cst_77 {dimension_numbers = #tpu.dot_dimension_numbers<[1], [0], [0], [1], [0, 0, 1, 1], [], []>} : vector<8x8xf32>, vector<8x8xf32>, vector<8x8xf32> -> vector<8x8xf32>
    %c0_78 = arith.constant 0 : index
    %c24 = arith.constant 24 : index
    %133 = vector.load %arg11[%c0_78, %c24] : memref<8x32xf32, #tpu.memory_space<vmem>>, vector<8x8xf32>
    %134 = vector.broadcast %116 : vector<8x1xf32> to vector<8x8xf32>
    %135 = arith.mulf %134, %133 : vector<8x8xf32>
    %136 = arith.addf %135, %132 : vector<8x8xf32>
    %c0_79 = arith.constant 0 : index
    %c24_80 = arith.constant 24 : index
    %137 = vector.load %arg11[%c0_79, %c24_80] : memref<8x32xf32, #tpu.memory_space<vmem>>, vector<8x8xf32>
    tpu.vector_store %arg11[%c0_79, %c24_80], %136 {strides = array<i32>} : memref<8x32xf32, #tpu.memory_space<vmem>>, vector<8x8xf32>,
    %c0_i32_81 = arith.constant 0 : i32
    %138 = arith.cmpi eq, %arg2, %c0_i32_81 : i32
    %139 = arith.extui %138 : i1 to i32
    %c0_i32_82 = arith.constant 0 : i32
    %140 = arith.cmpi ne, %139, %c0_i32_82 : i32
    scf.if %140 {
      %c0_83 = arith.constant 0 : index
      %c0_84 = arith.constant 0 : index
      %c0_85 = arith.constant 0 : index
      %141 = vector.load %arg13[%c0_83, %c0_84, %c0_85] : memref<4x8x1xf32, #tpu.memory_space<vmem>>, vector<1x8x1xf32>
      %142 = vector.shape_cast %141 : vector<1x8x1xf32> to vector<8x1xf32>
      %143 = tpu.reciprocal %142 {approx = true} : vector<8x1xf32> -> vector<8x1xf32>
      %144 = arith.mulf %142, %143 : vector<8x1xf32>
      %cst_86 = arith.constant 2.000000e+00 : f32
      %145 = vector.broadcast %cst_86 : f32 to vector<8x1xf32>
      %146 = arith.subf %145, %144 : vector<8x1xf32>
      %147 = arith.mulf %143, %146 : vector<8x1xf32>
      %c0_87 = arith.constant 0 : index
      %c0_88 = arith.constant 0 : index
      %148 = vector.load %arg11[%c0_87, %c0_88] : memref<8x32xf32, #tpu.memory_space<vmem>>, vector<8x8xf32>
      %149 = vector.broadcast %147 : vector<8x1xf32> to vector<8x8xf32>
      %150 = arith.mulf %148, %149 : vector<8x8xf32>
      %c0_89 = arith.constant 0 : index
      %c0_90 = arith.constant 0 : index
      %151 = vector.load %arg11[%c0_89, %c0_90] : memref<8x32xf32, #tpu.memory_space<vmem>>, vector<8x8xf32>
      tpu.vector_store %arg11[%c0_89, %c0_90], %150 {strides = array<i32>} : memref<8x32xf32, #tpu.memory_space<vmem>>, vector<8x8xf32>,
      %c1_91 = arith.constant 1 : index
      %c0_92 = arith.constant 0 : index
      %c0_93 = arith.constant 0 : index
      %152 = vector.load %arg13[%c1_91, %c0_92, %c0_93] : memref<4x8x1xf32, #tpu.memory_space<vmem>>, vector<1x8x1xf32>
      %153 = vector.shape_cast %152 : vector<1x8x1xf32> to vector<8x1xf32>
      %154 = tpu.reciprocal %153 {approx = true} : vector<8x1xf32> -> vector<8x1xf32>
      %155 = arith.mulf %153, %154 : vector<8x1xf32>
      %cst_94 = arith.constant 2.000000e+00 : f32
      %156 = vector.broadcast %cst_94 : f32 to vector<8x1xf32>
      %157 = arith.subf %156, %155 : vector<8x1xf32>
      %158 = arith.mulf %154, %157 : vector<8x1xf32>
      %c0_95 = arith.constant 0 : index
      %c8_96 = arith.constant 8 : index
      %159 = vector.load %arg11[%c0_95, %c8_96] : memref<8x32xf32, #tpu.memory_space<vmem>>, vector<8x8xf32>
      %160 = vector.broadcast %158 : vector<8x1xf32> to vector<8x8xf32>
      %161 = arith.mulf %159, %160 : vector<8x8xf32>
      %c0_97 = arith.constant 0 : index
      %c8_98 = arith.constant 8 : index
      %162 = vector.load %arg11[%c0_97, %c8_98] : memref<8x32xf32, #tpu.memory_space<vmem>>, vector<8x8xf32>
      tpu.vector_store %arg11[%c0_97, %c8_98], %161 {strides = array<i32>} : memref<8x32xf32, #tpu.memory_space<vmem>>, vector<8x8xf32>,
      %c2_99 = arith.constant 2 : index
      %c0_100 = arith.constant 0 : index
      %c0_101 = arith.constant 0 : index
      %163 = vector.load %arg13[%c2_99, %c0_100, %c0_101] : memref<4x8x1xf32, #tpu.memory_space<vmem>>, vector<1x8x1xf32>
      %164 = vector.shape_cast %163 : vector<1x8x1xf32> to vector<8x1xf32>
      %165 = tpu.reciprocal %164 {approx = true} : vector<8x1xf32> -> vector<8x1xf32>
      %166 = arith.mulf %164, %165 : vector<8x1xf32>
      %cst_102 = arith.constant 2.000000e+00 : f32
      %167 = vector.broadcast %cst_102 : f32 to vector<8x1xf32>
      %168 = arith.subf %167, %166 : vector<8x1xf32>
      %169 = arith.mulf %165, %168 : vector<8x1xf32>
      %c0_103 = arith.constant 0 : index
      %c16_104 = arith.constant 16 : index
      %170 = vector.load %arg11[%c0_103, %c16_104] : memref<8x32xf32, #tpu.memory_space<vmem>>, vector<8x8xf32>
      %171 = vector.broadcast %169 : vector<8x1xf32> to vector<8x8xf32>
      %172 = arith.mulf %170, %171 : vector<8x8xf32>
      %c0_105 = arith.constant 0 : index
      %c16_106 = arith.constant 16 : index
      %173 = vector.load %arg11[%c0_105, %c16_106] : memref<8x32xf32, #tpu.memory_space<vmem>>, vector<8x8xf32>
      tpu.vector_store %arg11[%c0_105, %c16_106], %172 {strides = array<i32>} : memref<8x32xf32, #tpu.memory_space<vmem>>, vector<8x8xf32>,
      %c3_107 = arith.constant 3 : index
      %c0_108 = arith.constant 0 : index
      %c0_109 = arith.constant 0 : index
      %174 = vector.load %arg13[%c3_107, %c0_108, %c0_109] : memref<4x8x1xf32, #tpu.memory_space<vmem>>, vector<1x8x1xf32>
      %175 = vector.shape_cast %174 : vector<1x8x1xf32> to vector<8x1xf32>
      %176 = tpu.reciprocal %175 {approx = true} : vector<8x1xf32> -> vector<8x1xf32>
      %177 = arith.mulf %175, %176 : vector<8x1xf32>
      %cst_110 = arith.constant 2.000000e+00 : f32
      %178 = vector.broadcast %cst_110 : f32 to vector<8x1xf32>
      %179 = arith.subf %178, %177 : vector<8x1xf32>
      %180 = arith.mulf %176, %179 : vector<8x1xf32>
      %c0_111 = arith.constant 0 : index
      %c24_112 = arith.constant 24 : index
      %181 = vector.load %arg11[%c0_111, %c24_112] : memref<8x32xf32, #tpu.memory_space<vmem>>, vector<8x8xf32>
      %182 = vector.broadcast %180 : vector<8x1xf32> to vector<8x8xf32>
      %183 = arith.mulf %181, %182 : vector<8x8xf32>
      %c0_113 = arith.constant 0 : index
      %c24_114 = arith.constant 24 : index
      %184 = vector.load %arg11[%c0_113, %c24_114] : memref<8x32xf32, #tpu.memory_space<vmem>>, vector<8x8xf32>
      tpu.vector_store %arg11[%c0_113, %c24_114], %183 {strides = array<i32>} : memref<8x32xf32, #tpu.memory_space<vmem>>, vector<8x8xf32>,
      %c0_115 = arith.constant 0 : index
      %c0_116 = arith.constant 0 : index
      %185 = vector.load %arg11[%c0_115, %c0_116] : memref<8x32xf32, #tpu.memory_space<vmem>>, vector<8x32xf32>
      %c0_117 = arith.constant 0 : index
      %c0_118 = arith.constant 0 : index
      %186 = vector.load %arg7[%c0_117, %c0_118] : memref<32x32xf32, #tpu.memory_space<vmem>>, vector<32x32xf32>
      %cst_119 = arith.constant dense<0.000000e+00> : vector<8x32xf32>
      %187 = tpu.matmul %185, %186, %cst_119 {dimension_numbers = #tpu.dot_dimension_numbers<[1], [0], [0], [1], [0, 0, 1, 1], [], []>} : vector<8x32xf32>, vector<32x32xf32>, vector<8x32xf32> -> vector<8x32xf32>
      %c0_120 = arith.constant 0 : index
      %c0_121 = arith.constant 0 : index
      %188 = vector.load %arg8[%c0_120, %c0_121] : memref<1x32xf32, #tpu.memory_space<vmem>>, vector<1x32xf32>
      %189 = vector.broadcast %188 : vector<1x32xf32> to vector<8x32xf32>
      %190 = arith.addf %187, %189 : vector<8x32xf32>
      %c0_122 = arith.constant 0 : index
      %c0_123 = arith.constant 0 : index
      %c0_124 = arith.constant 0 : index
      %191 = vector.load %arg9[%c0_122, %c0_123, %c0_124] : memref<1x8x32xf32, #tpu.memory_space<vmem>>, vector<1x8x32xf32>
      %192 = vector.shape_cast %191 : vector<1x8x32xf32> to vector<8x32xf32>
      %193 = vector.shape_cast %190 : vector<8x32xf32> to vector<1x8x32xf32>
      tpu.vector_store %arg9[%c0_122, %c0_123, %c0_124], %193 {strides = array<i32>} : memref<1x8x32xf32, #tpu.memory_space<vmem>>, vector<1x8x32xf32>,
    } else {
    }
    return
  }
  func.func @transform_0(%arg0: i32, %arg1: i32, %arg2: i32) -> (i32, i32, i32) {
    %c0_i32 = arith.constant 0 : i32
    %c0_i32_0 = arith.constant 0 : i32
    return %arg0, %arg1, %c0_i32 : i32, i32, i32
  }
  func.func @transform_1(%arg0: i32, %arg1: i32, %arg2: i32) -> (i32, i32, i32) {
    %c0_i32 = arith.constant 0 : i32
    %c0_i32_0 = arith.constant 0 : i32
    return %arg0, %arg2, %c0_i32 : i32, i32, i32
  }
  func.func @transform_2(%arg0: i32, %arg1: i32, %arg2: i32) -> (i32, i32) {
    %c0_i32 = arith.constant 0 : i32
    %c0_i32_0 = arith.constant 0 : i32
    %c0_i32_1 = arith.constant 0 : i32
    return %c0_i32, %c0_i32_0 : i32, i32
  }
  func.func @transform_3(%arg0: i32, %arg1: i32, %arg2: i32) -> (i32, i32) {
    %c0_i32 = arith.constant 0 : i32
    %c0_i32_0 = arith.constant 0 : i32
    %c0_i32_1 = arith.constant 0 : i32
    return %c0_i32, %c0_i32_0 : i32, i32
  }
  func.func @transform_4(%arg0: i32, %arg1: i32, %arg2: i32) -> (i32, i32) {
    %c0_i32 = arith.constant 0 : i32
    %c0_i32_0 = arith.constant 0 : i32
    %c0_i32_1 = arith.constant 0 : i32
    return %c0_i32, %c0_i32_0 : i32, i32
  }
  func.func @transform_5(%arg0: i32, %arg1: i32, %arg2: i32) -> (i32, i32) {
    %c0_i32 = arith.constant 0 : i32
    %c0_i32_0 = arith.constant 0 : i32
    %c0_i32_1 = arith.constant 0 : i32
    return %c0_i32, %c0_i32_0 : i32, i32
  }
  func.func @transform_6(%arg0: i32, %arg1: i32, %arg2: i32) -> (i32, i32, i32) {
    %c0_i32 = arith.constant 0 : i32
    %c0_i32_0 = arith.constant 0 : i32
    return %arg0, %arg1, %c0_i32 : i32, i32, i32
  }
}

module attributes {stable_mosaic.version = 11 : i64} {
  func.func @_mha_flash_kernel(%arg0: i32, %arg1: i32, %arg2: i32, %arg3: memref<1x8x32xf32, #tpu.memory_space<vmem>>, %arg4: memref<1x8x32xf32, #tpu.memory_space<vmem>>, %arg5: memref<32x32xf32, #tpu.memory_space<vmem>>, %arg6: memref<32x64xf32, #tpu.memory_space<vmem>>, %arg7: memref<32x32xf32, #tpu.memory_space<vmem>>, %arg8: memref<1x32xf32, #tpu.memory_space<vmem>>, %arg9: memref<1x8x32xf32, #tpu.memory_space<vmem>>, %arg10: memref<8x32xf32, #tpu.memory_space<vmem>>, %arg11: memref<8x32xf32, #tpu.memory_space<vmem>>, %arg12: memref<4x8x1xf32, #tpu.memory_space<vmem>>, %arg13: memref<4x8x1xf32, #tpu.memory_space<vmem>>) attributes {dimension_semantics = [#tpu.dimension_semantics<parallel>, #tpu.dimension_semantics<parallel>, #tpu.dimension_semantics<arbitrary>], iteration_bounds = array<i64: 2, 1, 1>, scalar_prefetch = 0 : i64, scratch_operands = 4 : i64, tpu.core_type = #tpu.core_type<tc>, window_params = [{transform_indices = @transform_0, window_bounds = array<i64: 1, 8, 32>}, {transform_indices = @transform_1, window_bounds = array<i64: 1, 8, 32>}, {pipeline_mode = #tpu.pipeline_mode<synchronous>, transform_indices = @transform_2, window_bounds = array<i64: 32, 32>}, {pipeline_mode = #tpu.pipeline_mode<synchronous>, transform_indices = @transform_3, window_bounds = array<i64: 32, 64>}, {pipeline_mode = #tpu.pipeline_mode<synchronous>, transform_indices = @transform_4, window_bounds = array<i64: 32, 32>}, {pipeline_mode = #tpu.pipeline_mode<synchronous>, transform_indices = @transform_5, window_bounds = array<i64: 1, 32>}, {transform_indices = @transform_6, window_bounds = array<i64: 1, 8, 32>}]} {
    %c0_i32 = arith.constant 0 : i32
    %0 = arith.cmpi eq, %arg2, %c0_i32 : i32
    %1 = arith.extui %0 : i1 to i32
    %c0_i32_0 = arith.constant 0 : i32
    %2 = arith.cmpi ne, %1, %c0_i32_0 : i32
    scf.if %2 {
      %c0_83 = arith.constant 0 : index
      %c0_84 = arith.constant 0 : index
      %c0_85 = arith.constant 0 : index
      %141 = vector.load %arg3[%c0_83, %c0_84, %c0_85] : memref<1x8x32xf32, #tpu.memory_space<vmem>>, vector<1x8x32xf32>
      %142 = vector.shape_cast %141 : vector<1x8x32xf32> to vector<8x32xf32>
      %c0_86 = arith.constant 0 : index
      %c0_87 = arith.constant 0 : index
      %143 = vector.load %arg5[%c0_86, %c0_87] : memref<32x32xf32, #tpu.memory_space<vmem>>, vector<32x32xf32>
      %cst_88 = arith.constant dense<0.000000e+00> : vector<8x32xf32>
      %144 = tpu.matmul %142, %143, %cst_88 {dimension_numbers = #tpu.dot_dimension_numbers<[1], [0], [0], [1], [0, 0, 1, 1], [], []>} : vector<8x32xf32>, vector<32x32xf32>, vector<8x32xf32> -> vector<8x32xf32>
      %c0_89 = arith.constant 0 : index
      %c0_90 = arith.constant 0 : index
      %145 = vector.load %arg10[%c0_89, %c0_90] : memref<8x32xf32, #tpu.memory_space<vmem>>, vector<8x32xf32>
      tpu.vector_store %arg10[%c0_89, %c0_90], %144 {strides = array<i32>} : memref<8x32xf32, #tpu.memory_space<vmem>>, vector<8x32xf32>,
      %cst_91 = arith.constant 0xFF800000 : f32
      %146 = vector.broadcast %cst_91 : f32 to vector<4x8x1xf32>
      %c0_92 = arith.constant 0 : index
      %c0_93 = arith.constant 0 : index
      %c0_94 = arith.constant 0 : index
      %147 = vector.load %arg12[%c0_92, %c0_93, %c0_94] : memref<4x8x1xf32, #tpu.memory_space<vmem>>, vector<4x8x1xf32>
      tpu.vector_store %arg12[%c0_92, %c0_93, %c0_94], %146 {strides = array<i32>} : memref<4x8x1xf32, #tpu.memory_space<vmem>>, vector<4x8x1xf32>,
      %cst_95 = arith.constant 0.000000e+00 : f32
      %148 = vector.broadcast %cst_95 : f32 to vector<4x8x1xf32>
      %c0_96 = arith.constant 0 : index
      %c0_97 = arith.constant 0 : index
      %c0_98 = arith.constant 0 : index
      %149 = vector.load %arg13[%c0_96, %c0_97, %c0_98] : memref<4x8x1xf32, #tpu.memory_space<vmem>>, vector<4x8x1xf32>
      tpu.vector_store %arg13[%c0_96, %c0_97, %c0_98], %148 {strides = array<i32>} : memref<4x8x1xf32, #tpu.memory_space<vmem>>, vector<4x8x1xf32>,
      %cst_99 = arith.constant 0.000000e+00 : f32
      %150 = vector.broadcast %cst_99 : f32 to vector<8x32xf32>
      %c0_100 = arith.constant 0 : index
      %c0_101 = arith.constant 0 : index
      %151 = vector.load %arg11[%c0_100, %c0_101] : memref<8x32xf32, #tpu.memory_space<vmem>>, vector<8x32xf32>
      tpu.vector_store %arg11[%c0_100, %c0_101], %150 {strides = array<i32>} : memref<8x32xf32, #tpu.memory_space<vmem>>, vector<8x32xf32>,
    } else {
    }
    %c0 = arith.constant 0 : index
    %c0_1 = arith.constant 0 : index
    %c0_2 = arith.constant 0 : index
    %3 = vector.load %arg4[%c0, %c0_1, %c0_2] : memref<1x8x32xf32, #tpu.memory_space<vmem>>, vector<1x8x32xf32>
    %4 = vector.shape_cast %3 : vector<1x8x32xf32> to vector<8x32xf32>
    %c0_3 = arith.constant 0 : index
    %c0_4 = arith.constant 0 : index
    %5 = vector.load %arg6[%c0_3, %c0_4] : memref<32x64xf32, #tpu.memory_space<vmem>>, vector<32x64xf32>
    %cst = arith.constant dense<0.000000e+00> : vector<8x64xf32>
    %6 = tpu.matmul %4, %5, %cst {dimension_numbers = #tpu.dot_dimension_numbers<[1], [0], [0], [1], [0, 0, 1, 1], [], []>} : vector<8x32xf32>, vector<32x64xf32>, vector<8x64xf32> -> vector<8x64xf32>
    %7 = vector.extract_strided_slice %6 {offsets = [0, 0], sizes = [8, 32], strides = [1, 1]} : vector<8x64xf32> to vector<8x32xf32>
    %8 = vector.extract_strided_slice %6 {offsets = [0, 32], sizes = [8, 32], strides = [1, 1]} : vector<8x64xf32> to vector<8x32xf32>
    %c0_5 = arith.constant 0 : index
    %c0_6 = arith.constant 0 : index
    %9 = vector.load %arg10[%c0_5, %c0_6] : memref<8x32xf32, #tpu.memory_space<vmem>>, vector<8x32xf32>
    %10 = vector.extract_strided_slice %9 {offsets = [0, 0], sizes = [8, 8], strides = [1, 1]} : vector<8x32xf32> to vector<8x8xf32>
    %11 = vector.extract_strided_slice %7 {offsets = [0, 0], sizes = [8, 8], strides = [1, 1]} : vector<8x32xf32> to vector<8x8xf32>
    %12 = vector.extract_strided_slice %8 {offsets = [0, 0], sizes = [8, 8], strides = [1, 1]} : vector<8x32xf32> to vector<8x8xf32>
    %cst_7 = arith.constant dense<0.000000e+00> : vector<8x8xf32>
    %13 = tpu.matmul %10, %11, %cst_7 {dimension_numbers = #tpu.dot_dimension_numbers<[1], [1], [0], [0], [0, 0, 1, 0], [], []>} : vector<8x8xf32>, vector<8x8xf32>, vector<8x8xf32> -> vector<8x8xf32>
    %c0_8 = arith.constant 0 : index
    %c0_9 = arith.constant 0 : index
    %c0_10 = arith.constant 0 : index
    %14 = vector.load %arg12[%c0_8, %c0_9, %c0_10] : memref<4x8x1xf32, #tpu.memory_space<vmem>>, vector<1x8x1xf32>
    %15 = vector.shape_cast %14 : vector<1x8x1xf32> to vector<8x1xf32>
    %cst_11 = arith.constant dense<0xFF800000> : vector<8xf32>
    %16 = vector.multi_reduction <maximumf>, %13, %cst_11 [1] : vector<8x8xf32> to vector<8xf32>
    %17 = vector.shape_cast %16 : vector<8xf32> to vector<8x1xf32>
    %18 = arith.maximumf %15, %17 : vector<8x1xf32>
    %19 = arith.subf %15, %18 : vector<8x1xf32>
    %20 = math.exp %19 : vector<8x1xf32>
    %21 = vector.broadcast %18 : vector<8x1xf32> to vector<8x8xf32>
    %22 = arith.subf %13, %21 : vector<8x8xf32>
    %23 = math.exp %22 : vector<8x8xf32>
    %c0_12 = arith.constant 0 : index
    %c0_13 = arith.constant 0 : index
    %c0_14 = arith.constant 0 : index
    %24 = vector.load %arg13[%c0_12, %c0_13, %c0_14] : memref<4x8x1xf32, #tpu.memory_space<vmem>>, vector<1x8x1xf32>
    %25 = vector.shape_cast %24 : vector<1x8x1xf32> to vector<8x1xf32>
    %26 = arith.mulf %20, %25 : vector<8x1xf32>
    %cst_15 = arith.constant dense<0.000000e+00> : vector<8xf32>
    %27 = vector.multi_reduction <add>, %23, %cst_15 [1] : vector<8x8xf32> to vector<8xf32>
    %28 = vector.shape_cast %27 : vector<8xf32> to vector<8x1xf32>
    %29 = arith.addf %26, %28 : vector<8x1xf32>
    %c0_16 = arith.constant 0 : index
    %c0_17 = arith.constant 0 : index
    %c0_18 = arith.constant 0 : index
    %30 = vector.load %arg13[%c0_16, %c0_17, %c0_18] : memref<4x8x1xf32, #tpu.memory_space<vmem>>, vector<1x8x1xf32>
    %31 = vector.shape_cast %30 : vector<1x8x1xf32> to vector<8x1xf32>
    %32 = vector.shape_cast %29 : vector<8x1xf32> to vector<1x8x1xf32>
    tpu.vector_store %arg13[%c0_16, %c0_17, %c0_18], %32 {strides = array<i32>} : memref<4x8x1xf32, #tpu.memory_space<vmem>>, vector<1x8x1xf32>,
    %c0_19 = arith.constant 0 : index
    %c0_20 = arith.constant 0 : index
    %c0_21 = arith.constant 0 : index
    %33 = vector.load %arg12[%c0_19, %c0_20, %c0_21] : memref<4x8x1xf32, #tpu.memory_space<vmem>>, vector<1x8x1xf32>
    %34 = vector.shape_cast %33 : vector<1x8x1xf32> to vector<8x1xf32>
    %35 = vector.shape_cast %18 : vector<8x1xf32> to vector<1x8x1xf32>
    tpu.vector_store %arg12[%c0_19, %c0_20, %c0_21], %35 {strides = array<i32>} : memref<4x8x1xf32, #tpu.memory_space<vmem>>, vector<1x8x1xf32>,
    %cst_22 = arith.constant dense<0.000000e+00> : vector<8x8xf32>
    %36 = tpu.matmul %23, %12, %cst_22 {dimension_numbers = #tpu.dot_dimension_numbers<[1], [0], [0], [1], [0, 0, 1, 1], [], []>} : vector<8x8xf32>, vector<8x8xf32>, vector<8x8xf32> -> vector<8x8xf32>
    %c0_23 = arith.constant 0 : index
    %c0_24 = arith.constant 0 : index
    %37 = vector.load %arg11[%c0_23, %c0_24] : memref<8x32xf32, #tpu.memory_space<vmem>>, vector<8x8xf32>
    %38 = vector.broadcast %20 : vector<8x1xf32> to vector<8x8xf32>
    %39 = arith.mulf %38, %37 : vector<8x8xf32>
    %40 = arith.addf %39, %36 : vector<8x8xf32>
    %c0_25 = arith.constant 0 : index
    %c0_26 = arith.constant 0 : index
    %41 = vector.load %arg11[%c0_25, %c0_26] : memref<8x32xf32, #tpu.memory_space<vmem>>, vector<8x8xf32>
    tpu.vector_store %arg11[%c0_25, %c0_26], %40 {strides = array<i32>} : memref<8x32xf32, #tpu.memory_space<vmem>>, vector<8x8xf32>,
    %42 = vector.extract_strided_slice %9 {offsets = [0, 8], sizes = [8, 8], strides = [1, 1]} : vector<8x32xf32> to vector<8x8xf32>
    %43 = vector.extract_strided_slice %7 {offsets = [0, 8], sizes = [8, 8], strides = [1, 1]} : vector<8x32xf32> to vector<8x8xf32>
    %44 = vector.extract_strided_slice %8 {offsets = [0, 8], sizes = [8, 8], strides = [1, 1]} : vector<8x32xf32> to vector<8x8xf32>
    %cst_27 = arith.constant dense<0.000000e+00> : vector<8x8xf32>
    %45 = tpu.matmul %42, %43, %cst_27 {dimension_numbers = #tpu.dot_dimension_numbers<[1], [1], [0], [0], [0, 0, 1, 0], [], []>} : vector<8x8xf32>, vector<8x8xf32>, vector<8x8xf32> -> vector<8x8xf32>
    %c1 = arith.constant 1 : index
    %c0_28 = arith.constant 0 : index
    %c0_29 = arith.constant 0 : index
    %46 = vector.load %arg12[%c1, %c0_28, %c0_29] : memref<4x8x1xf32, #tpu.memory_space<vmem>>, vector<1x8x1xf32>
    %47 = vector.shape_cast %46 : vector<1x8x1xf32> to vector<8x1xf32>
    %cst_30 = arith.constant dense<0xFF800000> : vector<8xf32>
    %48 = vector.multi_reduction <maximumf>, %45, %cst_30 [1] : vector<8x8xf32> to vector<8xf32>
    %49 = vector.shape_cast %48 : vector<8xf32> to vector<8x1xf32>
    %50 = arith.maximumf %47, %49 : vector<8x1xf32>
    %51 = arith.subf %47, %50 : vector<8x1xf32>
    %52 = math.exp %51 : vector<8x1xf32>
    %53 = vector.broadcast %50 : vector<8x1xf32> to vector<8x8xf32>
    %54 = arith.subf %45, %53 : vector<8x8xf32>
    %55 = math.exp %54 : vector<8x8xf32>
    %c1_31 = arith.constant 1 : index
    %c0_32 = arith.constant 0 : index
    %c0_33 = arith.constant 0 : index
    %56 = vector.load %arg13[%c1_31, %c0_32, %c0_33] : memref<4x8x1xf32, #tpu.memory_space<vmem>>, vector<1x8x1xf32>
    %57 = vector.shape_cast %56 : vector<1x8x1xf32> to vector<8x1xf32>
    %58 = arith.mulf %52, %57 : vector<8x1xf32>
    %cst_34 = arith.constant dense<0.000000e+00> : vector<8xf32>
    %59 = vector.multi_reduction <add>, %55, %cst_34 [1] : vector<8x8xf32> to vector<8xf32>
    %60 = vector.shape_cast %59 : vector<8xf32> to vector<8x1xf32>
    %61 = arith.addf %58, %60 : vector<8x1xf32>
    %c1_35 = arith.constant 1 : index
    %c0_36 = arith.constant 0 : index
    %c0_37 = arith.constant 0 : index
    %62 = vector.load %arg13[%c1_35, %c0_36, %c0_37] : memref<4x8x1xf32, #tpu.memory_space<vmem>>, vector<1x8x1xf32>
    %63 = vector.shape_cast %62 : vector<1x8x1xf32> to vector<8x1xf32>
    %64 = vector.shape_cast %61 : vector<8x1xf32> to vector<1x8x1xf32>
    tpu.vector_store %arg13[%c1_35, %c0_36, %c0_37], %64 {strides = array<i32>} : memref<4x8x1xf32, #tpu.memory_space<vmem>>, vector<1x8x1xf32>,
    %c1_38 = arith.constant 1 : index
    %c0_39 = arith.constant 0 : index
    %c0_40 = arith.constant 0 : index
    %65 = vector.load %arg12[%c1_38, %c0_39, %c0_40] : memref<4x8x1xf32, #tpu.memory_space<vmem>>, vector<1x8x1xf32>
    %66 = vector.shape_cast %65 : vector<1x8x1xf32> to vector<8x1xf32>
    %67 = vector.shape_cast %50 : vector<8x1xf32> to vector<1x8x1xf32>
    tpu.vector_store %arg12[%c1_38, %c0_39, %c0_40], %67 {strides = array<i32>} : memref<4x8x1xf32, #tpu.memory_space<vmem>>, vector<1x8x1xf32>,
    %cst_41 = arith.constant dense<0.000000e+00> : vector<8x8xf32>
    %68 = tpu.matmul %55, %44, %cst_41 {dimension_numbers = #tpu.dot_dimension_numbers<[1], [0], [0], [1], [0, 0, 1, 1], [], []>} : vector<8x8xf32>, vector<8x8xf32>, vector<8x8xf32> -> vector<8x8xf32>
    %c0_42 = arith.constant 0 : index
    %c8 = arith.constant 8 : index
    %69 = vector.load %arg11[%c0_42, %c8] : memref<8x32xf32, #tpu.memory_space<vmem>>, vector<8x8xf32>
    %70 = vector.broadcast %52 : vector<8x1xf32> to vector<8x8xf32>
    %71 = arith.mulf %70, %69 : vector<8x8xf32>
    %72 = arith.addf %71, %68 : vector<8x8xf32>
    %c0_43 = arith.constant 0 : index
    %c8_44 = arith.constant 8 : index
    %73 = vector.load %arg11[%c0_43, %c8_44] : memref<8x32xf32, #tpu.memory_space<vmem>>, vector<8x8xf32>
    tpu.vector_store %arg11[%c0_43, %c8_44], %72 {strides = array<i32>} : memref<8x32xf32, #tpu.memory_space<vmem>>, vector<8x8xf32>,
    %74 = vector.extract_strided_slice %9 {offsets = [0, 16], sizes = [8, 8], strides = [1, 1]} : vector<8x32xf32> to vector<8x8xf32>
    %75 = vector.extract_strided_slice %7 {offsets = [0, 16], sizes = [8, 8], strides = [1, 1]} : vector<8x32xf32> to vector<8x8xf32>
    %76 = vector.extract_strided_slice %8 {offsets = [0, 16], sizes = [8, 8], strides = [1, 1]} : vector<8x32xf32> to vector<8x8xf32>
    %cst_45 = arith.constant dense<0.000000e+00> : vector<8x8xf32>
    %77 = tpu.matmul %74, %75, %cst_45 {dimension_numbers = #tpu.dot_dimension_numbers<[1], [1], [0], [0], [0, 0, 1, 0], [], []>} : vector<8x8xf32>, vector<8x8xf32>, vector<8x8xf32> -> vector<8x8xf32>
    %c2 = arith.constant 2 : index
    %c0_46 = arith.constant 0 : index
    %c0_47 = arith.constant 0 : index
    %78 = vector.load %arg12[%c2, %c0_46, %c0_47] : memref<4x8x1xf32, #tpu.memory_space<vmem>>, vector<1x8x1xf32>
    %79 = vector.shape_cast %78 : vector<1x8x1xf32> to vector<8x1xf32>
    %cst_48 = arith.constant dense<0xFF800000> : vector<8xf32>
    %80 = vector.multi_reduction <maximumf>, %77, %cst_48 [1] : vector<8x8xf32> to vector<8xf32>
    %81 = vector.shape_cast %80 : vector<8xf32> to vector<8x1xf32>
    %82 = arith.maximumf %79, %81 : vector<8x1xf32>
    %83 = arith.subf %79, %82 : vector<8x1xf32>
    %84 = math.exp %83 : vector<8x1xf32>
    %85 = vector.broadcast %82 : vector<8x1xf32> to vector<8x8xf32>
    %86 = arith.subf %77, %85 : vector<8x8xf32>
    %87 = math.exp %86 : vector<8x8xf32>
    %c2_49 = arith.constant 2 : index
    %c0_50 = arith.constant 0 : index
    %c0_51 = arith.constant 0 : index
    %88 = vector.load %arg13[%c2_49, %c0_50, %c0_51] : memref<4x8x1xf32, #tpu.memory_space<vmem>>, vector<1x8x1xf32>
    %89 = vector.shape_cast %88 : vector<1x8x1xf32> to vector<8x1xf32>
    %90 = arith.mulf %84, %89 : vector<8x1xf32>
    %cst_52 = arith.constant dense<0.000000e+00> : vector<8xf32>
    %91 = vector.multi_reduction <add>, %87, %cst_52 [1] : vector<8x8xf32> to vector<8xf32>
    %92 = vector.shape_cast %91 : vector<8xf32> to vector<8x1xf32>
    %93 = arith.addf %90, %92 : vector<8x1xf32>
    %c2_53 = arith.constant 2 : index
    %c0_54 = arith.constant 0 : index
    %c0_55 = arith.constant 0 : index
    %94 = vector.load %arg13[%c2_53, %c0_54, %c0_55] : memref<4x8x1xf32, #tpu.memory_space<vmem>>, vector<1x8x1xf32>
    %95 = vector.shape_cast %94 : vector<1x8x1xf32> to vector<8x1xf32>
    %96 = vector.shape_cast %93 : vector<8x1xf32> to vector<1x8x1xf32>
    tpu.vector_store %arg13[%c2_53, %c0_54, %c0_55], %96 {strides = array<i32>} : memref<4x8x1xf32, #tpu.memory_space<vmem>>, vector<1x8x1xf32>,
    %c2_56 = arith.constant 2 : index
    %c0_57 = arith.constant 0 : index
    %c0_58 = arith.constant 0 : index
    %97 = vector.load %arg12[%c2_56, %c0_57, %c0_58] : memref<4x8x1xf32, #tpu.memory_space<vmem>>, vector<1x8x1xf32>
    %98 = vector.shape_cast %97 : vector<1x8x1xf32> to vector<8x1xf32>
    %99 = vector.shape_cast %82 : vector<8x1xf32> to vector<1x8x1xf32>
    tpu.vector_store %arg12[%c2_56, %c0_57, %c0_58], %99 {strides = array<i32>} : memref<4x8x1xf32, #tpu.memory_space<vmem>>, vector<1x8x1xf32>,
    %cst_59 = arith.constant dense<0.000000e+00> : vector<8x8xf32>
    %100 = tpu.matmul %87, %76, %cst_59 {dimension_numbers = #tpu.dot_dimension_numbers<[1], [0], [0], [1], [0, 0, 1, 1], [], []>} : vector<8x8xf32>, vector<8x8xf32>, vector<8x8xf32> -> vector<8x8xf32>
    %c0_60 = arith.constant 0 : index
    %c16 = arith.constant 16 : index
    %101 = vector.load %arg11[%c0_60, %c16] : memref<8x32xf32, #tpu.memory_space<vmem>>, vector<8x8xf32>
    %102 = vector.broadcast %84 : vector<8x1xf32> to vector<8x8xf32>
    %103 = arith.mulf %102, %101 : vector<8x8xf32>
    %104 = arith.addf %103, %100 : vector<8x8xf32>
    %c0_61 = arith.constant 0 : index
    %c16_62 = arith.constant 16 : index
    %105 = vector.load %arg11[%c0_61, %c16_62] : memref<8x32xf32, #tpu.memory_space<vmem>>, vector<8x8xf32>
    tpu.vector_store %arg11[%c0_61, %c16_62], %104 {strides = array<i32>} : memref<8x32xf32, #tpu.memory_space<vmem>>, vector<8x8xf32>,
    %106 = vector.extract_strided_slice %9 {offsets = [0, 24], sizes = [8, 8], strides = [1, 1]} : vector<8x32xf32> to vector<8x8xf32>
    %107 = vector.extract_strided_slice %7 {offsets = [0, 24], sizes = [8, 8], strides = [1, 1]} : vector<8x32xf32> to vector<8x8xf32>
    %108 = vector.extract_strided_slice %8 {offsets = [0, 24], sizes = [8, 8], strides = [1, 1]} : vector<8x32xf32> to vector<8x8xf32>
    %cst_63 = arith.constant dense<0.000000e+00> : vector<8x8xf32>
    %109 = tpu.matmul %106, %107, %cst_63 {dimension_numbers = #tpu.dot_dimension_numbers<[1], [1], [0], [0], [0, 0, 1, 0], [], []>} : vector<8x8xf32>, vector<8x8xf32>, vector<8x8xf32> -> vector<8x8xf32>
    %c3 = arith.constant 3 : index
    %c0_64 = arith.constant 0 : index
    %c0_65 = arith.constant 0 : index
    %110 = vector.load %arg12[%c3, %c0_64, %c0_65] : memref<4x8x1xf32, #tpu.memory_space<vmem>>, vector<1x8x1xf32>
    %111 = vector.shape_cast %110 : vector<1x8x1xf32> to vector<8x1xf32>
    %cst_66 = arith.constant dense<0xFF800000> : vector<8xf32>
    %112 = vector.multi_reduction <maximumf>, %109, %cst_66 [1] : vector<8x8xf32> to vector<8xf32>
    %113 = vector.shape_cast %112 : vector<8xf32> to vector<8x1xf32>
    %114 = arith.maximumf %111, %113 : vector<8x1xf32>
    %115 = arith.subf %111, %114 : vector<8x1xf32>
    %116 = math.exp %115 : vector<8x1xf32>
    %117 = vector.broadcast %114 : vector<8x1xf32> to vector<8x8xf32>
    %118 = arith.subf %109, %117 : vector<8x8xf32>
    %119 = math.exp %118 : vector<8x8xf32>
    %c3_67 = arith.constant 3 : index
    %c0_68 = arith.constant 0 : index
    %c0_69 = arith.constant 0 : index
    %120 = vector.load %arg13[%c3_67, %c0_68, %c0_69] : memref<4x8x1xf32, #tpu.memory_space<vmem>>, vector<1x8x1xf32>
    %121 = vector.shape_cast %120 : vector<1x8x1xf32> to vector<8x1xf32>
    %122 = arith.mulf %116, %121 : vector<8x1xf32>
    %cst_70 = arith.constant dense<0.000000e+00> : vector<8xf32>
    %123 = vector.multi_reduction <add>, %119, %cst_70 [1] : vector<8x8xf32> to vector<8xf32>
    %124 = vector.shape_cast %123 : vector<8xf32> to vector<8x1xf32>
    %125 = arith.addf %122, %124 : vector<8x1xf32>
    %c3_71 = arith.constant 3 : index
    %c0_72 = arith.constant 0 : index
    %c0_73 = arith.constant 0 : index
    %126 = vector.load %arg13[%c3_71, %c0_72, %c0_73] : memref<4x8x1xf32, #tpu.memory_space<vmem>>, vector<1x8x1xf32>
    %127 = vector.shape_cast %126 : vector<1x8x1xf32> to vector<8x1xf32>
    %128 = vector.shape_cast %125 : vector<8x1xf32> to vector<1x8x1xf32>
    tpu.vector_store %arg13[%c3_71, %c0_72, %c0_73], %128 {strides = array<i32>} : memref<4x8x1xf32, #tpu.memory_space<vmem>>, vector<1x8x1xf32>,
    %c3_74 = arith.constant 3 : index
    %c0_75 = arith.constant 0 : index
    %c0_76 = arith.constant 0 : index
    %129 = vector.load %arg12[%c3_74, %c0_75, %c0_76] : memref<4x8x1xf32, #tpu.memory_space<vmem>>, vector<1x8x1xf32>
    %130 = vector.shape_cast %129 : vector<1x8x1xf32> to vector<8x1xf32>
    %131 = vector.shape_cast %114 : vector<8x1xf32> to vector<1x8x1xf32>
    tpu.vector_store %arg12[%c3_74, %c0_75, %c0_76], %131 {strides = array<i32>} : memref<4x8x1xf32, #tpu.memory_space<vmem>>, vector<1x8x1xf32>,
    %cst_77 = arith.constant dense<0.000000e+00> : vector<8x8xf32>
    %132 = tpu.matmul %119, %108, %cst_77 {dimension_numbers = #tpu.dot_dimension_numbers<[1], [0], [0], [1], [0, 0, 1, 1], [], []>} : vector<8x8xf32>, vector<8x8xf32>, vector<8x8xf32> -> vector<8x8xf32>
    %c0_78 = arith.constant 0 : index
    %c24 = arith.constant 24 : index
    %133 = vector.load %arg11[%c0_78, %c24] : memref<8x32xf32, #tpu.memory_space<vmem>>, vector<8x8xf32>
    %134 = vector.broadcast %116 : vector<8x1xf32> to vector<8x8xf32>
    %135 = arith.mulf %134, %133 : vector<8x8xf32>
    %136 = arith.addf %135, %132 : vector<8x8xf32>
    %c0_79 = arith.constant 0 : index
    %c24_80 = arith.constant 24 : index
    %137 = vector.load %arg11[%c0_79, %c24_80] : memref<8x32xf32, #tpu.memory_space<vmem>>, vector<8x8xf32>
    tpu.vector_store %arg11[%c0_79, %c24_80], %136 {strides = array<i32>} : memref<8x32xf32, #tpu.memory_space<vmem>>, vector<8x8xf32>,
    %c0_i32_81 = arith.constant 0 : i32
    %138 = arith.cmpi eq, %arg2, %c0_i32_81 : i32
    %139 = arith.extui %138 : i1 to i32
    %c0_i32_82 = arith.constant 0 : i32
    %140 = arith.cmpi ne, %139, %c0_i32_82 : i32
    scf.if %140 {
      %c0_83 = arith.constant 0 : index
      %c0_84 = arith.constant 0 : index
      %c0_85 = arith.constant 0 : index
      %141 = vector.load %arg13[%c0_83, %c0_84, %c0_85] : memref<4x8x1xf32, #tpu.memory_space<vmem>>, vector<1x8x1xf32>
      %142 = vector.shape_cast %141 : vector<1x8x1xf32> to vector<8x1xf32>
      %143 = tpu.reciprocal %142 {approx = true} : vector<8x1xf32> -> vector<8x1xf32>
      %144 = arith.mulf %142, %143 : vector<8x1xf32>
      %cst_86 = arith.constant 2.000000e+00 : f32
      %145 = vector.broadcast %cst_86 : f32 to vector<8x1xf32>
      %146 = arith.subf %145, %144 : vector<8x1xf32>
      %147 = arith.mulf %143, %146 : vector<8x1xf32>
      %c0_87 = arith.constant 0 : index
      %c0_88 = arith.constant 0 : index
      %148 = vector.load %arg11[%c0_87, %c0_88] : memref<8x32xf32, #tpu.memory_space<vmem>>, vector<8x8xf32>
      %149 = vector.broadcast %147 : vector<8x1xf32> to vector<8x8xf32>
      %150 = arith.mulf %148, %149 : vector<8x8xf32>
      %c0_89 = arith.constant 0 : index
      %c0_90 = arith.constant 0 : index
      %151 = vector.load %arg11[%c0_89, %c0_90] : memref<8x32xf32, #tpu.memory_space<vmem>>, vector<8x8xf32>
      tpu.vector_store %arg11[%c0_89, %c0_90], %150 {strides = array<i32>} : memref<8x32xf32, #tpu.memory_space<vmem>>, vector<8x8xf32>,
      %c1_91 = arith.constant 1 : index
      %c0_92 = arith.constant 0 : index
      %c0_93 = arith.constant 0 : index
      %152 = vector.load %arg13[%c1_91, %c0_92, %c0_93] : memref<4x8x1xf32, #tpu.memory_space<vmem>>, vector<1x8x1xf32>
      %153 = vector.shape_cast %152 : vector<1x8x1xf32> to vector<8x1xf32>
      %154 = tpu.reciprocal %153 {approx = true} : vector<8x1xf32> -> vector<8x1xf32>
      %155 = arith.mulf %153, %154 : vector<8x1xf32>
      %cst_94 = arith.constant 2.000000e+00 : f32
      %156 = vector.broadcast %cst_94 : f32 to vector<8x1xf32>
      %157 = arith.subf %156, %155 : vector<8x1xf32>
      %158 = arith.mulf %154, %157 : vector<8x1xf32>
      %c0_95 = arith.constant 0 : index
      %c8_96 = arith.constant 8 : index
      %159 = vector.load %arg11[%c0_95, %c8_96] : memref<8x32xf32, #tpu.memory_space<vmem>>, vector<8x8xf32>
      %160 = vector.broadcast %158 : vector<8x1xf32> to vector<8x8xf32>
      %161 = arith.mulf %159, %160 : vector<8x8xf32>
      %c0_97 = arith.constant 0 : index
      %c8_98 = arith.constant 8 : index
      %162 = vector.load %arg11[%c0_97, %c8_98] : memref<8x32xf32, #tpu.memory_space<vmem>>, vector<8x8xf32>
      tpu.vector_store %arg11[%c0_97, %c8_98], %161 {strides = array<i32>} : memref<8x32xf32, #tpu.memory_space<vmem>>, vector<8x8xf32>,
      %c2_99 = arith.constant 2 : index
      %c0_100 = arith.constant 0 : index
      %c0_101 = arith.constant 0 : index
      %163 = vector.load %arg13[%c2_99, %c0_100, %c0_101] : memref<4x8x1xf32, #tpu.memory_space<vmem>>, vector<1x8x1xf32>
      %164 = vector.shape_cast %163 : vector<1x8x1xf32> to vector<8x1xf32>
      %165 = tpu.reciprocal %164 {approx = true} : vector<8x1xf32> -> vector<8x1xf32>
      %166 = arith.mulf %164, %165 : vector<8x1xf32>
      %cst_102 = arith.constant 2.000000e+00 : f32
      %167 = vector.broadcast %cst_102 : f32 to vector<8x1xf32>
      %168 = arith.subf %167, %166 : vector<8x1xf32>
      %169 = arith.mulf %165, %168 : vector<8x1xf32>
      %c0_103 = arith.constant 0 : index
      %c16_104 = arith.constant 16 : index
      %170 = vector.load %arg11[%c0_103, %c16_104] : memref<8x32xf32, #tpu.memory_space<vmem>>, vector<8x8xf32>
      %171 = vector.broadcast %169 : vector<8x1xf32> to vector<8x8xf32>
      %172 = arith.mulf %170, %171 : vector<8x8xf32>
      %c0_105 = arith.constant 0 : index
      %c16_106 = arith.constant 16 : index
      %173 = vector.load %arg11[%c0_105, %c16_106] : memref<8x32xf32, #tpu.memory_space<vmem>>, vector<8x8xf32>
      tpu.vector_store %arg11[%c0_105, %c16_106], %172 {strides = array<i32>} : memref<8x32xf32, #tpu.memory_space<vmem>>, vector<8x8xf32>,
      %c3_107 = arith.constant 3 : index
      %c0_108 = arith.constant 0 : index
      %c0_109 = arith.constant 0 : index
      %174 = vector.load %arg13[%c3_107, %c0_108, %c0_109] : memref<4x8x1xf32, #tpu.memory_space<vmem>>, vector<1x8x1xf32>
      %175 = vector.shape_cast %174 : vector<1x8x1xf32> to vector<8x1xf32>
      %176 = tpu.reciprocal %175 {approx = true} : vector<8x1xf32> -> vector<8x1xf32>
      %177 = arith.mulf %175, %176 : vector<8x1xf32>
      %cst_110 = arith.constant 2.000000e+00 : f32
      %178 = vector.broadcast %cst_110 : f32 to vector<8x1xf32>
      %179 = arith.subf %178, %177 : vector<8x1xf32>
      %180 = arith.mulf %176, %179 : vector<8x1xf32>
      %c0_111 = arith.constant 0 : index
      %c24_112 = arith.constant 24 : index
      %181 = vector.load %arg11[%c0_111, %c24_112] : memref<8x32xf32, #tpu.memory_space<vmem>>, vector<8x8xf32>
      %182 = vector.broadcast %180 : vector<8x1xf32> to vector<8x8xf32>
      %183 = arith.mulf %181, %182 : vector<8x8xf32>
      %c0_113 = arith.constant 0 : index
      %c24_114 = arith.constant 24 : index
      %184 = vector.load %arg11[%c0_113, %c24_114] : memref<8x32xf32, #tpu.memory_space<vmem>>, vector<8x8xf32>
      tpu.vector_store %arg11[%c0_113, %c24_114], %183 {strides = array<i32>} : memref<8x32xf32, #tpu.memory_space<vmem>>, vector<8x8xf32>,
      %c0_115 = arith.constant 0 : index
      %c0_116 = arith.constant 0 : index
      %185 = vector.load %arg11[%c0_115, %c0_116] : memref<8x32xf32, #tpu.memory_space<vmem>>, vector<8x32xf32>
      %c0_117 = arith.constant 0 : index
      %c0_118 = arith.constant 0 : index
      %186 = vector.load %arg7[%c0_117, %c0_118] : memref<32x32xf32, #tpu.memory_space<vmem>>, vector<32x32xf32>
      %cst_119 = arith.constant dense<0.000000e+00> : vector<8x32xf32>
      %187 = tpu.matmul %185, %186, %cst_119 {dimension_numbers = #tpu.dot_dimension_numbers<[1], [0], [0], [1], [0, 0, 1, 1], [], []>} : vector<8x32xf32>, vector<32x32xf32>, vector<8x32xf32> -> vector<8x32xf32>
      %c0_120 = arith.constant 0 : index
      %c0_121 = arith.constant 0 : index
      %188 = vector.load %arg8[%c0_120, %c0_121] : memref<1x32xf32, #tpu.memory_space<vmem>>, vector<1x32xf32>
      %189 = vector.broadcast %188 : vector<1x32xf32> to vector<8x32xf32>
      %190 = arith.addf %187, %189 : vector<8x32xf32>
      %c0_122 = arith.constant 0 : index
      %c0_123 = arith.constant 0 : index
      %c0_124 = arith.constant 0 : index
      %191 = vector.load %arg9[%c0_122, %c0_123, %c0_124] : memref<1x8x32xf32, #tpu.memory_space<vmem>>, vector<1x8x32xf32>
      %192 = vector.shape_cast %191 : vector<1x8x32xf32> to vector<8x32xf32>
      %193 = vector.shape_cast %190 : vector<8x32xf32> to vector<1x8x32xf32>
      tpu.vector_store %arg9[%c0_122, %c0_123, %c0_124], %193 {strides = array<i32>} : memref<1x8x32xf32, #tpu.memory_space<vmem>>, vector<1x8x32xf32>,
    } else {
    }
    return
  }
  func.func @transform_0(%arg0: i32, %arg1: i32, %arg2: i32) -> (i32, i32, i32) {
    %c0_i32 = arith.constant 0 : i32
    %c0_i32_0 = arith.constant 0 : i32
    return %arg0, %arg1, %c0_i32 : i32, i32, i32
  }
  func.func @transform_1(%arg0: i32, %arg1: i32, %arg2: i32) -> (i32, i32, i32) {
    %c0_i32 = arith.constant 0 : i32
    %c0_i32_0 = arith.constant 0 : i32
    return %arg0, %arg2, %c0_i32 : i32, i32, i32
  }
  func.func @transform_2(%arg0: i32, %arg1: i32, %arg2: i32) -> (i32, i32) {
    %c0_i32 = arith.constant 0 : i32
    %c0_i32_0 = arith.constant 0 : i32
    %c0_i32_1 = arith.constant 0 : i32
    return %c0_i32, %c0_i32_0 : i32, i32
  }
  func.func @transform_3(%arg0: i32, %arg1: i32, %arg2: i32) -> (i32, i32) {
    %c0_i32 = arith.constant 0 : i32
    %c0_i32_0 = arith.constant 0 : i32
    %c0_i32_1 = arith.constant 0 : i32
    return %c0_i32, %c0_i32_0 : i32, i32
  }
  func.func @transform_4(%arg0: i32, %arg1: i32, %arg2: i32) -> (i32, i32) {
    %c0_i32 = arith.constant 0 : i32
    %c0_i32_0 = arith.constant 0 : i32
    %c0_i32_1 = arith.constant 0 : i32
    return %c0_i32, %c0_i32_0 : i32, i32
  }
  func.func @transform_5(%arg0: i32, %arg1: i32, %arg2: i32) -> (i32, i32) {
    %c0_i32 = arith.constant 0 : i32
    %c0_i32_0 = arith.constant 0 : i32
    %c0_i32_1 = arith.constant 0 : i32
    return %c0_i32, %c0_i32_0 : i32, i32
  }
  func.func @transform_6(%arg0: i32, %arg1: i32, %arg2: i32) -> (i32, i32, i32) {
    %c0_i32 = arith.constant 0 : i32
    %c0_i32_0 = arith.constant 0 : i32
    return %arg0, %arg1, %c0_i32 : i32, i32, i32
  }
}

</mosaic_0001>

<llo_original>
// kernel: tpu_custom_call.1
$region0: #{tpu_custom_call.1}
  #allocation0 [shape = 'u32[]', space=smem, size = 0x4, offset = 0x4, fixed_abs, tag = 'smem constant byte address 0x4 - core index']
  #allocation1 [shape = 'u32[72,128]{1,0:T(1,128)}', space=vmem, size = 0x9000, scoped, tag = 'internal scratch']
  #allocation2 [shape = 'f32[8,32]{1,0:T(8,128)}', space=vmem, size = 0x1000, scoped, tag = 'scratch operand']
  #allocation3 [shape = 'f32[8,32]{1,0:T(8,128)}', space=vmem, size = 0x1000, scoped, tag = 'scratch operand']
  #allocation4 [shape = 'f32[4,8,1]{2,1,0:T(8,128)}', space=vmem, size = 0x4000, scoped, tag = 'scratch operand']
  #allocation5 [shape = 'f32[4,8,1]{2,1,0:T(8,128)}', space=vmem, size = 0x4000, scoped, tag = 'scratch operand']
  %s0 = inlined_call_operand.hbm [shape: f32[2,8,32], index: 0, kind: input, shape index: {}]
  %s1 = inlined_call_operand.hbm [shape: f32[2,8,32], index: 1, kind: input, shape index: {}]
  %s2 = inlined_call_operand.hbm [shape: f32[32,32], index: 2, kind: input, shape index: {}]
  %s3 = inlined_call_operand.hbm [shape: f32[32,64], index: 3, kind: input, shape index: {}]
  %s4 = inlined_call_operand.hbm [shape: f32[32,32], index: 4, kind: input, shape index: {}]
  %s5 = inlined_call_operand.vmem [shape: f32[1,32], index: 5, kind: input, shape index: {}]
  %s6 = inlined_call_operand.hbm [shape: f32[2,8,32], index: 6, kind: output, shape index: {}]
  %s7 = sld [smem:[#allocation0]]
  $region85: #{tpu_custom_call.1} parent=0
    _
  %s9 = ssub.s32 1, %s7
  %s10 = scalar_select 0, %s9, %s7
  $region1: #{tpu_custom_call.1} parent=0
    #allocation6 [shape = 'u8[8192]{0}', space=vmem, size = 0x2000, scoped, tag = 'input window, operand 0']
    #allocation7 [shape = 's32[2]{0}', space=sflag, size = 0x8, scoped, tag = 'scoped memory for tpu_custom_call.1']
    #allocation8 [shape = 's32[2]{0}', space=sflag, size = 0x8, scoped, tag = 'scoped memory for tpu_custom_call.1']
    #allocation9 [shape = 'u8[8192]{0}', space=vmem, size = 0x2000, scoped, tag = 'input window, operand 1']
    #allocation10 [shape = 's32[2]{0}', space=sflag, size = 0x8, scoped, tag = 'scoped memory for tpu_custom_call.1']
    #allocation11 [shape = 'u8[16384]{0}', space=vmem, size = 0x4000, scoped, tag = 'input window, operand 2, single buffered']
    #allocation12 [shape = 'u8[16384]{0}', space=vmem, size = 0x4000, scoped, tag = 'input window, operand 3, single buffered']
    #allocation13 [shape = 's32[1]{0}', space=sflag, size = 0x4, scoped, tag = 'scoped memory for tpu_custom_call.1']
    #allocation14 [shape = 'u8[16384]{0}', space=vmem, size = 0x4000, scoped, tag = 'input window, operand 4, single buffered']
    #allocation15 [shape = 'u8[8192]{0}', space=vmem, size = 0x2000, scoped, tag = 'output window, operand 0']
    %11 = vsyncpa [#allocation7], 0
    %s12 = scalar_lea.sflag [#allocation7], 1
    %13 = vsyncpa %s12, 0
    %14 = vsyncpa [#allocation10], 0
    %s15 = scalar_lea.sflag [#allocation10], 1
    %16 = vsyncpa %s15, 0
    %17 = vsyncpa [#allocation13], 0
    %18 = vsyncpa [#allocation8], 0
    %s19 = scalar_lea.sflag [#allocation8], 1
    %20 = vsyncpa %s19, 0
    loop: start=0, step=1, limit=4
    $region2: #{tpu_custom_call.1} parent=1 // loop_pre_header
      _
    $region3: #{tpu_custom_call.1} parent=1 // loop_header
      %s22 = sphi 0, %s26
      %p23 = scmp.ge.s32.totalorder %s22, 4
      %s29 = sphi 0, %s48
      %s30 = sphi 0, %s44
      %s31 = sphi 0, %s40
      %s32 = sphi 0, %s29
      %s33 = sphi 0, %s30
      %s34 = sphi 0, %s31
      %s35 = sphi 0, %s32
      %s36 = sphi 0, %s33
      %s37 = sphi 0, %s34
      %s53 = sphi 0, %s55
      %s56 = sphi 0, %s53
      %s57 = sphi 0, %s56
      %s73 = sphi 0, %s57
      %s81 = sphi 0, %s83
      %s84 = sphi 0, %s81
      %s85 = sphi 0, %s84
      %s101 = sphi 0, %s85
      %s105 = sphi 0, %s105
      %s107 = sphi 0, %s105
      %s108 = sphi 0, %s107
      %s122 = sphi 0, %s108
      %s126 = sphi 0, %s126
      %s128 = sphi 0, %s126
      %s129 = sphi 0, %s128
      %s143 = sphi 0, %s129
      %s147 = sphi 0, %s147
      %s149 = sphi 0, %s147
      %s150 = sphi 0, %s149
      %s164 = sphi 0, %s150
      %s168 = sphi 0, %s168
      %s170 = sphi 0, %s168
      %s171 = sphi 0, %s170
      %s185 = sphi 0, %s171
      %s193 = sphi 0, %s195
      %s196 = sphi 0, %s193
      %s197 = sphi 0, %s196
      %s213 = sphi 0, %s197
    $region4: #{tpu_custom_call.1} parent=1 // loop_header_branch
      %25 = sbr.rel (%p23) target = $region8
    $region5: #{tpu_custom_call.1} parent=1 // loop_body
      %s27 = ssub.s32 %s22, 1
      %s28 = ssub.s32 %s22, 2
      %s38 = sadd.s32 1, %s31
      %p39 = scmp.ge.s32.totalorder %s38, 1
      %s40 = scalar_select %p39, 0, %s38
      %s41 = sadd.s32 1, %s30
      %s42 = scalar_select %p39, %s41, %s30
      %p43 = scmp.ge.s32.totalorder %s42, 1
      %s44 = scalar_select %p43, 0, %s42
      %s45 = sadd.s32 1, %s29
      %s46 = scalar_select %p43, %s45, %s29
      %p47 = scmp.ge.s32.totalorder %s46, 2
      %s48 = scalar_select %p47, 0, %s46
      %s49 = ssub.s32 %s29, %s48
      %s50 = ssub.s32 %s30, %s44
      %s51 = sor.u32 %s49, %s50
      %p52 = scmp.eq.s32.totalorder %s51, 0
      %s54 = sadd.s32 %s53, 1
      %s55 = scalar_select %p52, %s53, %s54
      %p58 = pneg %p52
      %p59 = scmp.eq.s32.totalorder %s22, 1
      %p60 = por %p58, %p59
      %p61 = scmp.ne.s32.totalorder %s53, %s56
      %p62 = scmp.eq.s32.totalorder %s22, 0
      %p63 = por %p61, %p62
      %p64 = scmp.ne.s32.totalorder %s53, %s56
      %p65 = scmp.eq.s32.totalorder %s27, 1
      %p66 = por %p64, %p65
      %p67 = scmp.ne.s32.totalorder %s56, %s57
      %p68 = scmp.eq.s32.totalorder %s27, 0
      %p69 = por %p67, %p68
      %p70 = scmp.ne.s32.totalorder %s56, %s57
      %p71 = scmp.eq.s32.totalorder %s28, 1
      %p72 = por %p70, %p71
      %p74 = scmp.ne.s32.totalorder %s57, %s73
      %p75 = scmp.eq.s32.totalorder %s28, 0
      %p76 = por %p74, %p75
      %s77 = ssub.s32 %s29, %s48
      %s78 = ssub.s32 %s31, %s40
      %s79 = sor.u32 %s77, %s78
      %p80 = scmp.eq.s32.totalorder %s79, 0
      %s82 = sadd.s32 %s81, 1
      %s83 = scalar_select %p80, %s81, %s82
      %p86 = pneg %p80
      %p87 = scmp.eq.s32.totalorder %s22, 1
      %p88 = por %p86, %p87
      %p89 = scmp.ne.s32.totalorder %s81, %s84
      %p90 = scmp.eq.s32.totalorder %s22, 0
      %p91 = por %p89, %p90
      %p92 = scmp.ne.s32.totalorder %s81, %s84
      %p93 = scmp.eq.s32.totalorder %s27, 1
      %p94 = por %p92, %p93
      %p95 = scmp.ne.s32.totalorder %s84, %s85
      %p96 = scmp.eq.s32.totalorder %s27, 0
      %p97 = por %p95, %p96
      %p98 = scmp.ne.s32.totalorder %s84, %s85
      %p99 = scmp.eq.s32.totalorder %s28, 1
      %p100 = por %p98, %p99
      %p102 = scmp.ne.s32.totalorder %s85, %s101
      %p103 = scmp.eq.s32.totalorder %s28, 0
      %p104 = por %p102, %p103
      %s106 = sadd.s32 %s105, 1
      %p109 = scmp.eq.s32.totalorder %s22, 1
      %p110 = scmp.ne.s32.totalorder %s105, %s107
      %p111 = scmp.eq.s32.totalorder %s22, 0
      %p112 = por %p110, %p111
      %p113 = scmp.ne.s32.totalorder %s105, %s107
      %p114 = scmp.eq.s32.totalorder %s27, 1
      %p115 = por %p113, %p114
      %p116 = scmp.ne.s32.totalorder %s107, %s108
      %p117 = scmp.eq.s32.totalorder %s27, 0
      %p118 = por %p116, %p117
      %p119 = scmp.ne.s32.totalorder %s107, %s108
      %p120 = scmp.eq.s32.totalorder %s28, 1
      %p121 = por %p119, %p120
      %p123 = scmp.ne.s32.totalorder %s108, %s122
      %p124 = scmp.eq.s32.totalorder %s28, 0
      %p125 = por %p123, %p124
      %s127 = sadd.s32 %s126, 1
      %p130 = scmp.eq.s32.totalorder %s22, 1
      %p131 = scmp.ne.s32.totalorder %s126, %s128
      %p132 = scmp.eq.s32.totalorder %s22, 0
      %p133 = por %p131, %p132
      %p134 = scmp.ne.s32.totalorder %s126, %s128
      %p135 = scmp.eq.s32.totalorder %s27, 1
      %p136 = por %p134, %p135
      %p137 = scmp.ne.s32.totalorder %s128, %s129
      %p138 = scmp.eq.s32.totalorder %s27, 0
      %p139 = por %p137, %p138
      %p140 = scmp.ne.s32.totalorder %s128, %s129
      %p141 = scmp.eq.s32.totalorder %s28, 1
      %p142 = por %p140, %p141
      %p144 = scmp.ne.s32.totalorder %s129, %s143
      %p145 = scmp.eq.s32.totalorder %s28, 0
      %p146 = por %p144, %p145
      %s148 = sadd.s32 %s147, 1
      %p151 = scmp.eq.s32.totalorder %s22, 1
      %p152 = scmp.ne.s32.totalorder %s147, %s149
      %p153 = scmp.eq.s32.totalorder %s22, 0
      %p154 = por %p152, %p153
      %p155 = scmp.ne.s32.totalorder %s147, %s149
      %p156 = scmp.eq.s32.totalorder %s27, 1
      %p157 = por %p155, %p156
      %p158 = scmp.ne.s32.totalorder %s149, %s150
      %p159 = scmp.eq.s32.totalorder %s27, 0
      %p160 = por %p158, %p159
      %p161 = scmp.ne.s32.totalorder %s149, %s150
      %p162 = scmp.eq.s32.totalorder %s28, 1
      %p163 = por %p161, %p162
      %p165 = scmp.ne.s32.totalorder %s150, %s164
      %p166 = scmp.eq.s32.totalorder %s28, 0
      %p167 = por %p165, %p166
      %s169 = sadd.s32 %s168, 1
      %p172 = scmp.eq.s32.totalorder %s22, 1
      %p173 = scmp.ne.s32.totalorder %s168, %s170
      %p174 = scmp.eq.s32.totalorder %s22, 0
      %p175 = por %p173, %p174
      %p176 = scmp.ne.s32.totalorder %s168, %s170
      %p177 = scmp.eq.s32.totalorder %s27, 1
      %p178 = por %p176, %p177
      %p179 = scmp.ne.s32.totalorder %s170, %s171
      %p180 = scmp.eq.s32.totalorder %s27, 0
      %p181 = por %p179, %p180
      %p182 = scmp.ne.s32.totalorder %s170, %s171
      %p183 = scmp.eq.s32.totalorder %s28, 1
      %p184 = por %p182, %p183
      %p186 = scmp.ne.s32.totalorder %s171, %s185
      %p187 = scmp.eq.s32.totalorder %s28, 0
      %p188 = por %p186, %p187
      %s189 = ssub.s32 %s29, %s48
      %s190 = ssub.s32 %s30, %s44
      %s191 = sor.u32 %s189, %s190
      %p192 = scmp.eq.s32.totalorder %s191, 0
      %s194 = sadd.s32 %s193, 1
      %s195 = scalar_select %p192, %s193, %s194
      %p198 = pneg %p192
      %p199 = scmp.eq.s32.totalorder %s22, 1
      %p200 = por %p198, %p199
      %p201 = scmp.ne.s32.totalorder %s193, %s196
      %p202 = scmp.eq.s32.totalorder %s22, 0
      %p203 = por %p201, %p202
      %p204 = scmp.ne.s32.totalorder %s193, %s196
      %p205 = scmp.eq.s32.totalorder %s27, 1
      %p206 = por %p204, %p205
      %p207 = scmp.ne.s32.totalorder %s196, %s197
      %p208 = scmp.eq.s32.totalorder %s27, 0
      %p209 = por %p207, %p208
      %p210 = scmp.ne.s32.totalorder %s196, %s197
      %p211 = scmp.eq.s32.totalorder %s28, 1
      %p212 = por %p210, %p211
      %p214 = scmp.ne.s32.totalorder %s197, %s213
      %p215 = scmp.eq.s32.totalorder %s28, 0
      %p216 = por %p214, %p215
      %p217 = scmp.le.s32.totalorder 1, %s22
      %p218 = scmp.lt.s32.totalorder %s22, 3
      %p219 = pnand %p217, %p218
      %p220 = pneg %p219
      // Predicated region
      $region9: #{tpu_custom_call.1} parent=5 // pred_check
        _
      $region10: #{tpu_custom_call.1} parent=5 // pred_check_branch
        %222 = sbr.rel (%p219) target = $region12
      $region11: #{tpu_custom_call.1} parent=5 // pred_region
        %s223 = ssub.s32 %s22, 1
        // Predicated region
        $region13: #{tpu_custom_call.1} parent=11 // pred_check
          %p224 = pneg %p118
        $region14: #{tpu_custom_call.1} parent=11 // pred_check_branch
          %226 = sbr.rel (%p224) target = $region16
        $region15: #{tpu_custom_call.1} parent=11 // pred_region
          %228 = vsyncadd [#allocation10], 0
          %s229 = sshll.u32 %s2, 4
          %s230 = int_to_ptr.hbm [resolvable:$true] %s229
          %s231 = sshll.u32 [#allocation11], 4
          %s232 = int_to_ptr.vmem [resolvable:$true] %s231
          %237 = dma.hbm_to_vmem [thread:$0]  %s230, 512, %s232, [#allocation10], 128, 128, 8
        $region16: #{tpu_custom_call.1} parent=11 // pred_fallthru
          _
        // Predicated region
        $region17: #{tpu_custom_call.1} parent=11 // pred_check
          %p238 = pneg %p139
        $region18: #{tpu_custom_call.1} parent=11 // pred_check_branch
          %240 = sbr.rel (%p238) target = $region20
        $region19: #{tpu_custom_call.1} parent=11 // pred_region
          %242 = vsyncadd [#allocation13], 0
          %s243 = sshll.u32 %s3, 4
          %s244 = int_to_ptr.hbm [resolvable:$true] %s243
          %s245 = sshll.u32 [#allocation12], 4
          %s246 = int_to_ptr.vmem [resolvable:$true] %s245
          %251 = dma.hbm_to_vmem [thread:$0]  %s244, 512, %s246, [#allocation13], 128, 128, 8
        $region20: #{tpu_custom_call.1} parent=11 // pred_fallthru
          _
        // Predicated region
        $region21: #{tpu_custom_call.1} parent=11 // pred_check
          %p252 = pneg %p160
        $region22: #{tpu_custom_call.1} parent=11 // pred_check_branch
          %254 = sbr.rel (%p252) target = $region24
        $region23: #{tpu_custom_call.1} parent=11 // pred_region
          %256 = vsyncadd [#allocation13], 0
          %s257 = sshll.u32 %s4, 4
          %s258 = int_to_ptr.hbm [resolvable:$true] %s257
          %s259 = sshll.u32 [#allocation14], 4
          %s260 = int_to_ptr.vmem [resolvable:$true] %s259
          %265 = dma.hbm_to_vmem [thread:$0]  %s258, 512, %s260, [#allocation13], 128, 128, 8
        $region24: #{tpu_custom_call.1} parent=11 // pred_fallthru
          _
        // Predicated region
        $region25: #{tpu_custom_call.1} parent=11 // pred_check
          %p266 = pneg %p181
        $region26: #{tpu_custom_call.1} parent=11 // pred_check_branch
          %268 = sbr.rel (%p266) target = $region28
        $region27: #{tpu_custom_call.1} parent=11 // pred_region
          _
        $region28: #{tpu_custom_call.1} parent=11 // pred_fallthru
          _
      $region12: #{tpu_custom_call.1} parent=5 // pred_fallthru
        _
      %p269 = scmp.lt.s32.totalorder %s22, 2
      // Predicated region
      $region29: #{tpu_custom_call.1} parent=5 // pred_check
        %p270 = pneg %p269
      $region30: #{tpu_custom_call.1} parent=5 // pred_check_branch
        %272 = sbr.rel (%p270) target = $region32
      $region31: #{tpu_custom_call.1} parent=5 // pred_region
        // Predicated region
        $region33: #{tpu_custom_call.1} parent=31 // pred_check
          %p273 = pneg %p63
        $region34: #{tpu_custom_call.1} parent=31 // pred_check_branch
          %275 = sbr.rel (%p273) target = $region36
        $region35: #{tpu_custom_call.1} parent=31 // pred_region
          %s276 = sand.u32 %s53, 1
          %s277 = scalar_lea.sflag [#allocation7], %s276
          %s278 = sand.u32 %s53, 1
          %s279 = smul.addr %s278, 8
          %s280 = scalar_lea.vmem [#allocation6], %s279
          %282 = vsyncadd %s277, 0
          %s283 = sadd.s32 %s30, %s29
          %s284 = smul.addr %s283, 8
          %s285 = scalar_lea.hbm %s0, %s284
          %s287 = sshll.u32 %s285, 4
          %s288 = int_to_ptr.hbm [resolvable:$true] %s287
          %s289 = sshll.u32 %s280, 4
          %s290 = int_to_ptr.vmem [resolvable:$true] %s289
          %292 = dma.hbm_to_vmem [thread:$0]  %s288, 128, %s290, %s277
        $region36: #{tpu_custom_call.1} parent=31 // pred_fallthru
          _
        // Predicated region
        $region37: #{tpu_custom_call.1} parent=31 // pred_check
          %p293 = pneg %p91
        $region38: #{tpu_custom_call.1} parent=31 // pred_check_branch
          %295 = sbr.rel (%p293) target = $region40
        $region39: #{tpu_custom_call.1} parent=31 // pred_region
          %s296 = sand.u32 %s22, 1
          %s297 = scalar_lea.sflag [#allocation10], %s296
          %s298 = sand.u32 %s81, 1
          %s299 = smul.addr %s298, 8
          %s300 = scalar_lea.vmem [#allocation9], %s299
          %302 = vsyncadd %s297, 0
          %s303 = sadd.s32 %s31, %s29
          %s304 = smul.addr %s303, 8
          %s305 = scalar_lea.hbm %s1, %s304
          %s307 = sshll.u32 %s305, 4
          %s308 = int_to_ptr.hbm [resolvable:$true] %s307
          %s309 = sshll.u32 %s300, 4
          %s310 = int_to_ptr.vmem [resolvable:$true] %s309
          %312 = dma.hbm_to_vmem [thread:$0]  %s308, 128, %s310, %s297
        $region40: #{tpu_custom_call.1} parent=31 // pred_fallthru
          _
      $region32: #{tpu_custom_call.1} parent=5 // pred_fallthru
        _
      %p313 = scmp.le.s32.totalorder 1, %s22
      %p314 = scmp.lt.s32.totalorder %s22, 3
      %p315 = pnand %p313, %p314
      %p316 = pneg %p315
      // Predicated region
      $region41: #{tpu_custom_call.1} parent=5 // pred_check
        _
      $region42: #{tpu_custom_call.1} parent=5 // pred_check_branch
        %318 = sbr.rel (%p315) target = $region44
      $region43: #{tpu_custom_call.1} parent=5 // pred_region
        %s319 = ssub.s32 %s22, 1
        %s320 = sand.u32 %s56, 1
        %s321 = scalar_lea.sflag [#allocation7], %s320
        %s322 = sand.u32 %s56, 1
        %s323 = smul.addr %s322, 8
        %s324 = scalar_lea.vmem [#allocation6], %s323
        // Predicated region
        $region45: #{tpu_custom_call.1} parent=43 // pred_check
          %p325 = pneg %p69
        $region46: #{tpu_custom_call.1} parent=43 // pred_check_branch
          %327 = sbr.rel (%p325) target = $region48
        $region47: #{tpu_custom_call.1} parent=43 // pred_region
          %329 = dma.done %s321, 128
        $region48: #{tpu_custom_call.1} parent=43 // pred_fallthru
          _
        %s330 = sand.u32 %s27, 1
        %s331 = scalar_lea.sflag [#allocation10], %s330
        %s332 = sand.u32 %s84, 1
        %s333 = smul.addr %s332, 8
        %s334 = scalar_lea.vmem [#allocation9], %s333
        // Predicated region
        $region49: #{tpu_custom_call.1} parent=43 // pred_check
          %p335 = pneg %p97
        $region50: #{tpu_custom_call.1} parent=43 // pred_check_branch
          %337 = sbr.rel (%p335) target = $region52
        $region51: #{tpu_custom_call.1} parent=43 // pred_region
          %339 = dma.done %s331, 128
        $region52: #{tpu_custom_call.1} parent=43 // pred_fallthru
          _
        // Predicated region
        $region53: #{tpu_custom_call.1} parent=43 // pred_check
          %p340 = pneg %p118
        $region54: #{tpu_custom_call.1} parent=43 // pred_check_branch
          %342 = sbr.rel (%p340) target = $region56
        $region55: #{tpu_custom_call.1} parent=43 // pred_region
          %344 = dma.done [#allocation10], 512
        $region56: #{tpu_custom_call.1} parent=43 // pred_fallthru
          _
        // Predicated region
        $region57: #{tpu_custom_call.1} parent=43 // pred_check
          %p345 = pneg %p139
        $region58: #{tpu_custom_call.1} parent=43 // pred_check_branch
          %347 = sbr.rel (%p345) target = $region60
        $region59: #{tpu_custom_call.1} parent=43 // pred_region
          %349 = dma.done [#allocation13], 512
        $region60: #{tpu_custom_call.1} parent=43 // pred_fallthru
          _
        // Predicated region
        $region61: #{tpu_custom_call.1} parent=43 // pred_check
          %p350 = pneg %p160
        $region62: #{tpu_custom_call.1} parent=43 // pred_check_branch
          %352 = sbr.rel (%p350) target = $region64
        $region63: #{tpu_custom_call.1} parent=43 // pred_region
          %354 = dma.done [#allocation13], 512
        $region64: #{tpu_custom_call.1} parent=43 // pred_fallthru
          _
        %s355 = sand.u32 %s56, 1
        %s356 = scalar_lea.sflag [#allocation7], %s355
        %s357 = sand.u32 %s56, 1
        %s358 = smul.addr %s357, 8
        %s359 = scalar_lea.vmem [#allocation6], %s358
        %p360 = pneg %p69
        %p361 = pneg %p66
        %s362 = sand.u32 %s27, 1
        %s363 = scalar_lea.sflag [#allocation10], %s362
        %s364 = sand.u32 %s84, 1
        %s365 = smul.addr %s364, 8
        %s366 = scalar_lea.vmem [#allocation9], %s365
        %p367 = pneg %p97
        %p368 = pneg %p94
        %p369 = pneg %p118
        %p370 = pneg %p115
        %p371 = pneg %p139
        %p372 = pneg %p136
        %p373 = pneg %p160
        %p374 = pneg %p157
        %p375 = pneg %p181
        %p376 = pneg %p178
        %p377 = pneg %p209
        %p378 = pneg %p206
        %s379 = sand.u32 %s196, 1
        %s380 = scalar_lea.sflag [#allocation8], %s379
        %s381 = sand.u32 %s196, 1
        %s382 = smul.addr %s381, 8
        %s383 = scalar_lea.vmem [#allocation15], %s382
        %p384 = scmp.eq.s32.totalorder %s34, 0
        // Predicated region
        $region65: #{tpu_custom_call.1} parent=43 // pred_check
          %p385 = pneg %p384
        $region66: #{tpu_custom_call.1} parent=43 // pred_check_branch
          %387 = sbr.rel (%p385) target = $region68
        $region67: #{tpu_custom_call.1} parent=43 // pred_region
          %v388 = vld [vmem:[%s324] sm:$0xff]
          %v389 = vld [vmem:[#allocation11] sm:$0xff]
          %v390 = vld [vmem:[#allocation11 + $0x8] sm:$0xff]
          %v391 = vld [vmem:[#allocation11 + $0x10] sm:$0xff]
          %v392 = vld [vmem:[#allocation11 + $0x18] sm:$0xff]
          %vm393 = vcmask 261120
          %v395 = vsel %vm393, %v388, 0
          %397 = vmatpush.msra.mxu0 0.0
          %398 = vmatpush.msra.mxu0 0.0
          %399 = vmatpush.msra.mxu0 0.0
          %400 = vmatpush.msra.mxu0 0.0
          %401 = vmatpush.msra.mxu0 0.0
          %402 = vmatpush.msra.mxu0 0.0
          %403 = vmatpush.msra.mxu0 0.0
          %404 = vmatpush.msra.mxu0 0.0
          %405 = vmatpush.msra.mxu0 0.0
          %406 = vmatpush.msra.mxu0 0.0
          %407 = vmatpush.msra.mxu0 0.0
          %408 = vmatpush.msra.mxu0 0.0
          %409 = vmatpush.msra.mxu0 %v392
          %410 = vmatpush.msra.mxu0 %v391
          %411 = vmatpush.msra.mxu0 %v390
          %412 = vmatpush.msra.mxu0 %v389
          %413 = vmatmul.f32.gmra.mxu0 %v395
          %v414 = vpop.f32.mrf.mxu0
          %v415 = vadd.f32 0.0, %v414
          %416 = vdwg.mxu0
          %417 = vst.msk [vmem:[#allocation2] sm:$0xff] %vm393, %v415
          %vm418 = vcmask 7168
          %419 = vst.msk [vmem:[#allocation4] sm:$0xff] %vm418, -inf
          %420 = vst.msk [vmem:[#allocation4 + $0x8] sm:$0xff] %vm418, -inf
          %421 = vst.msk [vmem:[#allocation4 + $0x10] sm:$0xff] %vm418, -inf
          %422 = vst.msk [vmem:[#allocation4 + $0x18] sm:$0xff] %vm418, -inf
          %423 = vst.msk [vmem:[#allocation5] sm:$0xff] %vm418, 0.0
          %424 = vst.msk [vmem:[#allocation5 + $0x8] sm:$0xff] %vm418, 0.0
          %425 = vst.msk [vmem:[#allocation5 + $0x10] sm:$0xff] %vm418, 0.0
          %426 = vst.msk [vmem:[#allocation5 + $0x18] sm:$0xff] %vm418, 0.0
          %427 = vst.msk [vmem:[#allocation3] sm:$0xff] %vm393, 0.0
        $region68: #{tpu_custom_call.1} parent=43 // pred_fallthru
          _
        %v428 = vld [vmem:[%s334] sm:$0xff]
        %v429 = vld [vmem:[#allocation12] sm:$0xff]
        %v430 = vld [vmem:[#allocation12 + $0x8] sm:$0xff]
        %v431 = vld [vmem:[#allocation12 + $0x10] sm:$0xff]
        %v432 = vld [vmem:[#allocation12 + $0x18] sm:$0xff]
        %vm433 = vcmask 261120
        %v435 = vsel %vm433, %v428, 0
        %437 = vmatpush.msra.mxu0 0.0
        %438 = vmatpush.msra.mxu0 0.0
        %439 = vmatpush.msra.mxu0 0.0
        %440 = vmatpush.msra.mxu0 0.0
        %441 = vmatpush.msra.mxu0 0.0
        %442 = vmatpush.msra.mxu0 0.0
        %443 = vmatpush.msra.mxu0 0.0
        %444 = vmatpush.msra.mxu0 0.0
        %445 = vmatpush.msra.mxu0 0.0
        %446 = vmatpush.msra.mxu0 0.0
        %447 = vmatpush.msra.mxu0 0.0
        %448 = vmatpush.msra.mxu0 0.0
        %449 = vmatpush.msra.mxu0 %v432
        %450 = vmatpush.msra.mxu0 %v431
        %451 = vmatpush.msra.mxu0 %v430
        %452 = vmatpush.msra.mxu0 %v429
        %453 = vmatmul.f32.gmra.mxu0 %v435
        %v454 = vpop.f32.mrf.mxu0
        %v455 = vadd.f32 0.0, %v454
        %456 = vdwg.mxu0
        %v457 = vld [vmem:[#allocation2] sm:$0xff]
        %vm458 = vcmask 64512
        %v460 = vsel %vm458, %v457, 0
        %v463 = vsel %vm458, %v455, 0
        %465 = vmatpush.xpose.msra.mxu0 0.0
        %466 = vmatpush.xpose.msra.mxu0 0.0
        %467 = vmatpush.xpose.msra.mxu0 0.0
        %468 = vmatpush.xpose.msra.mxu0 0.0
        %469 = vmatpush.xpose.msra.mxu0 0.0
        %470 = vmatpush.xpose.msra.mxu0 0.0
        %471 = vmatpush.xpose.msra.mxu0 0.0
        %472 = vmatpush.xpose.msra.mxu0 0.0
        %473 = vmatpush.xpose.msra.mxu0 0.0
        %474 = vmatpush.xpose.msra.mxu0 0.0
        %475 = vmatpush.xpose.msra.mxu0 0.0
        %476 = vmatpush.xpose.msra.mxu0 0.0
        %477 = vmatpush.xpose.msra.mxu0 0.0
        %478 = vmatpush.xpose.msra.mxu0 0.0
        %479 = vmatpush.xpose.msra.mxu0 0.0
        %480 = vmatpush.xpose.msra.mxu0 %v463
        %481 = vmatmul.f32.gmra.mxu0 %v460
        %v482 = vpop.f32.mrf.mxu0
        %v483 = vadd.f32 0.0, %v482
        %484 = vdwg.mxu0
        %v485 = vld [vmem:[#allocation4] sm:$0xff]
        %v486 = vsel %vm458, %v483, -inf
        %487 = vmax.xlane.f32.xlu0 %v486
        %v488 = vpop.xlane.xlu0 %487
        %v489 = vmax.f32 %v485, %v488
        %v490 = vsub.f32 %v485, %v489
        %v491 = vmul.f32 %v490, 1.442695
        %v492 = vpow.pop %v491
        %494 = vset.pattern.permute.xlu0 0
        %495 = vperm.xlu0 %494, %v489
        %v496 = vpop.permute.xlu0 %495
        %v498 = vsub.f32 %v483, %v496
        %v499 = vmul.f32 %v498, 1.442695
        %v500 = vpow.pop %v499
        %v501 = vld [vmem:[#allocation5] sm:$0xff]
        %v502 = vmul.f32 %v492, %v501
        %v503 = vsel %vm458, %v500, 0.0
        %504 = vadd.xlane.f32.xlu0 %v503
        %v505 = vpop.xlane.xlu0 %504
        %v506 = vadd.f32 %v502, %v505
        %vm507 = vcmask 7168
        %508 = vst.msk [vmem:[#allocation5] sm:$0xff] %vm507, %v506
        %509 = vst.msk [vmem:[#allocation4] sm:$0xff] %vm507, %v489
        %510 = vrot.lane.b32.xlu0 %v455, 96
        %v511 = vpop.permute.xlu0 %510
        %v514 = vsel %vm458, %v500, 0
        %516 = vmatpush.msra.mxu0 0.0
        %517 = vmatpush.msra.mxu0 0.0
        %518 = vmatpush.msra.mxu0 0.0
        %519 = vmatpush.msra.mxu0 0.0
        %520 = vmatpush.msra.mxu0 0.0
        %521 = vmatpush.msra.mxu0 0.0
        %522 = vmatpush.msra.mxu0 0.0
        %523 = vmatpush.msra.mxu0 0.0
        %524 = vmatpush.msra.mxu0 0.0
        %525 = vmatpush.msra.mxu0 0.0
        %526 = vmatpush.msra.mxu0 0.0
        %527 = vmatpush.msra.mxu0 0.0
        %528 = vmatpush.msra.mxu0 0.0
        %529 = vmatpush.msra.mxu0 0.0
        %530 = vmatpush.msra.mxu0 0.0
        %531 = vmatpush.msra.mxu0 %v511
        %532 = vmatmul.f32.gmra.mxu0 %v514
        %v533 = vpop.f32.mrf.mxu0
        %v534 = vadd.f32 0.0, %v533
        %535 = vdwg.mxu0
        %v536 = vld [vmem:[#allocation3] sm:$0xff]
        %538 = vset.pattern.permute.xlu0 0
        %539 = vperm.xlu0 %538, %v492
        %v540 = vpop.permute.xlu0 %539
        %v542 = vmul.f32 %v540, %v536
        %v543 = vadd.f32 %v542, %v534
        %544 = vst.msk [vmem:[#allocation3] sm:$0xff] %vm458, %v543
        %545 = vrot.lane.b32.xlu0 %v457, 120
        %v546 = vpop.permute.xlu0 %545
        %547 = vrot.lane.b32.xlu0 %v455, 120
        %v548 = vpop.permute.xlu0 %547
        %v549 = vsel %vm458, %v546, 0
        %v551 = vsel %vm458, %v548, 0
        %553 = vmatpush.xpose.msra.mxu0 0.0
        %554 = vmatpush.xpose.msra.mxu0 0.0
        %555 = vmatpush.xpose.msra.mxu0 0.0
        %556 = vmatpush.xpose.msra.mxu0 0.0
        %557 = vmatpush.xpose.msra.mxu0 0.0
        %558 = vmatpush.xpose.msra.mxu0 0.0
        %559 = vmatpush.xpose.msra.mxu0 0.0
        %560 = vmatpush.xpose.msra.mxu0 0.0
        %561 = vmatpush.xpose.msra.mxu0 0.0
        %562 = vmatpush.xpose.msra.mxu0 0.0
        %563 = vmatpush.xpose.msra.mxu0 0.0
        %564 = vmatpush.xpose.msra.mxu0 0.0
        %565 = vmatpush.xpose.msra.mxu0 0.0
        %566 = vmatpush.xpose.msra.mxu0 0.0
        %567 = vmatpush.xpose.msra.mxu0 0.0
        %568 = vmatpush.xpose.msra.mxu0 %v551
        %569 = vmatmul.f32.gmra.mxu0 %v549
        %v570 = vpop.f32.mrf.mxu0
        %v571 = vadd.f32 0.0, %v570
        %572 = vdwg.mxu0
        %s573 = scalar_lea.vmem [#allocation4], 8
        %v574 = vld [vmem:[%s573] sm:$0xff]
        %v575 = vsel %vm458, %v571, -inf
        %576 = vmax.xlane.f32.xlu0 %v575
        %v577 = vpop.xlane.xlu0 %576
        %v578 = vmax.f32 %v574, %v577
        %v579 = vsub.f32 %v574, %v578
        %v580 = vmul.f32 %v579, 1.442695
        %v581 = vpow.pop %v580
        %583 = vset.pattern.permute.xlu0 0
        %584 = vperm.xlu0 %583, %v578
        %v585 = vpop.permute.xlu0 %584
        %v587 = vsub.f32 %v571, %v585
        %v588 = vmul.f32 %v587, 1.442695
        %v589 = vpow.pop %v588
        %s590 = scalar_lea.vmem [#allocation5], 8
        %v591 = vld [vmem:[%s590] sm:$0xff]
        %v592 = vmul.f32 %v581, %v591
        %v593 = vsel %vm458, %v589, 0.0
        %594 = vadd.xlane.f32.xlu0 %v593
        %v595 = vpop.xlane.xlu0 %594
        %v596 = vadd.f32 %v592, %v595
        %597 = vst.msk [vmem:[%s590] sm:$0xff] %vm507, %v596
        %598 = vst.msk [vmem:[%s573] sm:$0xff] %vm507, %v578
        %599 = vrot.lane.b32.xlu0 %v455, 88
        %v600 = vpop.permute.xlu0 %599
        %v603 = vsel %vm458, %v589, 0
        %605 = vmatpush.msra.mxu0 0.0
        %606 = vmatpush.msra.mxu0 0.0
        %607 = vmatpush.msra.mxu0 0.0
        %608 = vmatpush.msra.mxu0 0.0
        %609 = vmatpush.msra.mxu0 0.0
        %610 = vmatpush.msra.mxu0 0.0
        %611 = vmatpush.msra.mxu0 0.0
        %612 = vmatpush.msra.mxu0 0.0
        %613 = vmatpush.msra.mxu0 0.0
        %614 = vmatpush.msra.mxu0 0.0
        %615 = vmatpush.msra.mxu0 0.0
        %616 = vmatpush.msra.mxu0 0.0
        %617 = vmatpush.msra.mxu0 0.0
        %618 = vmatpush.msra.mxu0 0.0
        %619 = vmatpush.msra.mxu0 0.0
        %620 = vmatpush.msra.mxu0 %v600
        %621 = vmatmul.f32.gmra.mxu0 %v603
        %v622 = vpop.f32.mrf.mxu0
        %v623 = vadd.f32 0.0, %v622
        %624 = vdwg.mxu0
        %v625 = vld [vmem:[#allocation3] sm:$0xff]
        %627 = vset.pattern.permute.xlu0 0
        %628 = vperm.xlu0 %627, %v581
        %v629 = vpop.permute.xlu0 %628
        %v631 = vmul.f32 %v629, %v625
        %633 = vrot.lane.b32.xlu0 %v623, 8
        %v634 = vpop.permute.xlu0 %633
        %v636 = vadd.f32 %v631, %v634
        %vm637 = vcmask 130112
        %638 = vst.msk [vmem:[#allocation3] sm:$0xff] %vm637, %v636
        %639 = vrot.lane.b32.xlu0 %v457, 112
        %v640 = vpop.permute.xlu0 %639
        %641 = vrot.lane.b32.xlu0 %v455, 112
        %v642 = vpop.permute.xlu0 %641
        %v643 = vsel %vm458, %v640, 0
        %v645 = vsel %vm458, %v642, 0
        %647 = vmatpush.xpose.msra.mxu0 0.0
        %648 = vmatpush.xpose.msra.mxu0 0.0
        %649 = vmatpush.xpose.msra.mxu0 0.0
        %650 = vmatpush.xpose.msra.mxu0 0.0
        %651 = vmatpush.xpose.msra.mxu0 0.0
        %652 = vmatpush.xpose.msra.mxu0 0.0
        %653 = vmatpush.xpose.msra.mxu0 0.0
        %654 = vmatpush.xpose.msra.mxu0 0.0
        %655 = vmatpush.xpose.msra.mxu0 0.0
        %656 = vmatpush.xpose.msra.mxu0 0.0
        %657 = vmatpush.xpose.msra.mxu0 0.0
        %658 = vmatpush.xpose.msra.mxu0 0.0
        %659 = vmatpush.xpose.msra.mxu0 0.0
        %660 = vmatpush.xpose.msra.mxu0 0.0
        %661 = vmatpush.xpose.msra.mxu0 0.0
        %662 = vmatpush.xpose.msra.mxu0 %v645
        %663 = vmatmul.f32.gmra.mxu0 %v643
        %v664 = vpop.f32.mrf.mxu0
        %v665 = vadd.f32 0.0, %v664
        %666 = vdwg.mxu0
        %s667 = scalar_lea.vmem [#allocation4], 16
        %v668 = vld [vmem:[%s667] sm:$0xff]
        %v669 = vsel %vm458, %v665, -inf
        %670 = vmax.xlane.f32.xlu0 %v669
        %v671 = vpop.xlane.xlu0 %670
        %v672 = vmax.f32 %v668, %v671
        %v673 = vsub.f32 %v668, %v672
        %v674 = vmul.f32 %v673, 1.442695
        %v675 = vpow.pop %v674
        %677 = vset.pattern.permute.xlu0 0
        %678 = vperm.xlu0 %677, %v672
        %v679 = vpop.permute.xlu0 %678
        %v681 = vsub.f32 %v665, %v679
        %v682 = vmul.f32 %v681, 1.442695
        %v683 = vpow.pop %v682
        %s684 = scalar_lea.vmem [#allocation5], 16
        %v685 = vld [vmem:[%s684] sm:$0xff]
        %v686 = vmul.f32 %v675, %v685
        %v687 = vsel %vm458, %v683, 0.0
        %688 = vadd.xlane.f32.xlu0 %v687
        %v689 = vpop.xlane.xlu0 %688
        %v690 = vadd.f32 %v686, %v689
        %691 = vst.msk [vmem:[%s684] sm:$0xff] %vm507, %v690
        %692 = vst.msk [vmem:[%s667] sm:$0xff] %vm507, %v672
        %693 = vrot.lane.b32.xlu0 %v455, 80
        %v694 = vpop.permute.xlu0 %693
        %v697 = vsel %vm458, %v683, 0
        %699 = vmatpush.msra.mxu0 0.0
        %700 = vmatpush.msra.mxu0 0.0
        %701 = vmatpush.msra.mxu0 0.0
        %702 = vmatpush.msra.mxu0 0.0
        %703 = vmatpush.msra.mxu0 0.0
        %704 = vmatpush.msra.mxu0 0.0
        %705 = vmatpush.msra.mxu0 0.0
        %706 = vmatpush.msra.mxu0 0.0
        %707 = vmatpush.msra.mxu0 0.0
        %708 = vmatpush.msra.mxu0 0.0
        %709 = vmatpush.msra.mxu0 0.0
        %710 = vmatpush.msra.mxu0 0.0
        %711 = vmatpush.msra.mxu0 0.0
        %712 = vmatpush.msra.mxu0 0.0
        %713 = vmatpush.msra.mxu0 0.0
        %714 = vmatpush.msra.mxu0 %v694
        %715 = vmatmul.f32.gmra.mxu0 %v697
        %v716 = vpop.f32.mrf.mxu0
        %v717 = vadd.f32 0.0, %v716
        %718 = vdwg.mxu0
        %v719 = vld [vmem:[#allocation3] sm:$0xff]
        %721 = vset.pattern.permute.xlu0 0
        %722 = vperm.xlu0 %721, %v675
        %v723 = vpop.permute.xlu0 %722
        %v725 = vmul.f32 %v723, %v719
        %727 = vrot.lane.b32.xlu0 %v717, 16
        %v728 = vpop.permute.xlu0 %727
        %v730 = vadd.f32 %v725, %v728
        %vm731 = vcmask 195712
        %732 = vst.msk [vmem:[#allocation3] sm:$0xff] %vm731, %v730
        %733 = vrot.lane.b32.xlu0 %v457, 104
        %v734 = vpop.permute.xlu0 %733
        %735 = vrot.lane.b32.xlu0 %v455, 104
        %v736 = vpop.permute.xlu0 %735
        %v737 = vsel %vm458, %v734, 0
        %v739 = vsel %vm458, %v736, 0
        %741 = vmatpush.xpose.msra.mxu0 0.0
        %742 = vmatpush.xpose.msra.mxu0 0.0
        %743 = vmatpush.xpose.msra.mxu0 0.0
        %744 = vmatpush.xpose.msra.mxu0 0.0
        %745 = vmatpush.xpose.msra.mxu0 0.0
        %746 = vmatpush.xpose.msra.mxu0 0.0
        %747 = vmatpush.xpose.msra.mxu0 0.0
        %748 = vmatpush.xpose.msra.mxu0 0.0
        %749 = vmatpush.xpose.msra.mxu0 0.0
        %750 = vmatpush.xpose.msra.mxu0 0.0
        %751 = vmatpush.xpose.msra.mxu0 0.0
        %752 = vmatpush.xpose.msra.mxu0 0.0
        %753 = vmatpush.xpose.msra.mxu0 0.0
        %754 = vmatpush.xpose.msra.mxu0 0.0
        %755 = vmatpush.xpose.msra.mxu0 0.0
        %756 = vmatpush.xpose.msra.mxu0 %v739
        %757 = vmatmul.f32.gmra.mxu0 %v737
        %v758 = vpop.f32.mrf.mxu0
        %v759 = vadd.f32 0.0, %v758
        %760 = vdwg.mxu0
        %s761 = scalar_lea.vmem [#allocation4], 24
        %v762 = vld [vmem:[%s761] sm:$0xff]
        %v763 = vsel %vm458, %v759, -inf
        %764 = vmax.xlane.f32.xlu0 %v763
        %v765 = vpop.xlane.xlu0 %764
        %v766 = vmax.f32 %v762, %v765
        %v767 = vsub.f32 %v762, %v766
        %v768 = vmul.f32 %v767, 1.442695
        %v769 = vpow.pop %v768
        %771 = vset.pattern.permute.xlu0 0
        %772 = vperm.xlu0 %771, %v766
        %v773 = vpop.permute.xlu0 %772
        %v775 = vsub.f32 %v759, %v773
        %v776 = vmul.f32 %v775, 1.442695
        %v777 = vpow.pop %v776
        %s778 = scalar_lea.vmem [#allocation5], 24
        %v779 = vld [vmem:[%s778] sm:$0xff]
        %v780 = vmul.f32 %v769, %v779
        %v781 = vsel %vm458, %v777, 0.0
        %782 = vadd.xlane.f32.xlu0 %v781
        %v783 = vpop.xlane.xlu0 %782
        %v784 = vadd.f32 %v780, %v783
        %785 = vst.msk [vmem:[%s778] sm:$0xff] %vm507, %v784
        %786 = vst.msk [vmem:[%s761] sm:$0xff] %vm507, %v766
        %787 = vrot.lane.b32.xlu0 %v455, 72
        %v788 = vpop.permute.xlu0 %787
        %v791 = vsel %vm458, %v777, 0
        %793 = vmatpush.msra.mxu0 0.0
        %794 = vmatpush.msra.mxu0 0.0
        %795 = vmatpush.msra.mxu0 0.0
        %796 = vmatpush.msra.mxu0 0.0
        %797 = vmatpush.msra.mxu0 0.0
        %798 = vmatpush.msra.mxu0 0.0
        %799 = vmatpush.msra.mxu0 0.0
        %800 = vmatpush.msra.mxu0 0.0
        %801 = vmatpush.msra.mxu0 0.0
        %802 = vmatpush.msra.mxu0 0.0
        %803 = vmatpush.msra.mxu0 0.0
        %804 = vmatpush.msra.mxu0 0.0
        %805 = vmatpush.msra.mxu0 0.0
        %806 = vmatpush.msra.mxu0 0.0
        %807 = vmatpush.msra.mxu0 0.0
        %808 = vmatpush.msra.mxu0 %v788
        %809 = vmatmul.f32.gmra.mxu0 %v791
        %v810 = vpop.f32.mrf.mxu0
        %v811 = vadd.f32 0.0, %v810
        %812 = vdwg.mxu0
        %v813 = vld [vmem:[#allocation3] sm:$0xff]
        %815 = vset.pattern.permute.xlu0 0
        %816 = vperm.xlu0 %815, %v769
        %v817 = vpop.permute.xlu0 %816
        %v819 = vmul.f32 %v817, %v813
        %821 = vrot.lane.b32.xlu0 %v811, 24
        %v822 = vpop.permute.xlu0 %821
        %v824 = vadd.f32 %v819, %v822
        %vm825 = vcmask 261312
        %826 = vst.msk [vmem:[#allocation3] sm:$0xff] %vm825, %v824
        // Predicated region
        $region69: #{tpu_custom_call.1} parent=43 // pred_check
          %p827 = pneg %p384
        $region70: #{tpu_custom_call.1} parent=43 // pred_check_branch
          %829 = sbr.rel (%p827) target = $region72
        $region71: #{tpu_custom_call.1} parent=43 // pred_region
          %v830 = vld [vmem:[#allocation5] sm:$0xff]
          %v831 = vrcp.pop %v830
          %v832 = vmul.f32 %v830, %v831
          %v833 = vsub.f32 2.0, %v832
          %v834 = vmul.f32 %v831, %v833
          %v835 = vld [vmem:[#allocation3] sm:$0xff]
          %837 = vset.pattern.permute.xlu0 0
          %838 = vperm.xlu0 %837, %v834
          %v839 = vpop.permute.xlu0 %838
          %v841 = vmul.f32 %v835, %v839
          %842 = vst.msk [vmem:[#allocation3] sm:$0xff] %vm458, %v841
          %v843 = vld [vmem:[%s590] sm:$0xff]
          %v844 = vrcp.pop %v843
          %v845 = vmul.f32 %v843, %v844
          %v846 = vsub.f32 2.0, %v845
          %v847 = vmul.f32 %v844, %v846
          %v848 = vld [vmem:[#allocation3] sm:$0xff]
          %850 = vset.pattern.permute.xlu0 0
          %851 = vperm.xlu0 %850, %v847
          %v852 = vpop.permute.xlu0 %851
          %v854 = vmul.f32 %v848, %v852
          %855 = vst.msk [vmem:[#allocation3] sm:$0xff] %vm637, %v854
          %v856 = vld [vmem:[%s684] sm:$0xff]
          %v857 = vrcp.pop %v856
          %v858 = vmul.f32 %v856, %v857
          %v859 = vsub.f32 2.0, %v858
          %v860 = vmul.f32 %v857, %v859
          %v861 = vld [vmem:[#allocation3] sm:$0xff]
          %863 = vset.pattern.permute.xlu0 0
          %864 = vperm.xlu0 %863, %v860
          %v865 = vpop.permute.xlu0 %864
          %v867 = vmul.f32 %v861, %v865
          %868 = vst.msk [vmem:[#allocation3] sm:$0xff] %vm731, %v867
          %v869 = vld [vmem:[%s778] sm:$0xff]
          %v870 = vrcp.pop %v869
          %v871 = vmul.f32 %v869, %v870
          %v872 = vsub.f32 2.0, %v871
          %v873 = vmul.f32 %v870, %v872
          %v874 = vld [vmem:[#allocation3] sm:$0xff]
          %876 = vset.pattern.permute.xlu0 0
          %877 = vperm.xlu0 %876, %v873
          %v878 = vpop.permute.xlu0 %877
          %v880 = vmul.f32 %v874, %v878
          %881 = vst.msk [vmem:[#allocation3] sm:$0xff] %vm825, %v880
          %v882 = vld [vmem:[#allocation3] sm:$0xff]
          %v883 = vld [vmem:[#allocation14] sm:$0xff]
          %v884 = vld [vmem:[#allocation14 + $0x8] sm:$0xff]
          %v885 = vld [vmem:[#allocation14 + $0x10] sm:$0xff]
          %v886 = vld [vmem:[#allocation14 + $0x18] sm:$0xff]
          %v887 = vld [vmem:[%s5] sm:$0x1]
          %v889 = vperm.slane %v887, 0
          %v892 = vsel %vm433, %v882, 0
          %894 = vmatpush.msra.mxu0 0.0
          %895 = vmatpush.msra.mxu0 0.0
          %896 = vmatpush.msra.mxu0 0.0
          %897 = vmatpush.msra.mxu0 0.0
          %898 = vmatpush.msra.mxu0 0.0
          %899 = vmatpush.msra.mxu0 0.0
          %900 = vmatpush.msra.mxu0 0.0
          %901 = vmatpush.msra.mxu0 0.0
          %902 = vmatpush.msra.mxu0 0.0
          %903 = vmatpush.msra.mxu0 0.0
          %904 = vmatpush.msra.mxu0 0.0
          %905 = vmatpush.msra.mxu0 0.0
          %906 = vmatpush.msra.mxu0 %v886
          %907 = vmatpush.msra.mxu0 %v885
          %908 = vmatpush.msra.mxu0 %v884
          %909 = vmatpush.msra.mxu0 %v883
          %910 = vmatmul.f32.gmra.mxu0 %v892
          %v911 = vpop.f32.mrf.mxu0
          %v912 = vadd.f32 %v889, %v911
          %913 = vdwg.mxu0
          %914 = vst.msk [vmem:[%s383] sm:$0xff] %vm433, %v912
        $region72: #{tpu_custom_call.1} parent=43 // pred_fallthru
          _
        %s915 = sand.u32 %s196, 1
        %s916 = scalar_lea.sflag [#allocation8], %s915
        %s917 = sand.u32 %s196, 1
        %s918 = smul.addr %s917, 8
        %s919 = scalar_lea.vmem [#allocation15], %s918
        // Predicated region
        $region73: #{tpu_custom_call.1} parent=43 // pred_check
          %p920 = pneg %p206
        $region74: #{tpu_custom_call.1} parent=43 // pred_check_branch
          %922 = sbr.rel (%p920) target = $region76
        $region75: #{tpu_custom_call.1} parent=43 // pred_region
          %924 = vsyncadd %s916, 0
          %s925 = sadd.s32 %s33, %s32
          %s926 = smul.addr %s925, 8
          %s927 = scalar_lea.hbm %s6, %s926
          %s929 = sshll.u32 %s919, 4
          %s930 = int_to_ptr.vmem [resolvable:$true] %s929
          %s931 = sshll.u32 %s927, 4
          %s932 = int_to_ptr.hbm [resolvable:$true] %s931
          %934 = dma.vmem_to_hbm [thread:$0]  %s930, 128, %s932, %s916
        $region76: #{tpu_custom_call.1} parent=43 // pred_fallthru
          _
      $region44: #{tpu_custom_call.1} parent=5 // pred_fallthru
        _
      %p935 = scmp.le.s32.totalorder 2, %s22
      // Predicated region
      $region77: #{tpu_custom_call.1} parent=5 // pred_check
        %p936 = pneg %p935
      $region78: #{tpu_custom_call.1} parent=5 // pred_check_branch
        %938 = sbr.rel (%p936) target = $region80
      $region79: #{tpu_custom_call.1} parent=5 // pred_region
        %s939 = ssub.s32 %s22, 2
        // Predicated region
        $region81: #{tpu_custom_call.1} parent=79 // pred_check
          %p940 = pneg %p212
        $region82: #{tpu_custom_call.1} parent=79 // pred_check_branch
          %942 = sbr.rel (%p940) target = $region84
        $region83: #{tpu_custom_call.1} parent=79 // pred_region
          %s943 = sand.u32 %s197, 1
          %s944 = scalar_lea.sflag [#allocation8], %s943
          %s945 = sand.u32 %s197, 1
          %s946 = smul.addr %s945, 8
          %s947 = scalar_lea.vmem [#allocation15], %s946
          %949 = dma.done %s944, 128
        $region84: #{tpu_custom_call.1} parent=79 // pred_fallthru
          _
      $region80: #{tpu_custom_call.1} parent=5 // pred_fallthru
        _
    $region6: #{tpu_custom_call.1} parent=1 // loop_footer
      %s26 = sadd.s32 1, %s22
    $region7: #{tpu_custom_call.1} parent=1 // loop_footer_branch
      %21 = sbr.rel target = $region3
    $region8: #{tpu_custom_call.1} parent=1 // loop_exit
      _
    %950 = vsyncpa [#allocation7], 1
    %s951 = scalar_lea.sflag [#allocation7], 1
    %952 = vsyncpa %s951, 1
    %953 = vsyncpa [#allocation10], 1
    %s954 = scalar_lea.sflag [#allocation10], 1
    %955 = vsyncpa %s954, 1
    %956 = vsyncpa [#allocation13], 1
    %957 = vsyncpa [#allocation8], 1
    %s958 = scalar_lea.sflag [#allocation8], 1
    %959 = vsyncpa %s958, 1

// kernel: tpu_custom_call.1
$region0: #{tpu_custom_call.1}
  #allocation0 [shape = 'u32[]', space=smem, size = 0x4, offset = 0x4, fixed_abs, tag = 'smem constant byte address 0x4 - core index']
  #allocation1 [shape = 'u32[72,128]{1,0:T(1,128)}', space=vmem, size = 0x9000, scoped, tag = 'internal scratch']
  #allocation2 [shape = 'f32[8,32]{1,0:T(8,128)}', space=vmem, size = 0x1000, scoped, tag = 'scratch operand']
  #allocation3 [shape = 'f32[8,32]{1,0:T(8,128)}', space=vmem, size = 0x1000, scoped, tag = 'scratch operand']
  #allocation4 [shape = 'f32[4,8,1]{2,1,0:T(8,128)}', space=vmem, size = 0x4000, scoped, tag = 'scratch operand']
  #allocation5 [shape = 'f32[4,8,1]{2,1,0:T(8,128)}', space=vmem, size = 0x4000, scoped, tag = 'scratch operand']
  %s0 = inlined_call_operand.hbm [shape: f32[2,8,32], index: 0, kind: input, shape index: {}]
  %s1 = inlined_call_operand.hbm [shape: f32[2,8,32], index: 1, kind: input, shape index: {}]
  %s2 = inlined_call_operand.hbm [shape: f32[32,32], index: 2, kind: input, shape index: {}]
  %s3 = inlined_call_operand.hbm [shape: f32[32,64], index: 3, kind: input, shape index: {}]
  %s4 = inlined_call_operand.hbm [shape: f32[32,32], index: 4, kind: input, shape index: {}]
  %s5 = inlined_call_operand.vmem [shape: f32[1,32], index: 5, kind: input, shape index: {}]
  %s6 = inlined_call_operand.hbm [shape: f32[2,8,32], index: 6, kind: output, shape index: {}]
  %s7 = sld [smem:[#allocation0]]
  $region85: #{tpu_custom_call.1} parent=0
    _
  %s9 = ssub.s32 1, %s7
  %s10 = scalar_select 0, %s9, %s7
  $region1: #{tpu_custom_call.1} parent=0
    #allocation6 [shape = 'u8[8192]{0}', space=vmem, size = 0x2000, scoped, tag = 'input window, operand 0']
    #allocation7 [shape = 's32[2]{0}', space=sflag, size = 0x8, scoped, tag = 'scoped memory for tpu_custom_call.1']
    #allocation8 [shape = 's32[2]{0}', space=sflag, size = 0x8, scoped, tag = 'scoped memory for tpu_custom_call.1']
    #allocation9 [shape = 'u8[8192]{0}', space=vmem, size = 0x2000, scoped, tag = 'input window, operand 1']
    #allocation10 [shape = 's32[2]{0}', space=sflag, size = 0x8, scoped, tag = 'scoped memory for tpu_custom_call.1']
    #allocation11 [shape = 'u8[16384]{0}', space=vmem, size = 0x4000, scoped, tag = 'input window, operand 2, single buffered']
    #allocation12 [shape = 'u8[16384]{0}', space=vmem, size = 0x4000, scoped, tag = 'input window, operand 3, single buffered']
    #allocation13 [shape = 's32[1]{0}', space=sflag, size = 0x4, scoped, tag = 'scoped memory for tpu_custom_call.1']
    #allocation14 [shape = 'u8[16384]{0}', space=vmem, size = 0x4000, scoped, tag = 'input window, operand 4, single buffered']
    #allocation15 [shape = 'u8[8192]{0}', space=vmem, size = 0x2000, scoped, tag = 'output window, operand 0']
    %11 = vsyncpa [#allocation7], 0
    %s12 = scalar_lea.sflag [#allocation7], 1
    %13 = vsyncpa %s12, 0
    %14 = vsyncpa [#allocation10], 0
    %s15 = scalar_lea.sflag [#allocation10], 1
    %16 = vsyncpa %s15, 0
    %17 = vsyncpa [#allocation13], 0
    %18 = vsyncpa [#allocation8], 0
    %s19 = scalar_lea.sflag [#allocation8], 1
    %20 = vsyncpa %s19, 0
    loop: start=0, step=1, limit=4
    $region2: #{tpu_custom_call.1} parent=1 // loop_pre_header
      _
    $region3: #{tpu_custom_call.1} parent=1 // loop_header
      %s22 = sphi 0, %s26
      %p23 = scmp.ge.s32.totalorder %s22, 4
      %s29 = sphi 0, %s48
      %s30 = sphi 0, %s44
      %s31 = sphi 0, %s40
      %s32 = sphi 0, %s29
      %s33 = sphi 0, %s30
      %s34 = sphi 0, %s31
      %s35 = sphi 0, %s32
      %s36 = sphi 0, %s33
      %s37 = sphi 0, %s34
      %s53 = sphi 0, %s55
      %s56 = sphi 0, %s53
      %s57 = sphi 0, %s56
      %s73 = sphi 0, %s57
      %s81 = sphi 0, %s83
      %s84 = sphi 0, %s81
      %s85 = sphi 0, %s84
      %s101 = sphi 0, %s85
      %s105 = sphi 0, %s105
      %s107 = sphi 0, %s105
      %s108 = sphi 0, %s107
      %s122 = sphi 0, %s108
      %s126 = sphi 0, %s126
      %s128 = sphi 0, %s126
      %s129 = sphi 0, %s128
      %s143 = sphi 0, %s129
      %s147 = sphi 0, %s147
      %s149 = sphi 0, %s147
      %s150 = sphi 0, %s149
      %s164 = sphi 0, %s150
      %s168 = sphi 0, %s168
      %s170 = sphi 0, %s168
      %s171 = sphi 0, %s170
      %s185 = sphi 0, %s171
      %s193 = sphi 0, %s195
      %s196 = sphi 0, %s193
      %s197 = sphi 0, %s196
      %s213 = sphi 0, %s197
    $region4: #{tpu_custom_call.1} parent=1 // loop_header_branch
      %25 = sbr.rel (%p23) target = $region8
    $region5: #{tpu_custom_call.1} parent=1 // loop_body
      %s27 = ssub.s32 %s22, 1
      %s28 = ssub.s32 %s22, 2
      %s38 = sadd.s32 1, %s31
      %p39 = scmp.ge.s32.totalorder %s38, 1
      %s40 = scalar_select %p39, 0, %s38
      %s41 = sadd.s32 1, %s30
      %s42 = scalar_select %p39, %s41, %s30
      %p43 = scmp.ge.s32.totalorder %s42, 1
      %s44 = scalar_select %p43, 0, %s42
      %s45 = sadd.s32 1, %s29
      %s46 = scalar_select %p43, %s45, %s29
      %p47 = scmp.ge.s32.totalorder %s46, 2
      %s48 = scalar_select %p47, 0, %s46
      %s49 = ssub.s32 %s29, %s48
      %s50 = ssub.s32 %s30, %s44
      %s51 = sor.u32 %s49, %s50
      %p52 = scmp.eq.s32.totalorder %s51, 0
      %s54 = sadd.s32 %s53, 1
      %s55 = scalar_select %p52, %s53, %s54
      %p58 = pneg %p52
      %p59 = scmp.eq.s32.totalorder %s22, 1
      %p60 = por %p58, %p59
      %p61 = scmp.ne.s32.totalorder %s53, %s56
      %p62 = scmp.eq.s32.totalorder %s22, 0
      %p63 = por %p61, %p62
      %p64 = scmp.ne.s32.totalorder %s53, %s56
      %p65 = scmp.eq.s32.totalorder %s27, 1
      %p66 = por %p64, %p65
      %p67 = scmp.ne.s32.totalorder %s56, %s57
      %p68 = scmp.eq.s32.totalorder %s27, 0
      %p69 = por %p67, %p68
      %p70 = scmp.ne.s32.totalorder %s56, %s57
      %p71 = scmp.eq.s32.totalorder %s28, 1
      %p72 = por %p70, %p71
      %p74 = scmp.ne.s32.totalorder %s57, %s73
      %p75 = scmp.eq.s32.totalorder %s28, 0
      %p76 = por %p74, %p75
      %s77 = ssub.s32 %s29, %s48
      %s78 = ssub.s32 %s31, %s40
      %s79 = sor.u32 %s77, %s78
      %p80 = scmp.eq.s32.totalorder %s79, 0
      %s82 = sadd.s32 %s81, 1
      %s83 = scalar_select %p80, %s81, %s82
      %p86 = pneg %p80
      %p87 = scmp.eq.s32.totalorder %s22, 1
      %p88 = por %p86, %p87
      %p89 = scmp.ne.s32.totalorder %s81, %s84
      %p90 = scmp.eq.s32.totalorder %s22, 0
      %p91 = por %p89, %p90
      %p92 = scmp.ne.s32.totalorder %s81, %s84
      %p93 = scmp.eq.s32.totalorder %s27, 1
      %p94 = por %p92, %p93
      %p95 = scmp.ne.s32.totalorder %s84, %s85
      %p96 = scmp.eq.s32.totalorder %s27, 0
      %p97 = por %p95, %p96
      %p98 = scmp.ne.s32.totalorder %s84, %s85
      %p99 = scmp.eq.s32.totalorder %s28, 1
      %p100 = por %p98, %p99
      %p102 = scmp.ne.s32.totalorder %s85, %s101
      %p103 = scmp.eq.s32.totalorder %s28, 0
      %p104 = por %p102, %p103
      %s106 = sadd.s32 %s105, 1
      %p109 = scmp.eq.s32.totalorder %s22, 1
      %p110 = scmp.ne.s32.totalorder %s105, %s107
      %p111 = scmp.eq.s32.totalorder %s22, 0
      %p112 = por %p110, %p111
      %p113 = scmp.ne.s32.totalorder %s105, %s107
      %p114 = scmp.eq.s32.totalorder %s27, 1
      %p115 = por %p113, %p114
      %p116 = scmp.ne.s32.totalorder %s107, %s108
      %p117 = scmp.eq.s32.totalorder %s27, 0
      %p118 = por %p116, %p117
      %p119 = scmp.ne.s32.totalorder %s107, %s108
      %p120 = scmp.eq.s32.totalorder %s28, 1
      %p121 = por %p119, %p120
      %p123 = scmp.ne.s32.totalorder %s108, %s122
      %p124 = scmp.eq.s32.totalorder %s28, 0
      %p125 = por %p123, %p124
      %s127 = sadd.s32 %s126, 1
      %p130 = scmp.eq.s32.totalorder %s22, 1
      %p131 = scmp.ne.s32.totalorder %s126, %s128
      %p132 = scmp.eq.s32.totalorder %s22, 0
      %p133 = por %p131, %p132
      %p134 = scmp.ne.s32.totalorder %s126, %s128
      %p135 = scmp.eq.s32.totalorder %s27, 1
      %p136 = por %p134, %p135
      %p137 = scmp.ne.s32.totalorder %s128, %s129
      %p138 = scmp.eq.s32.totalorder %s27, 0
      %p139 = por %p137, %p138
      %p140 = scmp.ne.s32.totalorder %s128, %s129
      %p141 = scmp.eq.s32.totalorder %s28, 1
      %p142 = por %p140, %p141
      %p144 = scmp.ne.s32.totalorder %s129, %s143
      %p145 = scmp.eq.s32.totalorder %s28, 0
      %p146 = por %p144, %p145
      %s148 = sadd.s32 %s147, 1
      %p151 = scmp.eq.s32.totalorder %s22, 1
      %p152 = scmp.ne.s32.totalorder %s147, %s149
      %p153 = scmp.eq.s32.totalorder %s22, 0
      %p154 = por %p152, %p153
      %p155 = scmp.ne.s32.totalorder %s147, %s149
      %p156 = scmp.eq.s32.totalorder %s27, 1
      %p157 = por %p155, %p156
      %p158 = scmp.ne.s32.totalorder %s149, %s150
      %p159 = scmp.eq.s32.totalorder %s27, 0
      %p160 = por %p158, %p159
      %p161 = scmp.ne.s32.totalorder %s149, %s150
      %p162 = scmp.eq.s32.totalorder %s28, 1
      %p163 = por %p161, %p162
      %p165 = scmp.ne.s32.totalorder %s150, %s164
      %p166 = scmp.eq.s32.totalorder %s28, 0
      %p167 = por %p165, %p166
      %s169 = sadd.s32 %s168, 1
      %p172 = scmp.eq.s32.totalorder %s22, 1
      %p173 = scmp.ne.s32.totalorder %s168, %s170
      %p174 = scmp.eq.s32.totalorder %s22, 0
      %p175 = por %p173, %p174
      %p176 = scmp.ne.s32.totalorder %s168, %s170
      %p177 = scmp.eq.s32.totalorder %s27, 1
      %p178 = por %p176, %p177
      %p179 = scmp.ne.s32.totalorder %s170, %s171
      %p180 = scmp.eq.s32.totalorder %s27, 0
      %p181 = por %p179, %p180
      %p182 = scmp.ne.s32.totalorder %s170, %s171
      %p183 = scmp.eq.s32.totalorder %s28, 1
      %p184 = por %p182, %p183
      %p186 = scmp.ne.s32.totalorder %s171, %s185
      %p187 = scmp.eq.s32.totalorder %s28, 0
      %p188 = por %p186, %p187
      %s189 = ssub.s32 %s29, %s48
      %s190 = ssub.s32 %s30, %s44
      %s191 = sor.u32 %s189, %s190
      %p192 = scmp.eq.s32.totalorder %s191, 0
      %s194 = sadd.s32 %s193, 1
      %s195 = scalar_select %p192, %s193, %s194
      %p198 = pneg %p192
      %p199 = scmp.eq.s32.totalorder %s22, 1
      %p200 = por %p198, %p199
      %p201 = scmp.ne.s32.totalorder %s193, %s196
      %p202 = scmp.eq.s32.totalorder %s22, 0
      %p203 = por %p201, %p202
      %p204 = scmp.ne.s32.totalorder %s193, %s196
      %p205 = scmp.eq.s32.totalorder %s27, 1
      %p206 = por %p204, %p205
      %p207 = scmp.ne.s32.totalorder %s196, %s197
      %p208 = scmp.eq.s32.totalorder %s27, 0
      %p209 = por %p207, %p208
      %p210 = scmp.ne.s32.totalorder %s196, %s197
      %p211 = scmp.eq.s32.totalorder %s28, 1
      %p212 = por %p210, %p211
      %p214 = scmp.ne.s32.totalorder %s197, %s213
      %p215 = scmp.eq.s32.totalorder %s28, 0
      %p216 = por %p214, %p215
      %p217 = scmp.le.s32.totalorder 1, %s22
      %p218 = scmp.lt.s32.totalorder %s22, 3
      %p219 = pnand %p217, %p218
      %p220 = pneg %p219
      // Predicated region
      $region9: #{tpu_custom_call.1} parent=5 // pred_check
        _
      $region10: #{tpu_custom_call.1} parent=5 // pred_check_branch
        %222 = sbr.rel (%p219) target = $region12
      $region11: #{tpu_custom_call.1} parent=5 // pred_region
        %s223 = ssub.s32 %s22, 1
        // Predicated region
        $region13: #{tpu_custom_call.1} parent=11 // pred_check
          %p224 = pneg %p118
        $region14: #{tpu_custom_call.1} parent=11 // pred_check_branch
          %226 = sbr.rel (%p224) target = $region16
        $region15: #{tpu_custom_call.1} parent=11 // pred_region
          %228 = vsyncadd [#allocation10], 0
          %s229 = sshll.u32 %s2, 4
          %s230 = int_to_ptr.hbm [resolvable:$true] %s229
          %s231 = sshll.u32 [#allocation11], 4
          %s232 = int_to_ptr.vmem [resolvable:$true] %s231
          %237 = dma.hbm_to_vmem [thread:$0]  %s230, 512, %s232, [#allocation10], 128, 128, 8
        $region16: #{tpu_custom_call.1} parent=11 // pred_fallthru
          _
        // Predicated region
        $region17: #{tpu_custom_call.1} parent=11 // pred_check
          %p238 = pneg %p139
        $region18: #{tpu_custom_call.1} parent=11 // pred_check_branch
          %240 = sbr.rel (%p238) target = $region20
        $region19: #{tpu_custom_call.1} parent=11 // pred_region
          %242 = vsyncadd [#allocation13], 0
          %s243 = sshll.u32 %s3, 4
          %s244 = int_to_ptr.hbm [resolvable:$true] %s243
          %s245 = sshll.u32 [#allocation12], 4
          %s246 = int_to_ptr.vmem [resolvable:$true] %s245
          %251 = dma.hbm_to_vmem [thread:$0]  %s244, 512, %s246, [#allocation13], 128, 128, 8
        $region20: #{tpu_custom_call.1} parent=11 // pred_fallthru
          _
        // Predicated region
        $region21: #{tpu_custom_call.1} parent=11 // pred_check
          %p252 = pneg %p160
        $region22: #{tpu_custom_call.1} parent=11 // pred_check_branch
          %254 = sbr.rel (%p252) target = $region24
        $region23: #{tpu_custom_call.1} parent=11 // pred_region
          %256 = vsyncadd [#allocation13], 0
          %s257 = sshll.u32 %s4, 4
          %s258 = int_to_ptr.hbm [resolvable:$true] %s257
          %s259 = sshll.u32 [#allocation14], 4
          %s260 = int_to_ptr.vmem [resolvable:$true] %s259
          %265 = dma.hbm_to_vmem [thread:$0]  %s258, 512, %s260, [#allocation13], 128, 128, 8
        $region24: #{tpu_custom_call.1} parent=11 // pred_fallthru
          _
        // Predicated region
        $region25: #{tpu_custom_call.1} parent=11 // pred_check
          %p266 = pneg %p181
        $region26: #{tpu_custom_call.1} parent=11 // pred_check_branch
          %268 = sbr.rel (%p266) target = $region28
        $region27: #{tpu_custom_call.1} parent=11 // pred_region
          _
        $region28: #{tpu_custom_call.1} parent=11 // pred_fallthru
          _
      $region12: #{tpu_custom_call.1} parent=5 // pred_fallthru
        _
      %p269 = scmp.lt.s32.totalorder %s22, 2
      // Predicated region
      $region29: #{tpu_custom_call.1} parent=5 // pred_check
        %p270 = pneg %p269
      $region30: #{tpu_custom_call.1} parent=5 // pred_check_branch
        %272 = sbr.rel (%p270) target = $region32
      $region31: #{tpu_custom_call.1} parent=5 // pred_region
        // Predicated region
        $region33: #{tpu_custom_call.1} parent=31 // pred_check
          %p273 = pneg %p63
        $region34: #{tpu_custom_call.1} parent=31 // pred_check_branch
          %275 = sbr.rel (%p273) target = $region36
        $region35: #{tpu_custom_call.1} parent=31 // pred_region
          %s276 = sand.u32 %s53, 1
          %s277 = scalar_lea.sflag [#allocation7], %s276
          %s278 = sand.u32 %s53, 1
          %s279 = smul.addr %s278, 8
          %s280 = scalar_lea.vmem [#allocation6], %s279
          %282 = vsyncadd %s277, 0
          %s283 = sadd.s32 %s30, %s29
          %s284 = smul.addr %s283, 8
          %s285 = scalar_lea.hbm %s0, %s284
          %s287 = sshll.u32 %s285, 4
          %s288 = int_to_ptr.hbm [resolvable:$true] %s287
          %s289 = sshll.u32 %s280, 4
          %s290 = int_to_ptr.vmem [resolvable:$true] %s289
          %292 = dma.hbm_to_vmem [thread:$0]  %s288, 128, %s290, %s277
        $region36: #{tpu_custom_call.1} parent=31 // pred_fallthru
          _
        // Predicated region
        $region37: #{tpu_custom_call.1} parent=31 // pred_check
          %p293 = pneg %p91
        $region38: #{tpu_custom_call.1} parent=31 // pred_check_branch
          %295 = sbr.rel (%p293) target = $region40
        $region39: #{tpu_custom_call.1} parent=31 // pred_region
          %s296 = sand.u32 %s22, 1
          %s297 = scalar_lea.sflag [#allocation10], %s296
          %s298 = sand.u32 %s81, 1
          %s299 = smul.addr %s298, 8
          %s300 = scalar_lea.vmem [#allocation9], %s299
          %302 = vsyncadd %s297, 0
          %s303 = sadd.s32 %s31, %s29
          %s304 = smul.addr %s303, 8
          %s305 = scalar_lea.hbm %s1, %s304
          %s307 = sshll.u32 %s305, 4
          %s308 = int_to_ptr.hbm [resolvable:$true] %s307
          %s309 = sshll.u32 %s300, 4
          %s310 = int_to_ptr.vmem [resolvable:$true] %s309
          %312 = dma.hbm_to_vmem [thread:$0]  %s308, 128, %s310, %s297
        $region40: #{tpu_custom_call.1} parent=31 // pred_fallthru
          _
      $region32: #{tpu_custom_call.1} parent=5 // pred_fallthru
        _
      %p313 = scmp.le.s32.totalorder 1, %s22
      %p314 = scmp.lt.s32.totalorder %s22, 3
      %p315 = pnand %p313, %p314
      %p316 = pneg %p315
      // Predicated region
      $region41: #{tpu_custom_call.1} parent=5 // pred_check
        _
      $region42: #{tpu_custom_call.1} parent=5 // pred_check_branch
        %318 = sbr.rel (%p315) target = $region44
      $region43: #{tpu_custom_call.1} parent=5 // pred_region
        %s319 = ssub.s32 %s22, 1
        %s320 = sand.u32 %s56, 1
        %s321 = scalar_lea.sflag [#allocation7], %s320
        %s322 = sand.u32 %s56, 1
        %s323 = smul.addr %s322, 8
        %s324 = scalar_lea.vmem [#allocation6], %s323
        // Predicated region
        $region45: #{tpu_custom_call.1} parent=43 // pred_check
          %p325 = pneg %p69
        $region46: #{tpu_custom_call.1} parent=43 // pred_check_branch
          %327 = sbr.rel (%p325) target = $region48
        $region47: #{tpu_custom_call.1} parent=43 // pred_region
          %329 = dma.done %s321, 128
        $region48: #{tpu_custom_call.1} parent=43 // pred_fallthru
          _
        %s330 = sand.u32 %s27, 1
        %s331 = scalar_lea.sflag [#allocation10], %s330
        %s332 = sand.u32 %s84, 1
        %s333 = smul.addr %s332, 8
        %s334 = scalar_lea.vmem [#allocation9], %s333
        // Predicated region
        $region49: #{tpu_custom_call.1} parent=43 // pred_check
          %p335 = pneg %p97
        $region50: #{tpu_custom_call.1} parent=43 // pred_check_branch
          %337 = sbr.rel (%p335) target = $region52
        $region51: #{tpu_custom_call.1} parent=43 // pred_region
          %339 = dma.done %s331, 128
        $region52: #{tpu_custom_call.1} parent=43 // pred_fallthru
          _
        // Predicated region
        $region53: #{tpu_custom_call.1} parent=43 // pred_check
          %p340 = pneg %p118
        $region54: #{tpu_custom_call.1} parent=43 // pred_check_branch
          %342 = sbr.rel (%p340) target = $region56
        $region55: #{tpu_custom_call.1} parent=43 // pred_region
          %344 = dma.done [#allocation10], 512
        $region56: #{tpu_custom_call.1} parent=43 // pred_fallthru
          _
        // Predicated region
        $region57: #{tpu_custom_call.1} parent=43 // pred_check
          %p345 = pneg %p139
        $region58: #{tpu_custom_call.1} parent=43 // pred_check_branch
          %347 = sbr.rel (%p345) target = $region60
        $region59: #{tpu_custom_call.1} parent=43 // pred_region
          %349 = dma.done [#allocation13], 512
        $region60: #{tpu_custom_call.1} parent=43 // pred_fallthru
          _
        // Predicated region
        $region61: #{tpu_custom_call.1} parent=43 // pred_check
          %p350 = pneg %p160
        $region62: #{tpu_custom_call.1} parent=43 // pred_check_branch
          %352 = sbr.rel (%p350) target = $region64
        $region63: #{tpu_custom_call.1} parent=43 // pred_region
          %354 = dma.done [#allocation13], 512
        $region64: #{tpu_custom_call.1} parent=43 // pred_fallthru
          _
        %s355 = sand.u32 %s56, 1
        %s356 = scalar_lea.sflag [#allocation7], %s355
        %s357 = sand.u32 %s56, 1
        %s358 = smul.addr %s357, 8
        %s359 = scalar_lea.vmem [#allocation6], %s358
        %p360 = pneg %p69
        %p361 = pneg %p66
        %s362 = sand.u32 %s27, 1
        %s363 = scalar_lea.sflag [#allocation10], %s362
        %s364 = sand.u32 %s84, 1
        %s365 = smul.addr %s364, 8
        %s366 = scalar_lea.vmem [#allocation9], %s365
        %p367 = pneg %p97
        %p368 = pneg %p94
        %p369 = pneg %p118
        %p370 = pneg %p115
        %p371 = pneg %p139
        %p372 = pneg %p136
        %p373 = pneg %p160
        %p374 = pneg %p157
        %p375 = pneg %p181
        %p376 = pneg %p178
        %p377 = pneg %p209
        %p378 = pneg %p206
        %s379 = sand.u32 %s196, 1
        %s380 = scalar_lea.sflag [#allocation8], %s379
        %s381 = sand.u32 %s196, 1
        %s382 = smul.addr %s381, 8
        %s383 = scalar_lea.vmem [#allocation15], %s382
        %p384 = scmp.eq.s32.totalorder %s34, 0
        // Predicated region
        $region65: #{tpu_custom_call.1} parent=43 // pred_check
          %p385 = pneg %p384
        $region66: #{tpu_custom_call.1} parent=43 // pred_check_branch
          %387 = sbr.rel (%p385) target = $region68
        $region67: #{tpu_custom_call.1} parent=43 // pred_region
          %v388 = vld [vmem:[%s324] sm:$0xff]
          %v389 = vld [vmem:[#allocation11] sm:$0xff]
          %v390 = vld [vmem:[#allocation11 + $0x8] sm:$0xff]
          %v391 = vld [vmem:[#allocation11 + $0x10] sm:$0xff]
          %v392 = vld [vmem:[#allocation11 + $0x18] sm:$0xff]
          %vm393 = vcmask 261120
          %v395 = vsel %vm393, %v388, 0
          %397 = vmatpush.msra.mxu0 0.0
          %398 = vmatpush.msra.mxu0 0.0
          %399 = vmatpush.msra.mxu0 0.0
          %400 = vmatpush.msra.mxu0 0.0
          %401 = vmatpush.msra.mxu0 0.0
          %402 = vmatpush.msra.mxu0 0.0
          %403 = vmatpush.msra.mxu0 0.0
          %404 = vmatpush.msra.mxu0 0.0
          %405 = vmatpush.msra.mxu0 0.0
          %406 = vmatpush.msra.mxu0 0.0
          %407 = vmatpush.msra.mxu0 0.0
          %408 = vmatpush.msra.mxu0 0.0
          %409 = vmatpush.msra.mxu0 %v392
          %410 = vmatpush.msra.mxu0 %v391
          %411 = vmatpush.msra.mxu0 %v390
          %412 = vmatpush.msra.mxu0 %v389
          %413 = vmatmul.f32.gmra.mxu0 %v395
          %v414 = vpop.f32.mrf.mxu0
          %v415 = vadd.f32 0.0, %v414
          %416 = vdwg.mxu0
          %417 = vst.msk [vmem:[#allocation2] sm:$0xff] %vm393, %v415
          %vm418 = vcmask 7168
          %419 = vst.msk [vmem:[#allocation4] sm:$0xff] %vm418, -inf
          %420 = vst.msk [vmem:[#allocation4 + $0x8] sm:$0xff] %vm418, -inf
          %421 = vst.msk [vmem:[#allocation4 + $0x10] sm:$0xff] %vm418, -inf
          %422 = vst.msk [vmem:[#allocation4 + $0x18] sm:$0xff] %vm418, -inf
          %423 = vst.msk [vmem:[#allocation5] sm:$0xff] %vm418, 0.0
          %424 = vst.msk [vmem:[#allocation5 + $0x8] sm:$0xff] %vm418, 0.0
          %425 = vst.msk [vmem:[#allocation5 + $0x10] sm:$0xff] %vm418, 0.0
          %426 = vst.msk [vmem:[#allocation5 + $0x18] sm:$0xff] %vm418, 0.0
          %427 = vst.msk [vmem:[#allocation3] sm:$0xff] %vm393, 0.0
        $region68: #{tpu_custom_call.1} parent=43 // pred_fallthru
          _
        %v428 = vld [vmem:[%s334] sm:$0xff]
        %v429 = vld [vmem:[#allocation12] sm:$0xff]
        %v430 = vld [vmem:[#allocation12 + $0x8] sm:$0xff]
        %v431 = vld [vmem:[#allocation12 + $0x10] sm:$0xff]
        %v432 = vld [vmem:[#allocation12 + $0x18] sm:$0xff]
        %vm433 = vcmask 261120
        %v435 = vsel %vm433, %v428, 0
        %437 = vmatpush.msra.mxu0 0.0
        %438 = vmatpush.msra.mxu0 0.0
        %439 = vmatpush.msra.mxu0 0.0
        %440 = vmatpush.msra.mxu0 0.0
        %441 = vmatpush.msra.mxu0 0.0
        %442 = vmatpush.msra.mxu0 0.0
        %443 = vmatpush.msra.mxu0 0.0
        %444 = vmatpush.msra.mxu0 0.0
        %445 = vmatpush.msra.mxu0 0.0
        %446 = vmatpush.msra.mxu0 0.0
        %447 = vmatpush.msra.mxu0 0.0
        %448 = vmatpush.msra.mxu0 0.0
        %449 = vmatpush.msra.mxu0 %v432
        %450 = vmatpush.msra.mxu0 %v431
        %451 = vmatpush.msra.mxu0 %v430
        %452 = vmatpush.msra.mxu0 %v429
        %453 = vmatmul.f32.gmra.mxu0 %v435
        %v454 = vpop.f32.mrf.mxu0
        %v455 = vadd.f32 0.0, %v454
        %456 = vdwg.mxu0
        %v457 = vld [vmem:[#allocation2] sm:$0xff]
        %vm458 = vcmask 64512
        %v460 = vsel %vm458, %v457, 0
        %v463 = vsel %vm458, %v455, 0
        %465 = vmatpush.xpose.msra.mxu0 0.0
        %466 = vmatpush.xpose.msra.mxu0 0.0
        %467 = vmatpush.xpose.msra.mxu0 0.0
        %468 = vmatpush.xpose.msra.mxu0 0.0
        %469 = vmatpush.xpose.msra.mxu0 0.0
        %470 = vmatpush.xpose.msra.mxu0 0.0
        %471 = vmatpush.xpose.msra.mxu0 0.0
        %472 = vmatpush.xpose.msra.mxu0 0.0
        %473 = vmatpush.xpose.msra.mxu0 0.0
        %474 = vmatpush.xpose.msra.mxu0 0.0
        %475 = vmatpush.xpose.msra.mxu0 0.0
        %476 = vmatpush.xpose.msra.mxu0 0.0
        %477 = vmatpush.xpose.msra.mxu0 0.0
        %478 = vmatpush.xpose.msra.mxu0 0.0
        %479 = vmatpush.xpose.msra.mxu0 0.0
        %480 = vmatpush.xpose.msra.mxu0 %v463
        %481 = vmatmul.f32.gmra.mxu0 %v460
        %v482 = vpop.f32.mrf.mxu0
        %v483 = vadd.f32 0.0, %v482
        %484 = vdwg.mxu0
        %v485 = vld [vmem:[#allocation4] sm:$0xff]
        %v486 = vsel %vm458, %v483, -inf
        %487 = vmax.xlane.f32.xlu0 %v486
        %v488 = vpop.xlane.xlu0 %487
        %v489 = vmax.f32 %v485, %v488
        %v490 = vsub.f32 %v485, %v489
        %v491 = vmul.f32 %v490, 1.442695
        %v492 = vpow.pop %v491
        %494 = vset.pattern.permute.xlu0 0
        %495 = vperm.xlu0 %494, %v489
        %v496 = vpop.permute.xlu0 %495
        %v498 = vsub.f32 %v483, %v496
        %v499 = vmul.f32 %v498, 1.442695
        %v500 = vpow.pop %v499
        %v501 = vld [vmem:[#allocation5] sm:$0xff]
        %v502 = vmul.f32 %v492, %v501
        %v503 = vsel %vm458, %v500, 0.0
        %504 = vadd.xlane.f32.xlu0 %v503
        %v505 = vpop.xlane.xlu0 %504
        %v506 = vadd.f32 %v502, %v505
        %vm507 = vcmask 7168
        %508 = vst.msk [vmem:[#allocation5] sm:$0xff] %vm507, %v506
        %509 = vst.msk [vmem:[#allocation4] sm:$0xff] %vm507, %v489
        %510 = vrot.lane.b32.xlu0 %v455, 96
        %v511 = vpop.permute.xlu0 %510
        %v514 = vsel %vm458, %v500, 0
        %516 = vmatpush.msra.mxu0 0.0
        %517 = vmatpush.msra.mxu0 0.0
        %518 = vmatpush.msra.mxu0 0.0
        %519 = vmatpush.msra.mxu0 0.0
        %520 = vmatpush.msra.mxu0 0.0
        %521 = vmatpush.msra.mxu0 0.0
        %522 = vmatpush.msra.mxu0 0.0
        %523 = vmatpush.msra.mxu0 0.0
        %524 = vmatpush.msra.mxu0 0.0
        %525 = vmatpush.msra.mxu0 0.0
        %526 = vmatpush.msra.mxu0 0.0
        %527 = vmatpush.msra.mxu0 0.0
        %528 = vmatpush.msra.mxu0 0.0
        %529 = vmatpush.msra.mxu0 0.0
        %530 = vmatpush.msra.mxu0 0.0
        %531 = vmatpush.msra.mxu0 %v511
        %532 = vmatmul.f32.gmra.mxu0 %v514
        %v533 = vpop.f32.mrf.mxu0
        %v534 = vadd.f32 0.0, %v533
        %535 = vdwg.mxu0
        %v536 = vld [vmem:[#allocation3] sm:$0xff]
        %538 = vset.pattern.permute.xlu0 0
        %539 = vperm.xlu0 %538, %v492
        %v540 = vpop.permute.xlu0 %539
        %v542 = vmul.f32 %v540, %v536
        %v543 = vadd.f32 %v542, %v534
        %544 = vst.msk [vmem:[#allocation3] sm:$0xff] %vm458, %v543
        %545 = vrot.lane.b32.xlu0 %v457, 120
        %v546 = vpop.permute.xlu0 %545
        %547 = vrot.lane.b32.xlu0 %v455, 120
        %v548 = vpop.permute.xlu0 %547
        %v549 = vsel %vm458, %v546, 0
        %v551 = vsel %vm458, %v548, 0
        %553 = vmatpush.xpose.msra.mxu0 0.0
        %554 = vmatpush.xpose.msra.mxu0 0.0
        %555 = vmatpush.xpose.msra.mxu0 0.0
        %556 = vmatpush.xpose.msra.mxu0 0.0
        %557 = vmatpush.xpose.msra.mxu0 0.0
        %558 = vmatpush.xpose.msra.mxu0 0.0
        %559 = vmatpush.xpose.msra.mxu0 0.0
        %560 = vmatpush.xpose.msra.mxu0 0.0
        %561 = vmatpush.xpose.msra.mxu0 0.0
        %562 = vmatpush.xpose.msra.mxu0 0.0
        %563 = vmatpush.xpose.msra.mxu0 0.0
        %564 = vmatpush.xpose.msra.mxu0 0.0
        %565 = vmatpush.xpose.msra.mxu0 0.0
        %566 = vmatpush.xpose.msra.mxu0 0.0
        %567 = vmatpush.xpose.msra.mxu0 0.0
        %568 = vmatpush.xpose.msra.mxu0 %v551
        %569 = vmatmul.f32.gmra.mxu0 %v549
        %v570 = vpop.f32.mrf.mxu0
        %v571 = vadd.f32 0.0, %v570
        %572 = vdwg.mxu0
        %s573 = scalar_lea.vmem [#allocation4], 8
        %v574 = vld [vmem:[%s573] sm:$0xff]
        %v575 = vsel %vm458, %v571, -inf
        %576 = vmax.xlane.f32.xlu0 %v575
        %v577 = vpop.xlane.xlu0 %576
        %v578 = vmax.f32 %v574, %v577
        %v579 = vsub.f32 %v574, %v578
        %v580 = vmul.f32 %v579, 1.442695
        %v581 = vpow.pop %v580
        %583 = vset.pattern.permute.xlu0 0
        %584 = vperm.xlu0 %583, %v578
        %v585 = vpop.permute.xlu0 %584
        %v587 = vsub.f32 %v571, %v585
        %v588 = vmul.f32 %v587, 1.442695
        %v589 = vpow.pop %v588
        %s590 = scalar_lea.vmem [#allocation5], 8
        %v591 = vld [vmem:[%s590] sm:$0xff]
        %v592 = vmul.f32 %v581, %v591
        %v593 = vsel %vm458, %v589, 0.0
        %594 = vadd.xlane.f32.xlu0 %v593
        %v595 = vpop.xlane.xlu0 %594
        %v596 = vadd.f32 %v592, %v595
        %597 = vst.msk [vmem:[%s590] sm:$0xff] %vm507, %v596
        %598 = vst.msk [vmem:[%s573] sm:$0xff] %vm507, %v578
        %599 = vrot.lane.b32.xlu0 %v455, 88
        %v600 = vpop.permute.xlu0 %599
        %v603 = vsel %vm458, %v589, 0
        %605 = vmatpush.msra.mxu0 0.0
        %606 = vmatpush.msra.mxu0 0.0
        %607 = vmatpush.msra.mxu0 0.0
        %608 = vmatpush.msra.mxu0 0.0
        %609 = vmatpush.msra.mxu0 0.0
        %610 = vmatpush.msra.mxu0 0.0
        %611 = vmatpush.msra.mxu0 0.0
        %612 = vmatpush.msra.mxu0 0.0
        %613 = vmatpush.msra.mxu0 0.0
        %614 = vmatpush.msra.mxu0 0.0
        %615 = vmatpush.msra.mxu0 0.0
        %616 = vmatpush.msra.mxu0 0.0
        %617 = vmatpush.msra.mxu0 0.0
        %618 = vmatpush.msra.mxu0 0.0
        %619 = vmatpush.msra.mxu0 0.0
        %620 = vmatpush.msra.mxu0 %v600
        %621 = vmatmul.f32.gmra.mxu0 %v603
        %v622 = vpop.f32.mrf.mxu0
        %v623 = vadd.f32 0.0, %v622
        %624 = vdwg.mxu0
        %v625 = vld [vmem:[#allocation3] sm:$0xff]
        %627 = vset.pattern.permute.xlu0 0
        %628 = vperm.xlu0 %627, %v581
        %v629 = vpop.permute.xlu0 %628
        %v631 = vmul.f32 %v629, %v625
        %633 = vrot.lane.b32.xlu0 %v623, 8
        %v634 = vpop.permute.xlu0 %633
        %v636 = vadd.f32 %v631, %v634
        %vm637 = vcmask 130112
        %638 = vst.msk [vmem:[#allocation3] sm:$0xff] %vm637, %v636
        %639 = vrot.lane.b32.xlu0 %v457, 112
        %v640 = vpop.permute.xlu0 %639
        %641 = vrot.lane.b32.xlu0 %v455, 112
        %v642 = vpop.permute.xlu0 %641
        %v643 = vsel %vm458, %v640, 0
        %v645 = vsel %vm458, %v642, 0
        %647 = vmatpush.xpose.msra.mxu0 0.0
        %648 = vmatpush.xpose.msra.mxu0 0.0
        %649 = vmatpush.xpose.msra.mxu0 0.0
        %650 = vmatpush.xpose.msra.mxu0 0.0
        %651 = vmatpush.xpose.msra.mxu0 0.0
        %652 = vmatpush.xpose.msra.mxu0 0.0
        %653 = vmatpush.xpose.msra.mxu0 0.0
        %654 = vmatpush.xpose.msra.mxu0 0.0
        %655 = vmatpush.xpose.msra.mxu0 0.0
        %656 = vmatpush.xpose.msra.mxu0 0.0
        %657 = vmatpush.xpose.msra.mxu0 0.0
        %658 = vmatpush.xpose.msra.mxu0 0.0
        %659 = vmatpush.xpose.msra.mxu0 0.0
        %660 = vmatpush.xpose.msra.mxu0 0.0
        %661 = vmatpush.xpose.msra.mxu0 0.0
        %662 = vmatpush.xpose.msra.mxu0 %v645
        %663 = vmatmul.f32.gmra.mxu0 %v643
        %v664 = vpop.f32.mrf.mxu0
        %v665 = vadd.f32 0.0, %v664
        %666 = vdwg.mxu0
        %s667 = scalar_lea.vmem [#allocation4], 16
        %v668 = vld [vmem:[%s667] sm:$0xff]
        %v669 = vsel %vm458, %v665, -inf
        %670 = vmax.xlane.f32.xlu0 %v669
        %v671 = vpop.xlane.xlu0 %670
        %v672 = vmax.f32 %v668, %v671
        %v673 = vsub.f32 %v668, %v672
        %v674 = vmul.f32 %v673, 1.442695
        %v675 = vpow.pop %v674
        %677 = vset.pattern.permute.xlu0 0
        %678 = vperm.xlu0 %677, %v672
        %v679 = vpop.permute.xlu0 %678
        %v681 = vsub.f32 %v665, %v679
        %v682 = vmul.f32 %v681, 1.442695
        %v683 = vpow.pop %v682
        %s684 = scalar_lea.vmem [#allocation5], 16
        %v685 = vld [vmem:[%s684] sm:$0xff]
        %v686 = vmul.f32 %v675, %v685
        %v687 = vsel %vm458, %v683, 0.0
        %688 = vadd.xlane.f32.xlu0 %v687
        %v689 = vpop.xlane.xlu0 %688
        %v690 = vadd.f32 %v686, %v689
        %691 = vst.msk [vmem:[%s684] sm:$0xff] %vm507, %v690
        %692 = vst.msk [vmem:[%s667] sm:$0xff] %vm507, %v672
        %693 = vrot.lane.b32.xlu0 %v455, 80
        %v694 = vpop.permute.xlu0 %693
        %v697 = vsel %vm458, %v683, 0
        %699 = vmatpush.msra.mxu0 0.0
        %700 = vmatpush.msra.mxu0 0.0
        %701 = vmatpush.msra.mxu0 0.0
        %702 = vmatpush.msra.mxu0 0.0
        %703 = vmatpush.msra.mxu0 0.0
        %704 = vmatpush.msra.mxu0 0.0
        %705 = vmatpush.msra.mxu0 0.0
        %706 = vmatpush.msra.mxu0 0.0
        %707 = vmatpush.msra.mxu0 0.0
        %708 = vmatpush.msra.mxu0 0.0
        %709 = vmatpush.msra.mxu0 0.0
        %710 = vmatpush.msra.mxu0 0.0
        %711 = vmatpush.msra.mxu0 0.0
        %712 = vmatpush.msra.mxu0 0.0
        %713 = vmatpush.msra.mxu0 0.0
        %714 = vmatpush.msra.mxu0 %v694
        %715 = vmatmul.f32.gmra.mxu0 %v697
        %v716 = vpop.f32.mrf.mxu0
        %v717 = vadd.f32 0.0, %v716
        %718 = vdwg.mxu0
        %v719 = vld [vmem:[#allocation3] sm:$0xff]
        %721 = vset.pattern.permute.xlu0 0
        %722 = vperm.xlu0 %721, %v675
        %v723 = vpop.permute.xlu0 %722
        %v725 = vmul.f32 %v723, %v719
        %727 = vrot.lane.b32.xlu0 %v717, 16
        %v728 = vpop.permute.xlu0 %727
        %v730 = vadd.f32 %v725, %v728
        %vm731 = vcmask 195712
        %732 = vst.msk [vmem:[#allocation3] sm:$0xff] %vm731, %v730
        %733 = vrot.lane.b32.xlu0 %v457, 104
        %v734 = vpop.permute.xlu0 %733
        %735 = vrot.lane.b32.xlu0 %v455, 104
        %v736 = vpop.permute.xlu0 %735
        %v737 = vsel %vm458, %v734, 0
        %v739 = vsel %vm458, %v736, 0
        %741 = vmatpush.xpose.msra.mxu0 0.0
        %742 = vmatpush.xpose.msra.mxu0 0.0
        %743 = vmatpush.xpose.msra.mxu0 0.0
        %744 = vmatpush.xpose.msra.mxu0 0.0
        %745 = vmatpush.xpose.msra.mxu0 0.0
        %746 = vmatpush.xpose.msra.mxu0 0.0
        %747 = vmatpush.xpose.msra.mxu0 0.0
        %748 = vmatpush.xpose.msra.mxu0 0.0
        %749 = vmatpush.xpose.msra.mxu0 0.0
        %750 = vmatpush.xpose.msra.mxu0 0.0
        %751 = vmatpush.xpose.msra.mxu0 0.0
        %752 = vmatpush.xpose.msra.mxu0 0.0
        %753 = vmatpush.xpose.msra.mxu0 0.0
        %754 = vmatpush.xpose.msra.mxu0 0.0
        %755 = vmatpush.xpose.msra.mxu0 0.0
        %756 = vmatpush.xpose.msra.mxu0 %v739
        %757 = vmatmul.f32.gmra.mxu0 %v737
        %v758 = vpop.f32.mrf.mxu0
        %v759 = vadd.f32 0.0, %v758
        %760 = vdwg.mxu0
        %s761 = scalar_lea.vmem [#allocation4], 24
        %v762 = vld [vmem:[%s761] sm:$0xff]
        %v763 = vsel %vm458, %v759, -inf
        %764 = vmax.xlane.f32.xlu0 %v763
        %v765 = vpop.xlane.xlu0 %764
        %v766 = vmax.f32 %v762, %v765
        %v767 = vsub.f32 %v762, %v766
        %v768 = vmul.f32 %v767, 1.442695
        %v769 = vpow.pop %v768
        %771 = vset.pattern.permute.xlu0 0
        %772 = vperm.xlu0 %771, %v766
        %v773 = vpop.permute.xlu0 %772
        %v775 = vsub.f32 %v759, %v773
        %v776 = vmul.f32 %v775, 1.442695
        %v777 = vpow.pop %v776
        %s778 = scalar_lea.vmem [#allocation5], 24
        %v779 = vld [vmem:[%s778] sm:$0xff]
        %v780 = vmul.f32 %v769, %v779
        %v781 = vsel %vm458, %v777, 0.0
        %782 = vadd.xlane.f32.xlu0 %v781
        %v783 = vpop.xlane.xlu0 %782
        %v784 = vadd.f32 %v780, %v783
        %785 = vst.msk [vmem:[%s778] sm:$0xff] %vm507, %v784
        %786 = vst.msk [vmem:[%s761] sm:$0xff] %vm507, %v766
        %787 = vrot.lane.b32.xlu0 %v455, 72
        %v788 = vpop.permute.xlu0 %787
        %v791 = vsel %vm458, %v777, 0
        %793 = vmatpush.msra.mxu0 0.0
        %794 = vmatpush.msra.mxu0 0.0
        %795 = vmatpush.msra.mxu0 0.0
        %796 = vmatpush.msra.mxu0 0.0
        %797 = vmatpush.msra.mxu0 0.0
        %798 = vmatpush.msra.mxu0 0.0
        %799 = vmatpush.msra.mxu0 0.0
        %800 = vmatpush.msra.mxu0 0.0
        %801 = vmatpush.msra.mxu0 0.0
        %802 = vmatpush.msra.mxu0 0.0
        %803 = vmatpush.msra.mxu0 0.0
        %804 = vmatpush.msra.mxu0 0.0
        %805 = vmatpush.msra.mxu0 0.0
        %806 = vmatpush.msra.mxu0 0.0
        %807 = vmatpush.msra.mxu0 0.0
        %808 = vmatpush.msra.mxu0 %v788
        %809 = vmatmul.f32.gmra.mxu0 %v791
        %v810 = vpop.f32.mrf.mxu0
        %v811 = vadd.f32 0.0, %v810
        %812 = vdwg.mxu0
        %v813 = vld [vmem:[#allocation3] sm:$0xff]
        %815 = vset.pattern.permute.xlu0 0
        %816 = vperm.xlu0 %815, %v769
        %v817 = vpop.permute.xlu0 %816
        %v819 = vmul.f32 %v817, %v813
        %821 = vrot.lane.b32.xlu0 %v811, 24
        %v822 = vpop.permute.xlu0 %821
        %v824 = vadd.f32 %v819, %v822
        %vm825 = vcmask 261312
        %826 = vst.msk [vmem:[#allocation3] sm:$0xff] %vm825, %v824
        // Predicated region
        $region69: #{tpu_custom_call.1} parent=43 // pred_check
          %p827 = pneg %p384
        $region70: #{tpu_custom_call.1} parent=43 // pred_check_branch
          %829 = sbr.rel (%p827) target = $region72
        $region71: #{tpu_custom_call.1} parent=43 // pred_region
          %v830 = vld [vmem:[#allocation5] sm:$0xff]
          %v831 = vrcp.pop %v830
          %v832 = vmul.f32 %v830, %v831
          %v833 = vsub.f32 2.0, %v832
          %v834 = vmul.f32 %v831, %v833
          %v835 = vld [vmem:[#allocation3] sm:$0xff]
          %837 = vset.pattern.permute.xlu0 0
          %838 = vperm.xlu0 %837, %v834
          %v839 = vpop.permute.xlu0 %838
          %v841 = vmul.f32 %v835, %v839
          %842 = vst.msk [vmem:[#allocation3] sm:$0xff] %vm458, %v841
          %v843 = vld [vmem:[%s590] sm:$0xff]
          %v844 = vrcp.pop %v843
          %v845 = vmul.f32 %v843, %v844
          %v846 = vsub.f32 2.0, %v845
          %v847 = vmul.f32 %v844, %v846
          %v848 = vld [vmem:[#allocation3] sm:$0xff]
          %850 = vset.pattern.permute.xlu0 0
          %851 = vperm.xlu0 %850, %v847
          %v852 = vpop.permute.xlu0 %851
          %v854 = vmul.f32 %v848, %v852
          %855 = vst.msk [vmem:[#allocation3] sm:$0xff] %vm637, %v854
          %v856 = vld [vmem:[%s684] sm:$0xff]
          %v857 = vrcp.pop %v856
          %v858 = vmul.f32 %v856, %v857
          %v859 = vsub.f32 2.0, %v858
          %v860 = vmul.f32 %v857, %v859
          %v861 = vld [vmem:[#allocation3] sm:$0xff]
          %863 = vset.pattern.permute.xlu0 0
          %864 = vperm.xlu0 %863, %v860
          %v865 = vpop.permute.xlu0 %864
          %v867 = vmul.f32 %v861, %v865
          %868 = vst.msk [vmem:[#allocation3] sm:$0xff] %vm731, %v867
          %v869 = vld [vmem:[%s778] sm:$0xff]
          %v870 = vrcp.pop %v869
          %v871 = vmul.f32 %v869, %v870
          %v872 = vsub.f32 2.0, %v871
          %v873 = vmul.f32 %v870, %v872
          %v874 = vld [vmem:[#allocation3] sm:$0xff]
          %876 = vset.pattern.permute.xlu0 0
          %877 = vperm.xlu0 %876, %v873
          %v878 = vpop.permute.xlu0 %877
          %v880 = vmul.f32 %v874, %v878
          %881 = vst.msk [vmem:[#allocation3] sm:$0xff] %vm825, %v880
          %v882 = vld [vmem:[#allocation3] sm:$0xff]
          %v883 = vld [vmem:[#allocation14] sm:$0xff]
          %v884 = vld [vmem:[#allocation14 + $0x8] sm:$0xff]
          %v885 = vld [vmem:[#allocation14 + $0x10] sm:$0xff]
          %v886 = vld [vmem:[#allocation14 + $0x18] sm:$0xff]
          %v887 = vld [vmem:[%s5] sm:$0x1]
          %v889 = vperm.slane %v887, 0
          %v892 = vsel %vm433, %v882, 0
          %894 = vmatpush.msra.mxu0 0.0
          %895 = vmatpush.msra.mxu0 0.0
          %896 = vmatpush.msra.mxu0 0.0
          %897 = vmatpush.msra.mxu0 0.0
          %898 = vmatpush.msra.mxu0 0.0
          %899 = vmatpush.msra.mxu0 0.0
          %900 = vmatpush.msra.mxu0 0.0
          %901 = vmatpush.msra.mxu0 0.0
          %902 = vmatpush.msra.mxu0 0.0
          %903 = vmatpush.msra.mxu0 0.0
          %904 = vmatpush.msra.mxu0 0.0
          %905 = vmatpush.msra.mxu0 0.0
          %906 = vmatpush.msra.mxu0 %v886
          %907 = vmatpush.msra.mxu0 %v885
          %908 = vmatpush.msra.mxu0 %v884
          %909 = vmatpush.msra.mxu0 %v883
          %910 = vmatmul.f32.gmra.mxu0 %v892
          %v911 = vpop.f32.mrf.mxu0
          %v912 = vadd.f32 %v889, %v911
          %913 = vdwg.mxu0
          %914 = vst.msk [vmem:[%s383] sm:$0xff] %vm433, %v912
        $region72: #{tpu_custom_call.1} parent=43 // pred_fallthru
          _
        %s915 = sand.u32 %s196, 1
        %s916 = scalar_lea.sflag [#allocation8], %s915
        %s917 = sand.u32 %s196, 1
        %s918 = smul.addr %s917, 8
        %s919 = scalar_lea.vmem [#allocation15], %s918
        // Predicated region
        $region73: #{tpu_custom_call.1} parent=43 // pred_check
          %p920 = pneg %p206
        $region74: #{tpu_custom_call.1} parent=43 // pred_check_branch
          %922 = sbr.rel (%p920) target = $region76
        $region75: #{tpu_custom_call.1} parent=43 // pred_region
          %924 = vsyncadd %s916, 0
          %s925 = sadd.s32 %s33, %s32
          %s926 = smul.addr %s925, 8
          %s927 = scalar_lea.hbm %s6, %s926
          %s929 = sshll.u32 %s919, 4
          %s930 = int_to_ptr.vmem [resolvable:$true] %s929
          %s931 = sshll.u32 %s927, 4
          %s932 = int_to_ptr.hbm [resolvable:$true] %s931
          %934 = dma.vmem_to_hbm [thread:$0]  %s930, 128, %s932, %s916
        $region76: #{tpu_custom_call.1} parent=43 // pred_fallthru
          _
      $region44: #{tpu_custom_call.1} parent=5 // pred_fallthru
        _
      %p935 = scmp.le.s32.totalorder 2, %s22
      // Predicated region
      $region77: #{tpu_custom_call.1} parent=5 // pred_check
        %p936 = pneg %p935
      $region78: #{tpu_custom_call.1} parent=5 // pred_check_branch
        %938 = sbr.rel (%p936) target = $region80
      $region79: #{tpu_custom_call.1} parent=5 // pred_region
        %s939 = ssub.s32 %s22, 2
        // Predicated region
        $region81: #{tpu_custom_call.1} parent=79 // pred_check
          %p940 = pneg %p212
        $region82: #{tpu_custom_call.1} parent=79 // pred_check_branch
          %942 = sbr.rel (%p940) target = $region84
        $region83: #{tpu_custom_call.1} parent=79 // pred_region
          %s943 = sand.u32 %s197, 1
          %s944 = scalar_lea.sflag [#allocation8], %s943
          %s945 = sand.u32 %s197, 1
          %s946 = smul.addr %s945, 8
          %s947 = scalar_lea.vmem [#allocation15], %s946
          %949 = dma.done %s944, 128
        $region84: #{tpu_custom_call.1} parent=79 // pred_fallthru
          _
      $region80: #{tpu_custom_call.1} parent=5 // pred_fallthru
        _
    $region6: #{tpu_custom_call.1} parent=1 // loop_footer
      %s26 = sadd.s32 1, %s22
    $region7: #{tpu_custom_call.1} parent=1 // loop_footer_branch
      %21 = sbr.rel target = $region3
    $region8: #{tpu_custom_call.1} parent=1 // loop_exit
      _
    %950 = vsyncpa [#allocation7], 1
    %s951 = scalar_lea.sflag [#allocation7], 1
    %952 = vsyncpa %s951, 1
    %953 = vsyncpa [#allocation10], 1
    %s954 = scalar_lea.sflag [#allocation10], 1
    %955 = vsyncpa %s954, 1
    %956 = vsyncpa [#allocation13], 1
    %957 = vsyncpa [#allocation8], 1
    %s958 = scalar_lea.sflag [#allocation8], 1
    %959 = vsyncpa %s958, 1

</llo_original>
